<compile_context>
chip_gen: v7x
topology: tpu7x:2x2x1
jax: 0.10.0
libtpu: 0.0.40
codegen_flags: <defaults>
</compile_context>

<pallas_src>
import math

import jax
import jax.numpy as jnp
import numpy as np
from jax.experimental import pallas as pl
from jax.experimental.pallas import tpu as pltpu

EPS = 1e-5
_LANE = 128
_SUBLANE = 8

# Flipped to False automatically if this JAX build rejects pl.Buffered(1).
_SINGLE_BUFFER_OK = True


def _round_up(x, m):
    return ((x + m - 1) // m) * m


def _vmem_capacity_bytes():
    try:
        return int(pltpu.get_tpu_info().vmem_capacity_bytes)
    except Exception:
        return 64 << 20          # conservative (v7x per-TensorCore size)


def fold_bn(bn):
    scale = bn["gamma"] / jnp.sqrt(bn["var"] + EPS)
    bias = bn["beta"] - bn["mean"] * scale
    return scale, bias


# ---------------------------------------------------------------------------
# Pallas kernel: implicit-im2col 3x3 conv tile
#   acc = sum_t  shifted_view_t(phase planes) @ W_t          (9 MXU dots)
#   acc += bias  [+ xs @ Wsc]  [+ residual] ; ReLU ; store
# ---------------------------------------------------------------------------
def _make_conv_kernel(tap_offsets, L, n_row_tiles, has_sc, has_res, relu):
    def kernel(*refs):
        if has_sc:
            xph_ref, w_ref, bias_ref, xs_ref, wsc_ref, o_ref = refs
        elif has_res:
            xph_ref, w_ref, bias_ref, res_ref, o_ref = refs
        else:
            xph_ref, w_ref, bias_ref, o_ref = refs

        # All slice starts are static Python ints when there is one row tile.
        base = 0 if n_row_tiles == 1 else pl.program_id(1) * L

        acc = None
        for t, off in enumerate(tap_offsets):
            slab = xph_ref[0, pl.ds(base + off, L), :]          # (L, Cin) bf16
            d = jnp.dot(slab, w_ref[t], preferred_element_type=jnp.float32)
            acc = d if acc is None else acc + d
        acc = acc + bias_ref[...]                               # (1, Cp) bcast
        if has_sc:
            # fused 1x1-conv shortcut (its BN bias is pre-summed into bias_ref)
            acc = acc + jnp.dot(xs_ref[0], wsc_ref[...],
                                preferred_element_type=jnp.float32)
        if has_res:
            acc = acc + res_ref[0].astype(jnp.float32)
        if relu:
            acc = jnp.maximum(acc, 0.0)
        o_ref[0] = acc.astype(o_ref.dtype)

    return kernel


def _pick_row_tile(Ho, Wph, N, row_bytes, budget):
    """Largest divisor of Ho whose streamed tile fits `budget`, preferring a
    choice that yields >=2 total grid steps (v7x megacore sharding)."""
    best_fit = None
    for d in range(Ho, 0, -1):
        if Ho % d:
            continue
        if d != Ho and (d * Wph) % _SUBLANE:
            continue                       # keep the output block sublane-aligned
        if d * row_bytes > budget:
            continue
        if best_fit is None:
            best_fit = d
        if N * (Ho // d) >= 2:
            return d
    return best_fit if best_fit is not None else Ho


# ---------------------------------------------------------------------------
# One fused conv3x3 + BN (+ shortcut) + ReLU, implicit im2col
# ---------------------------------------------------------------------------
def conv3x3_bn_act(x, w_oihw, bn, *, stride, relu=True, shortcut=None,
                   residual=None, out_dtype=jnp.bfloat16):
    """Returns (out_flat, (Ho, Wo, Wph)).

    out_flat is (N, Ho*Wph, Cout_pad) in out_dtype; columns [Wo, Wph) and
    channels [Cout, Cout_pad) are ignore/zero padding (kept so downstream
    consumers stay lane-dense)."""
    global _SINGLE_BUFFER_OK

    N, H, W, Cin0 = x.shape
    Cout, Cin_w = w_oihw.shape[0], w_oihw.shape[1]
    s = int(stride)
    Ho = (H + 2 - 3) // s + 1
    Wo = (W + 2 - 3) // s + 1
    q = -(-3 // s)                        # ceil(3 / stride)
    Hph, Wph = Ho + q - 1, Wo + q - 1     # per-phase-plane extent actually read
    Hst = Hph + 1                         # +1 zero row: tap slabs never read OOB
    P = s * s
    Cp = _round_up(Cout, _LANE)
    Cin = _round_up(Cin0, _SUBLANE)       # tidy K for the MXU dots

    x = x.astype(jnp.bfloat16)
    has_sc = shortcut is not None
    has_res = residual is not None
    assert not (has_sc and has_res)

    # ---- phase-plane ("implicit im2col") layout, built once in XLA ---------
    # plane[ph,pw][i,j,c] = xpad[s*i+ph, s*j+pw, c];  then the (kh,kw) tap of
    # the conv is a unit-stride shifted view of one plane.
    pad_b, pad_r = s * Hst - H - 1, s * Wph - W - 1
    xpad = jnp.pad(x, ((0, 0), (1, pad_b), (1, pad_r), (0, Cin - Cin0)))
    planes = [xpad[:, ph::s, pw::s, :][:, :Hst, :Wph, :]
              for ph in range(s) for pw in range(s)]
    xph = jnp.stack(planes, axis=1).reshape(N, P * Hst * Wph, Cin)

    # ---- BN scale folded into the weights; bias stays as the epilogue ------
    scale, bias = fold_bn(bn)
    wt = jnp.transpose(w_oihw * scale[:, None, None, None], (2, 3, 1, 0))
    wt = wt.reshape(9, Cin_w, Cout)
    wt = jnp.pad(wt, ((0, 0), (0, Cin - Cin_w), (0, Cp - Cout)))
    wt = wt.astype(jnp.bfloat16)

    if has_sc:
        xs_nhwc, wsc_oihw, bnsc = shortcut
        assert xs_nhwc.shape[:3] == (N, Ho, Wo)
        ssc, bsc = fold_bn(bnsc)
        bias = bias + bsc                               # both biases add post-GEMM
        Csc0 = xs_nhwc.shape[-1]
        Csc = _round_up(Csc0, _SUBLANE)
        wsc = (wsc_oihw[:, :, 0, 0] * ssc[:, None]).T   # (Csc0, Cout)
        wsc = jnp.pad(wsc, ((0, Csc - Csc0), (0, Cp - Cout))).astype(jnp.bfloat16)
        xs = jnp.pad(xs_nhwc.astype(jnp.bfloat16),
                     ((0, 0), (0, 0), (0, Wph - Wo), (0, Csc - Csc0)))
        xs = xs.reshape(N, Ho * Wph, Csc)
    if has_res:
        assert residual.shape[:3] == (N, Ho, Wo)
        Cres = residual.shape[-1]
        res = jnp.pad(residual.astype(jnp.bfloat16),
                      ((0, 0), (0, 0), (0, Wph - Wo), (0, Cp - Cres)))
        res = res.reshape(N, Ho * Wph, Cp)

    bias_p = jnp.pad(bias, (0, Cp - Cout)).astype(jnp.float32).reshape(1, Cp)

    # tap (kh,kw) -> static flat offset into the resident phase planes
    taps = [((kh % s) * s + (kw % s)) * (Hst * Wph) + (kh // s) * Wph + (kw // s)
            for kh in range(3) for kw in range(3)]

    # ---- tiling + per-generation VMEM budgeting -----------------------------
    out_bytes = jnp.dtype(out_dtype).itemsize
    cap = _vmem_capacity_bytes()
    resident = 2 * (P * Hst * Wph) * Cin * 2             # image planes (2 bufs)
    resident += 9 * Cin * Cp * 2 + Cp * 4                # weights + bias
    if has_sc:
        resident += Csc * Cp * 2
    row_bytes = Wph * Cp * (2 * out_bytes + 4)           # out (2 bufs) + f32 acc
    if has_sc:
        row_bytes += 2 * Wph * Csc * 2
    if has_res:
        row_bytes += 2 * Wph * Cp * 2
    budget = max(cap // 3 - 2 * resident, row_bytes)
    TR = _pick_row_tile(Ho, Wph, N, row_bytes, budget)
    L = TR * Wph
    R = Ho // TR
    need = 2 * resident + TR * row_bytes
    vmem_limit = int(min(int(cap * 0.8), max(2 * need + (4 << 20), 32 << 20)))

    def build(single_buffer):
        const = {"pipeline_mode": pl.Buffered(1)} if single_buffer else {}
        in_specs = [
            # whole padded image planes; constant along r -> fetched once per n
            pl.BlockSpec((1, P * Hst * Wph, Cin), lambda n, r: (n, 0, 0)),
            # grid-invariant weights / bias (single-buffered when supported)
            pl.BlockSpec((9, Cin, Cp), lambda n, r: (0, 0, 0), **const),
            pl.BlockSpec((1, Cp), lambda n, r: (0, 0), **const),
        ]
        inputs = [xph, wt, bias_p]
        if has_sc:
            in_specs += [pl.BlockSpec((1, L, Csc), lambda n, r: (n, r, 0)),
                         pl.BlockSpec((Csc, Cp), lambda n, r: (0, 0), **const)]
            inputs += [xs, wsc]
        if has_res:
            in_specs.append(pl.BlockSpec((1, L, Cp), lambda n, r: (n, r, 0)))
            inputs.append(res)

        fn = pl.pallas_call(
            _make_conv_kernel(taps, L, R, has_sc, has_res, relu),
            out_shape=jax.ShapeDtypeStruct((N, Ho * Wph, Cp), out_dtype),
            grid=(N, R),
            in_specs=in_specs,
            out_specs=pl.BlockSpec((1, L, Cp), lambda n, r: (n, r, 0)),
            compiler_params=pltpu.CompilerParams(
                dimension_semantics=("parallel", "parallel"),
                vmem_limit_bytes=vmem_limit),
        )
        return fn(*inputs)

    if _SINGLE_BUFFER_OK:
        try:
            out = build(True)
        except Exception:
            # Fallback for builds where pl.Buffered(1) / pipeline_mode is not
            # accepted: identical math, default double-buffering.
            _SINGLE_BUFFER_OK = False
            out = build(False)
    else:
        out = build(False)
    return out, (Ho, Wo, Wph)


# ---------------------------------------------------------------------------
# BasicBlock forward (Pallas path)
# ---------------------------------------------------------------------------
def basic_block_pallas(x_nchw, p, stride):
    # NCHW -> NHWC directly in bf16 (no f32 NHWC intermediate)
    x = jnp.transpose(x_nchw, (0, 2, 3, 1)).astype(jnp.bfloat16)
    N, H, W, Cin = x.shape
    planes = p["w1"].shape[0]
    Cp = _round_up(planes, _LANE)

    # conv1 + bn1 + relu  (output kept flattened, channel-padded NHWC bf16)
    h1, (Ho, Wo, Wph1) = conv3x3_bn_act(
        x, p["w1"], p["bn1"], stride=stride, relu=True, out_dtype=jnp.bfloat16)
    h1_img = h1.reshape(N, Ho, Wph1, Cp)[:, :, :Wo, :]   # drop width-pad junk cols

    # conv2 + bn2 + shortcut + relu — one fused kernel
    if "wsc" in p:
        # strided input slice feeds the fused 1x1-conv shortcut dot
        xs = x[:, ::stride, ::stride, :][:, :Ho, :Wo, :]
        out, (Ho2, Wo2, Wph2) = conv3x3_bn_act(
            h1_img, p["w2"], p["bn2"], stride=1, relu=True,
            shortcut=(xs, p["wsc"], p["bnsc"]), out_dtype=jnp.float32)
    else:
        assert stride == 1 and Cin == planes and (Ho, Wo) == (H, W), \
            "identity shortcut requires matching shapes"
        out, (Ho2, Wo2, Wph2) = conv3x3_bn_act(
            h1_img, p["w2"], p["bn2"], stride=1, relu=True,
            residual=x, out_dtype=jnp.float32)

    out = out.reshape(N, Ho2, Wph2, Cp)[:, :, :Wo2, :planes]
    return jnp.transpose(out, (0, 3, 1, 2))              # back to NCHW (f32)


# ---------------------------------------------------------------------------
# Pure-JAX reference (mirrors the PyTorch forward, eval-mode BN, fp32)
# ---------------------------------------------------------------------------
def basic_block_reference(x, p, stride):
    def conv(x, w, s, pad):
        return jax.lax.conv_general_dilated(
            x, w, (s, s), pad, dimension_numbers=("NCHW", "OIHW", "NCHW"))

    def bn(x, b):
        sc = b["gamma"] / jnp.sqrt(b["var"] + EPS)
        sh = b["beta"] - b["mean"] * sc
        return x * sc[None, :, None, None] + sh[None, :, None, None]

    out = jax.nn.relu(bn(conv(x, p["w1"], stride, [(1, 1), (1, 1)]), p["bn1"]))
    out = bn(conv(out, p["w2"], 1, [(1, 1), (1, 1)]), p["bn2"])
    if "wsc" in p:
        short = bn(conv(x, p["wsc"], stride, [(0, 0), (0, 0)]), p["bnsc"])
    else:
        short = x
    return jax.nn.relu(out + short)


# ---------------------------------------------------------------------------
# Deterministic parameter init
# ---------------------------------------------------------------------------
def init_params(key, in_planes, planes, stride):
    ks = jax.random.split(key, 16)

    def conv_w(k, cout, cin, ksz):
        bound = 1.0 / math.sqrt(cin * ksz * ksz)
        return jax.random.uniform(k, (cout, cin, ksz, ksz), jnp.float32,
                                  -bound, bound)

    def bn_params(k, c):
        k1, k2, k3, k4 = jax.random.split(k, 4)
        return {
            "gamma": 1.0 + 0.1 * jax.random.normal(k1, (c,), jnp.float32),
            "beta": 0.1 * jax.random.normal(k2, (c,), jnp.float32),
            "mean": 0.05 * jax.random.normal(k3, (c,), jnp.float32),
            "var": 0.5 + jnp.abs(jax.random.normal(k4, (c,), jnp.float32)),
        }

    p = {
        "w1": conv_w(ks[0], planes, in_planes, 3),
        "bn1": bn_params(ks[1], planes),
        "w2": conv_w(ks[2], planes, planes, 3),
        "bn2": bn_params(ks[3], planes),
    }
    if stride != 1 or in_planes != planes:
        p["wsc"] = conv_w(ks[4], planes, in_planes, 1)
        p["bnsc"] = bn_params(ks[5], planes)
    return p


if __name__ == "__main__":
    key = jax.random.PRNGKey(0)
    k_x, k_p1, k_p2 = jax.random.split(key, 3)

    # Tolerances sized for bf16 MXU operands with fp32 accumulation.
    RTOL = ATOL = 2e-2

    # Case 1: downsampling block (stride=2, channel expansion) — conv shortcut.
    in_planes, planes, stride = 4, 8, 2
    x = jax.random.normal(k_x, (2, in_planes, 16, 16), jnp.float32)
    params = init_params(k_p1, in_planes, planes, stride)

    out = jax.block_until_ready(basic_block_pallas(x, params, stride))
    ref = jax.block_until_ready(basic_block_reference(x, params, stride))
    np.testing.assert_allclose(np.asarray(out), np.asarray(ref),
                               rtol=RTOL, atol=ATOL)

    # Case 2: identity-shortcut block (stride=1, same channels).
    params_id = init_params(k_p2, planes, planes, 1)
    x2 = basic_block_reference(x, params, stride)  # (2, 8, 8, 8)
    out2 = jax.block_until_ready(basic_block_pallas(x2, params_id, 1))
    ref2 = jax.block_until_ready(basic_block_reference(x2, params_id, 1))
    np.testing.assert_allclose(np.asarray(out2), np.asarray(ref2),
                               rtol=RTOL, atol=ATOL)

    print("KERNEL_OK")
</pallas_src>

<mosaic_0001>
module attributes {stable_mosaic.version = 11 : i64} {
  func.func @kernel(%arg0: i32, %arg1: i32, %arg2: memref<1x360x8xbf16, #tpu.memory_space<vmem>>, %arg3: memref<9x8x128xbf16, #tpu.memory_space<vmem>>, %arg4: memref<1x128xf32, #tpu.memory_space<vmem>>, %arg5: memref<1x72x128xbf16, #tpu.memory_space<vmem>>) attributes {dimension_semantics = [#tpu.dimension_semantics<parallel>, #tpu.dimension_semantics<parallel>], iteration_bounds = array<i64: 2, 1>, scalar_prefetch = 0 : i64, scratch_operands = 0 : i64, tpu.core_type = #tpu.core_type<tc>, window_params = [{transform_indices = @transform_0, window_bounds = array<i64: 1, 360, 8>}, {pipeline_mode = #tpu.pipeline_mode<synchronous>, transform_indices = @transform_1, window_bounds = array<i64: 9, 8, 128>}, {pipeline_mode = #tpu.pipeline_mode<synchronous>, transform_indices = @transform_2, window_bounds = array<i64: 1, 128>}, {transform_indices = @transform_3, window_bounds = array<i64: 1, 72, 128>}]} {
    %c0 = arith.constant 0 : index
    %c0_0 = arith.constant 0 : index
    %c0_1 = arith.constant 0 : index
    %0 = vector.load %arg2[%c0, %c0_0, %c0_1] : memref<1x360x8xbf16, #tpu.memory_space<vmem>>, vector<1x72x8xbf16>
    %1 = vector.shape_cast %0 : vector<1x72x8xbf16> to vector<72x8xbf16>
    %c0_2 = arith.constant 0 : index
    %c0_3 = arith.constant 0 : index
    %c0_4 = arith.constant 0 : index
    %2 = vector.load %arg3[%c0_2, %c0_3, %c0_4] : memref<9x8x128xbf16, #tpu.memory_space<vmem>>, vector<1x8x128xbf16>
    %3 = vector.shape_cast %2 : vector<1x8x128xbf16> to vector<8x128xbf16>
    %cst = arith.constant dense<0.000000e+00> : vector<72x128xf32>
    %4 = tpu.matmul %1, %3, %cst {dimension_numbers = #tpu.dot_dimension_numbers<[1], [0], [0], [1], [0, 0, 1, 1], [], []>} : vector<72x8xbf16>, vector<8x128xbf16>, vector<72x128xf32> -> vector<72x128xf32>
    %c0_5 = arith.constant 0 : index
    %c90 = arith.constant 90 : index
    %c0_6 = arith.constant 0 : index
    %5 = vector.load %arg2[%c0_5, %c90, %c0_6] : memref<1x360x8xbf16, #tpu.memory_space<vmem>>, vector<1x72x8xbf16>
    %6 = vector.shape_cast %5 : vector<1x72x8xbf16> to vector<72x8xbf16>
    %c1 = arith.constant 1 : index
    %c0_7 = arith.constant 0 : index
    %c0_8 = arith.constant 0 : index
    %7 = vector.load %arg3[%c1, %c0_7, %c0_8] : memref<9x8x128xbf16, #tpu.memory_space<vmem>>, vector<1x8x128xbf16>
    %8 = vector.shape_cast %7 : vector<1x8x128xbf16> to vector<8x128xbf16>
    %cst_9 = arith.constant dense<0.000000e+00> : vector<72x128xf32>
    %9 = tpu.matmul %6, %8, %cst_9 {dimension_numbers = #tpu.dot_dimension_numbers<[1], [0], [0], [1], [0, 0, 1, 1], [], []>} : vector<72x8xbf16>, vector<8x128xbf16>, vector<72x128xf32> -> vector<72x128xf32>
    %10 = arith.addf %4, %9 : vector<72x128xf32>
    %c0_10 = arith.constant 0 : index
    %c1_11 = arith.constant 1 : index
    %c0_12 = arith.constant 0 : index
    %11 = vector.load %arg2[%c0_10, %c1_11, %c0_12] : memref<1x360x8xbf16, #tpu.memory_space<vmem>>, vector<1x72x8xbf16>
    %12 = vector.shape_cast %11 : vector<1x72x8xbf16> to vector<72x8xbf16>
    %c2 = arith.constant 2 : index
    %c0_13 = arith.constant 0 : index
    %c0_14 = arith.constant 0 : index
    %13 = vector.load %arg3[%c2, %c0_13, %c0_14] : memref<9x8x128xbf16, #tpu.memory_space<vmem>>, vector<1x8x128xbf16>
    %14 = vector.shape_cast %13 : vector<1x8x128xbf16> to vector<8x128xbf16>
    %cst_15 = arith.constant dense<0.000000e+00> : vector<72x128xf32>
    %15 = tpu.matmul %12, %14, %cst_15 {dimension_numbers = #tpu.dot_dimension_numbers<[1], [0], [0], [1], [0, 0, 1, 1], [], []>} : vector<72x8xbf16>, vector<8x128xbf16>, vector<72x128xf32> -> vector<72x128xf32>
    %16 = arith.addf %10, %15 : vector<72x128xf32>
    %c0_16 = arith.constant 0 : index
    %c180 = arith.constant 180 : index
    %c0_17 = arith.constant 0 : index
    %17 = vector.load %arg2[%c0_16, %c180, %c0_17] : memref<1x360x8xbf16, #tpu.memory_space<vmem>>, vector<1x72x8xbf16>
    %18 = vector.shape_cast %17 : vector<1x72x8xbf16> to vector<72x8xbf16>
    %c3 = arith.constant 3 : index
    %c0_18 = arith.constant 0 : index
    %c0_19 = arith.constant 0 : index
    %19 = vector.load %arg3[%c3, %c0_18, %c0_19] : memref<9x8x128xbf16, #tpu.memory_space<vmem>>, vector<1x8x128xbf16>
    %20 = vector.shape_cast %19 : vector<1x8x128xbf16> to vector<8x128xbf16>
    %cst_20 = arith.constant dense<0.000000e+00> : vector<72x128xf32>
    %21 = tpu.matmul %18, %20, %cst_20 {dimension_numbers = #tpu.dot_dimension_numbers<[1], [0], [0], [1], [0, 0, 1, 1], [], []>} : vector<72x8xbf16>, vector<8x128xbf16>, vector<72x128xf32> -> vector<72x128xf32>
    %22 = arith.addf %16, %21 : vector<72x128xf32>
    %c0_21 = arith.constant 0 : index
    %c270 = arith.constant 270 : index
    %c0_22 = arith.constant 0 : index
    %23 = vector.load %arg2[%c0_21, %c270, %c0_22] : memref<1x360x8xbf16, #tpu.memory_space<vmem>>, vector<1x72x8xbf16>
    %24 = vector.shape_cast %23 : vector<1x72x8xbf16> to vector<72x8xbf16>
    %c4 = arith.constant 4 : index
    %c0_23 = arith.constant 0 : index
    %c0_24 = arith.constant 0 : index
    %25 = vector.load %arg3[%c4, %c0_23, %c0_24] : memref<9x8x128xbf16, #tpu.memory_space<vmem>>, vector<1x8x128xbf16>
    %26 = vector.shape_cast %25 : vector<1x8x128xbf16> to vector<8x128xbf16>
    %cst_25 = arith.constant dense<0.000000e+00> : vector<72x128xf32>
    %27 = tpu.matmul %24, %26, %cst_25 {dimension_numbers = #tpu.dot_dimension_numbers<[1], [0], [0], [1], [0, 0, 1, 1], [], []>} : vector<72x8xbf16>, vector<8x128xbf16>, vector<72x128xf32> -> vector<72x128xf32>
    %28 = arith.addf %22, %27 : vector<72x128xf32>
    %c0_26 = arith.constant 0 : index
    %c181 = arith.constant 181 : index
    %c0_27 = arith.constant 0 : index
    %29 = vector.load %arg2[%c0_26, %c181, %c0_27] : memref<1x360x8xbf16, #tpu.memory_space<vmem>>, vector<1x72x8xbf16>
    %30 = vector.shape_cast %29 : vector<1x72x8xbf16> to vector<72x8xbf16>
    %c5 = arith.constant 5 : index
    %c0_28 = arith.constant 0 : index
    %c0_29 = arith.constant 0 : index
    %31 = vector.load %arg3[%c5, %c0_28, %c0_29] : memref<9x8x128xbf16, #tpu.memory_space<vmem>>, vector<1x8x128xbf16>
    %32 = vector.shape_cast %31 : vector<1x8x128xbf16> to vector<8x128xbf16>
    %cst_30 = arith.constant dense<0.000000e+00> : vector<72x128xf32>
    %33 = tpu.matmul %30, %32, %cst_30 {dimension_numbers = #tpu.dot_dimension_numbers<[1], [0], [0], [1], [0, 0, 1, 1], [], []>} : vector<72x8xbf16>, vector<8x128xbf16>, vector<72x128xf32> -> vector<72x128xf32>
    %34 = arith.addf %28, %33 : vector<72x128xf32>
    %c0_31 = arith.constant 0 : index
    %c9 = arith.constant 9 : index
    %c0_32 = arith.constant 0 : index
    %35 = vector.load %arg2[%c0_31, %c9, %c0_32] : memref<1x360x8xbf16, #tpu.memory_space<vmem>>, vector<1x72x8xbf16>
    %36 = vector.shape_cast %35 : vector<1x72x8xbf16> to vector<72x8xbf16>
    %c6 = arith.constant 6 : index
    %c0_33 = arith.constant 0 : index
    %c0_34 = arith.constant 0 : index
    %37 = vector.load %arg3[%c6, %c0_33, %c0_34] : memref<9x8x128xbf16, #tpu.memory_space<vmem>>, vector<1x8x128xbf16>
    %38 = vector.shape_cast %37 : vector<1x8x128xbf16> to vector<8x128xbf16>
    %cst_35 = arith.constant dense<0.000000e+00> : vector<72x128xf32>
    %39 = tpu.matmul %36, %38, %cst_35 {dimension_numbers = #tpu.dot_dimension_numbers<[1], [0], [0], [1], [0, 0, 1, 1], [], []>} : vector<72x8xbf16>, vector<8x128xbf16>, vector<72x128xf32> -> vector<72x128xf32>
    %40 = arith.addf %34, %39 : vector<72x128xf32>
    %c0_36 = arith.constant 0 : index
    %c99 = arith.constant 99 : index
    %c0_37 = arith.constant 0 : index
    %41 = vector.load %arg2[%c0_36, %c99, %c0_37] : memref<1x360x8xbf16, #tpu.memory_space<vmem>>, vector<1x72x8xbf16>
    %42 = vector.shape_cast %41 : vector<1x72x8xbf16> to vector<72x8xbf16>
    %c7 = arith.constant 7 : index
    %c0_38 = arith.constant 0 : index
    %c0_39 = arith.constant 0 : index
    %43 = vector.load %arg3[%c7, %c0_38, %c0_39] : memref<9x8x128xbf16, #tpu.memory_space<vmem>>, vector<1x8x128xbf16>
    %44 = vector.shape_cast %43 : vector<1x8x128xbf16> to vector<8x128xbf16>
    %cst_40 = arith.constant dense<0.000000e+00> : vector<72x128xf32>
    %45 = tpu.matmul %42, %44, %cst_40 {dimension_numbers = #tpu.dot_dimension_numbers<[1], [0], [0], [1], [0, 0, 1, 1], [], []>} : vector<72x8xbf16>, vector<8x128xbf16>, vector<72x128xf32> -> vector<72x128xf32>
    %46 = arith.addf %40, %45 : vector<72x128xf32>
    %c0_41 = arith.constant 0 : index
    %c10 = arith.constant 10 : index
    %c0_42 = arith.constant 0 : index
    %47 = vector.load %arg2[%c0_41, %c10, %c0_42] : memref<1x360x8xbf16, #tpu.memory_space<vmem>>, vector<1x72x8xbf16>
    %48 = vector.shape_cast %47 : vector<1x72x8xbf16> to vector<72x8xbf16>
    %c8 = arith.constant 8 : index
    %c0_43 = arith.constant 0 : index
    %c0_44 = arith.constant 0 : index
    %49 = vector.load %arg3[%c8, %c0_43, %c0_44] : memref<9x8x128xbf16, #tpu.memory_space<vmem>>, vector<1x8x128xbf16>
    %50 = vector.shape_cast %49 : vector<1x8x128xbf16> to vector<8x128xbf16>
    %cst_45 = arith.constant dense<0.000000e+00> : vector<72x128xf32>
    %51 = tpu.matmul %48, %50, %cst_45 {dimension_numbers = #tpu.dot_dimension_numbers<[1], [0], [0], [1], [0, 0, 1, 1], [], []>} : vector<72x8xbf16>, vector<8x128xbf16>, vector<72x128xf32> -> vector<72x128xf32>
    %52 = arith.addf %46, %51 : vector<72x128xf32>
    %c0_46 = arith.constant 0 : index
    %c0_47 = arith.constant 0 : index
    %53 = vector.load %arg4[%c0_46, %c0_47] : memref<1x128xf32, #tpu.memory_space<vmem>>, vector<1x128xf32>
    %54 = vector.broadcast %53 : vector<1x128xf32> to vector<72x128xf32>
    %55 = arith.addf %52, %54 : vector<72x128xf32>
    %cst_48 = arith.constant 0.000000e+00 : f32
    %56 = vector.broadcast %cst_48 : f32 to vector<72x128xf32>
    %57 = arith.maximumf %55, %56 : vector<72x128xf32>
    %58 = arith.truncf %57 : vector<72x128xf32> to vector<72x128xbf16>
    %c0_49 = arith.constant 0 : index
    %c0_50 = arith.constant 0 : index
    %c0_51 = arith.constant 0 : index
    %59 = vector.load %arg5[%c0_49, %c0_50, %c0_51] : memref<1x72x128xbf16, #tpu.memory_space<vmem>>, vector<1x72x128xbf16>
    %60 = vector.shape_cast %59 : vector<1x72x128xbf16> to vector<72x128xbf16>
    %61 = vector.shape_cast %58 : vector<72x128xbf16> to vector<1x72x128xbf16>
    tpu.vector_store %arg5[%c0_49, %c0_50, %c0_51], %61 {strides = array<i32>} : memref<1x72x128xbf16, #tpu.memory_space<vmem>>, vector<1x72x128xbf16>,
    return
  }
  func.func @transform_0(%arg0: i32, %arg1: i32) -> (i32, i32, i32) {
    %c0_i32 = arith.constant 0 : i32
    %c0_i32_0 = arith.constant 0 : i32
    %c0_i32_1 = arith.constant 0 : i32
    return %arg0, %c0_i32, %c0_i32_0 : i32, i32, i32
  }
  func.func @transform_1(%arg0: i32, %arg1: i32) -> (i32, i32, i32) {
    %c0_i32 = arith.constant 0 : i32
    %c0_i32_0 = arith.constant 0 : i32
    %c0_i32_1 = arith.constant 0 : i32
    %c0_i32_2 = arith.constant 0 : i32
    return %c0_i32, %c0_i32_0, %c0_i32_1 : i32, i32, i32
  }
  func.func @transform_2(%arg0: i32, %arg1: i32) -> (i32, i32) {
    %c0_i32 = arith.constant 0 : i32
    %c0_i32_0 = arith.constant 0 : i32
    %c0_i32_1 = arith.constant 0 : i32
    return %c0_i32, %c0_i32_0 : i32, i32
  }
  func.func @transform_3(%arg0: i32, %arg1: i32) -> (i32, i32, i32) {
    %c0_i32 = arith.constant 0 : i32
    %c0_i32_0 = arith.constant 0 : i32
    return %arg0, %arg1, %c0_i32 : i32, i32, i32
  }
}

module attributes {stable_mosaic.version = 11 : i64} {
  func.func @kernel(%arg0: i32, %arg1: i32, %arg2: memref<1x360x8xbf16, #tpu.memory_space<vmem>>, %arg3: memref<9x8x128xbf16, #tpu.memory_space<vmem>>, %arg4: memref<1x128xf32, #tpu.memory_space<vmem>>, %arg5: memref<1x72x128xbf16, #tpu.memory_space<vmem>>) attributes {dimension_semantics = [#tpu.dimension_semantics<parallel>, #tpu.dimension_semantics<parallel>], iteration_bounds = array<i64: 2, 1>, scalar_prefetch = 0 : i64, scratch_operands = 0 : i64, tpu.core_type = #tpu.core_type<tc>, window_params = [{transform_indices = @transform_0, window_bounds = array<i64: 1, 360, 8>}, {pipeline_mode = #tpu.pipeline_mode<synchronous>, transform_indices = @transform_1, window_bounds = array<i64: 9, 8, 128>}, {pipeline_mode = #tpu.pipeline_mode<synchronous>, transform_indices = @transform_2, window_bounds = array<i64: 1, 128>}, {transform_indices = @transform_3, window_bounds = array<i64: 1, 72, 128>}]} {
    %c0 = arith.constant 0 : index
    %c0_0 = arith.constant 0 : index
    %c0_1 = arith.constant 0 : index
    %0 = vector.load %arg2[%c0, %c0_0, %c0_1] : memref<1x360x8xbf16, #tpu.memory_space<vmem>>, vector<1x72x8xbf16>
    %1 = vector.shape_cast %0 : vector<1x72x8xbf16> to vector<72x8xbf16>
    %c0_2 = arith.constant 0 : index
    %c0_3 = arith.constant 0 : index
    %c0_4 = arith.constant 0 : index
    %2 = vector.load %arg3[%c0_2, %c0_3, %c0_4] : memref<9x8x128xbf16, #tpu.memory_space<vmem>>, vector<1x8x128xbf16>
    %3 = vector.shape_cast %2 : vector<1x8x128xbf16> to vector<8x128xbf16>
    %cst = arith.constant dense<0.000000e+00> : vector<72x128xf32>
    %4 = tpu.matmul %1, %3, %cst {dimension_numbers = #tpu.dot_dimension_numbers<[1], [0], [0], [1], [0, 0, 1, 1], [], []>} : vector<72x8xbf16>, vector<8x128xbf16>, vector<72x128xf32> -> vector<72x128xf32>
    %c0_5 = arith.constant 0 : index
    %c90 = arith.constant 90 : index
    %c0_6 = arith.constant 0 : index
    %5 = vector.load %arg2[%c0_5, %c90, %c0_6] : memref<1x360x8xbf16, #tpu.memory_space<vmem>>, vector<1x72x8xbf16>
    %6 = vector.shape_cast %5 : vector<1x72x8xbf16> to vector<72x8xbf16>
    %c1 = arith.constant 1 : index
    %c0_7 = arith.constant 0 : index
    %c0_8 = arith.constant 0 : index
    %7 = vector.load %arg3[%c1, %c0_7, %c0_8] : memref<9x8x128xbf16, #tpu.memory_space<vmem>>, vector<1x8x128xbf16>
    %8 = vector.shape_cast %7 : vector<1x8x128xbf16> to vector<8x128xbf16>
    %cst_9 = arith.constant dense<0.000000e+00> : vector<72x128xf32>
    %9 = tpu.matmul %6, %8, %cst_9 {dimension_numbers = #tpu.dot_dimension_numbers<[1], [0], [0], [1], [0, 0, 1, 1], [], []>} : vector<72x8xbf16>, vector<8x128xbf16>, vector<72x128xf32> -> vector<72x128xf32>
    %10 = arith.addf %4, %9 : vector<72x128xf32>
    %c0_10 = arith.constant 0 : index
    %c1_11 = arith.constant 1 : index
    %c0_12 = arith.constant 0 : index
    %11 = vector.load %arg2[%c0_10, %c1_11, %c0_12] : memref<1x360x8xbf16, #tpu.memory_space<vmem>>, vector<1x72x8xbf16>
    %12 = vector.shape_cast %11 : vector<1x72x8xbf16> to vector<72x8xbf16>
    %c2 = arith.constant 2 : index
    %c0_13 = arith.constant 0 : index
    %c0_14 = arith.constant 0 : index
    %13 = vector.load %arg3[%c2, %c0_13, %c0_14] : memref<9x8x128xbf16, #tpu.memory_space<vmem>>, vector<1x8x128xbf16>
    %14 = vector.shape_cast %13 : vector<1x8x128xbf16> to vector<8x128xbf16>
    %cst_15 = arith.constant dense<0.000000e+00> : vector<72x128xf32>
    %15 = tpu.matmul %12, %14, %cst_15 {dimension_numbers = #tpu.dot_dimension_numbers<[1], [0], [0], [1], [0, 0, 1, 1], [], []>} : vector<72x8xbf16>, vector<8x128xbf16>, vector<72x128xf32> -> vector<72x128xf32>
    %16 = arith.addf %10, %15 : vector<72x128xf32>
    %c0_16 = arith.constant 0 : index
    %c180 = arith.constant 180 : index
    %c0_17 = arith.constant 0 : index
    %17 = vector.load %arg2[%c0_16, %c180, %c0_17] : memref<1x360x8xbf16, #tpu.memory_space<vmem>>, vector<1x72x8xbf16>
    %18 = vector.shape_cast %17 : vector<1x72x8xbf16> to vector<72x8xbf16>
    %c3 = arith.constant 3 : index
    %c0_18 = arith.constant 0 : index
    %c0_19 = arith.constant 0 : index
    %19 = vector.load %arg3[%c3, %c0_18, %c0_19] : memref<9x8x128xbf16, #tpu.memory_space<vmem>>, vector<1x8x128xbf16>
    %20 = vector.shape_cast %19 : vector<1x8x128xbf16> to vector<8x128xbf16>
    %cst_20 = arith.constant dense<0.000000e+00> : vector<72x128xf32>
    %21 = tpu.matmul %18, %20, %cst_20 {dimension_numbers = #tpu.dot_dimension_numbers<[1], [0], [0], [1], [0, 0, 1, 1], [], []>} : vector<72x8xbf16>, vector<8x128xbf16>, vector<72x128xf32> -> vector<72x128xf32>
    %22 = arith.addf %16, %21 : vector<72x128xf32>
    %c0_21 = arith.constant 0 : index
    %c270 = arith.constant 270 : index
    %c0_22 = arith.constant 0 : index
    %23 = vector.load %arg2[%c0_21, %c270, %c0_22] : memref<1x360x8xbf16, #tpu.memory_space<vmem>>, vector<1x72x8xbf16>
    %24 = vector.shape_cast %23 : vector<1x72x8xbf16> to vector<72x8xbf16>
    %c4 = arith.constant 4 : index
    %c0_23 = arith.constant 0 : index
    %c0_24 = arith.constant 0 : index
    %25 = vector.load %arg3[%c4, %c0_23, %c0_24] : memref<9x8x128xbf16, #tpu.memory_space<vmem>>, vector<1x8x128xbf16>
    %26 = vector.shape_cast %25 : vector<1x8x128xbf16> to vector<8x128xbf16>
    %cst_25 = arith.constant dense<0.000000e+00> : vector<72x128xf32>
    %27 = tpu.matmul %24, %26, %cst_25 {dimension_numbers = #tpu.dot_dimension_numbers<[1], [0], [0], [1], [0, 0, 1, 1], [], []>} : vector<72x8xbf16>, vector<8x128xbf16>, vector<72x128xf32> -> vector<72x128xf32>
    %28 = arith.addf %22, %27 : vector<72x128xf32>
    %c0_26 = arith.constant 0 : index
    %c181 = arith.constant 181 : index
    %c0_27 = arith.constant 0 : index
    %29 = vector.load %arg2[%c0_26, %c181, %c0_27] : memref<1x360x8xbf16, #tpu.memory_space<vmem>>, vector<1x72x8xbf16>
    %30 = vector.shape_cast %29 : vector<1x72x8xbf16> to vector<72x8xbf16>
    %c5 = arith.constant 5 : index
    %c0_28 = arith.constant 0 : index
    %c0_29 = arith.constant 0 : index
    %31 = vector.load %arg3[%c5, %c0_28, %c0_29] : memref<9x8x128xbf16, #tpu.memory_space<vmem>>, vector<1x8x128xbf16>
    %32 = vector.shape_cast %31 : vector<1x8x128xbf16> to vector<8x128xbf16>
    %cst_30 = arith.constant dense<0.000000e+00> : vector<72x128xf32>
    %33 = tpu.matmul %30, %32, %cst_30 {dimension_numbers = #tpu.dot_dimension_numbers<[1], [0], [0], [1], [0, 0, 1, 1], [], []>} : vector<72x8xbf16>, vector<8x128xbf16>, vector<72x128xf32> -> vector<72x128xf32>
    %34 = arith.addf %28, %33 : vector<72x128xf32>
    %c0_31 = arith.constant 0 : index
    %c9 = arith.constant 9 : index
    %c0_32 = arith.constant 0 : index
    %35 = vector.load %arg2[%c0_31, %c9, %c0_32] : memref<1x360x8xbf16, #tpu.memory_space<vmem>>, vector<1x72x8xbf16>
    %36 = vector.shape_cast %35 : vector<1x72x8xbf16> to vector<72x8xbf16>
    %c6 = arith.constant 6 : index
    %c0_33 = arith.constant 0 : index
    %c0_34 = arith.constant 0 : index
    %37 = vector.load %arg3[%c6, %c0_33, %c0_34] : memref<9x8x128xbf16, #tpu.memory_space<vmem>>, vector<1x8x128xbf16>
    %38 = vector.shape_cast %37 : vector<1x8x128xbf16> to vector<8x128xbf16>
    %cst_35 = arith.constant dense<0.000000e+00> : vector<72x128xf32>
    %39 = tpu.matmul %36, %38, %cst_35 {dimension_numbers = #tpu.dot_dimension_numbers<[1], [0], [0], [1], [0, 0, 1, 1], [], []>} : vector<72x8xbf16>, vector<8x128xbf16>, vector<72x128xf32> -> vector<72x128xf32>
    %40 = arith.addf %34, %39 : vector<72x128xf32>
    %c0_36 = arith.constant 0 : index
    %c99 = arith.constant 99 : index
    %c0_37 = arith.constant 0 : index
    %41 = vector.load %arg2[%c0_36, %c99, %c0_37] : memref<1x360x8xbf16, #tpu.memory_space<vmem>>, vector<1x72x8xbf16>
    %42 = vector.shape_cast %41 : vector<1x72x8xbf16> to vector<72x8xbf16>
    %c7 = arith.constant 7 : index
    %c0_38 = arith.constant 0 : index
    %c0_39 = arith.constant 0 : index
    %43 = vector.load %arg3[%c7, %c0_38, %c0_39] : memref<9x8x128xbf16, #tpu.memory_space<vmem>>, vector<1x8x128xbf16>
    %44 = vector.shape_cast %43 : vector<1x8x128xbf16> to vector<8x128xbf16>
    %cst_40 = arith.constant dense<0.000000e+00> : vector<72x128xf32>
    %45 = tpu.matmul %42, %44, %cst_40 {dimension_numbers = #tpu.dot_dimension_numbers<[1], [0], [0], [1], [0, 0, 1, 1], [], []>} : vector<72x8xbf16>, vector<8x128xbf16>, vector<72x128xf32> -> vector<72x128xf32>
    %46 = arith.addf %40, %45 : vector<72x128xf32>
    %c0_41 = arith.constant 0 : index
    %c10 = arith.constant 10 : index
    %c0_42 = arith.constant 0 : index
    %47 = vector.load %arg2[%c0_41, %c10, %c0_42] : memref<1x360x8xbf16, #tpu.memory_space<vmem>>, vector<1x72x8xbf16>
    %48 = vector.shape_cast %47 : vector<1x72x8xbf16> to vector<72x8xbf16>
    %c8 = arith.constant 8 : index
    %c0_43 = arith.constant 0 : index
    %c0_44 = arith.constant 0 : index
    %49 = vector.load %arg3[%c8, %c0_43, %c0_44] : memref<9x8x128xbf16, #tpu.memory_space<vmem>>, vector<1x8x128xbf16>
    %50 = vector.shape_cast %49 : vector<1x8x128xbf16> to vector<8x128xbf16>
    %cst_45 = arith.constant dense<0.000000e+00> : vector<72x128xf32>
    %51 = tpu.matmul %48, %50, %cst_45 {dimension_numbers = #tpu.dot_dimension_numbers<[1], [0], [0], [1], [0, 0, 1, 1], [], []>} : vector<72x8xbf16>, vector<8x128xbf16>, vector<72x128xf32> -> vector<72x128xf32>
    %52 = arith.addf %46, %51 : vector<72x128xf32>
    %c0_46 = arith.constant 0 : index
    %c0_47 = arith.constant 0 : index
    %53 = vector.load %arg4[%c0_46, %c0_47] : memref<1x128xf32, #tpu.memory_space<vmem>>, vector<1x128xf32>
    %54 = vector.broadcast %53 : vector<1x128xf32> to vector<72x128xf32>
    %55 = arith.addf %52, %54 : vector<72x128xf32>
    %cst_48 = arith.constant 0.000000e+00 : f32
    %56 = vector.broadcast %cst_48 : f32 to vector<72x128xf32>
    %57 = arith.maximumf %55, %56 : vector<72x128xf32>
    %58 = arith.truncf %57 : vector<72x128xf32> to vector<72x128xbf16>
    %c0_49 = arith.constant 0 : index
    %c0_50 = arith.constant 0 : index
    %c0_51 = arith.constant 0 : index
    %59 = vector.load %arg5[%c0_49, %c0_50, %c0_51] : memref<1x72x128xbf16, #tpu.memory_space<vmem>>, vector<1x72x128xbf16>
    %60 = vector.shape_cast %59 : vector<1x72x128xbf16> to vector<72x128xbf16>
    %61 = vector.shape_cast %58 : vector<72x128xbf16> to vector<1x72x128xbf16>
    tpu.vector_store %arg5[%c0_49, %c0_50, %c0_51], %61 {strides = array<i32>} : memref<1x72x128xbf16, #tpu.memory_space<vmem>>, vector<1x72x128xbf16>,
    return
  }
  func.func @transform_0(%arg0: i32, %arg1: i32) -> (i32, i32, i32) {
    %c0_i32 = arith.constant 0 : i32
    %c0_i32_0 = arith.constant 0 : i32
    %c0_i32_1 = arith.constant 0 : i32
    return %arg0, %c0_i32, %c0_i32_0 : i32, i32, i32
  }
  func.func @transform_1(%arg0: i32, %arg1: i32) -> (i32, i32, i32) {
    %c0_i32 = arith.constant 0 : i32
    %c0_i32_0 = arith.constant 0 : i32
    %c0_i32_1 = arith.constant 0 : i32
    %c0_i32_2 = arith.constant 0 : i32
    return %c0_i32, %c0_i32_0, %c0_i32_1 : i32, i32, i32
  }
  func.func @transform_2(%arg0: i32, %arg1: i32) -> (i32, i32) {
    %c0_i32 = arith.constant 0 : i32
    %c0_i32_0 = arith.constant 0 : i32
    %c0_i32_1 = arith.constant 0 : i32
    return %c0_i32, %c0_i32_0 : i32, i32
  }
  func.func @transform_3(%arg0: i32, %arg1: i32) -> (i32, i32, i32) {
    %c0_i32 = arith.constant 0 : i32
    %c0_i32_0 = arith.constant 0 : i32
    return %arg0, %arg1, %c0_i32 : i32, i32, i32
  }
}

</mosaic_0001>

<llo_original>
// kernel: tpu_custom_call.1
$region0: #{tpu_custom_call.1}
  #allocation0 [shape = 'u32[]', space=smem, size = 0x4, offset = 0x4, fixed_abs, tag = 'smem constant byte address 0x4 - core index']
  #allocation1 [shape = 'u32[144,128]{1,0:T(1,128)}', space=vmem, size = 0x12000, scoped, tag = 'internal scratch']
  %s0 = inlined_call_operand.vmem [shape: bf16[2,360,8], index: 0, kind: input, shape index: {}]
  %s1 = inlined_call_operand.vmem [shape: bf16[9,8,128], index: 1, kind: input, shape index: {}]
  %s2 = inlined_call_operand.vmem [shape: f32[1,128], index: 2, kind: input, shape index: {}]
  %s3 = inlined_call_operand.hbm [shape: bf16[2,72,128], index: 3, kind: output, shape index: {}]
  %s4 = sld [smem:[#allocation0]]
  $region45: #{tpu_custom_call.1} parent=0
    _
  %s6 = ssub.s32 1, %s4
  %s7 = scalar_select 0, %s6, %s4
  $region1: #{tpu_custom_call.1} parent=0
    #allocation2 [shape = 'u8[36864]{0}', space=vmem, size = 0x9000, scoped, tag = 'output window, operand 0']
    #allocation3 [shape = 's32[2]{0}', space=sflag, size = 0x8, scoped, tag = 'scoped memory for tpu_custom_call.1']
    %8 = vsyncpa [#allocation3], 0
    %s9 = scalar_lea.sflag [#allocation3], 1
    %10 = vsyncpa %s9, 0
    loop: start=0, step=1, limit=4
    $region2: #{tpu_custom_call.1} parent=1 // loop_pre_header
      _
    $region3: #{tpu_custom_call.1} parent=1 // loop_header
      %s12 = sphi 0, %s16
      %p13 = scmp.ge.s32.totalorder %s12, 4
      %s19 = sphi 0, %s31
      %s20 = sphi 0, %s27
      %s21 = sphi 0, %s19
      %s22 = sphi 0, %s20
      %s23 = sphi 0, %s21
      %s24 = sphi 0, %s22
      %s34 = sphi 0, %s36
      %s37 = sphi 0, %s34
      %s38 = sphi 0, %s37
      %s54 = sphi 0, %s38
      %s58 = sphi 0, %s58
      %s60 = sphi 0, %s58
      %s61 = sphi 0, %s60
      %s75 = sphi 0, %s61
      %s79 = sphi 0, %s79
      %s81 = sphi 0, %s79
      %s82 = sphi 0, %s81
      %s96 = sphi 0, %s82
      %s104 = sphi 0, %s106
      %s107 = sphi 0, %s104
      %s108 = sphi 0, %s107
      %s124 = sphi 0, %s108
    $region4: #{tpu_custom_call.1} parent=1 // loop_header_branch
      %15 = sbr.rel (%p13) target = $region8
    $region5: #{tpu_custom_call.1} parent=1 // loop_body
      %s17 = ssub.s32 %s12, 1
      %s18 = ssub.s32 %s12, 2
      %s25 = sadd.s32 1, %s20
      %p26 = scmp.ge.s32.totalorder %s25, 1
      %s27 = scalar_select %p26, 0, %s25
      %s28 = sadd.s32 1, %s19
      %s29 = scalar_select %p26, %s28, %s19
      %p30 = scmp.ge.s32.totalorder %s29, 2
      %s31 = scalar_select %p30, 0, %s29
      %s32 = ssub.s32 %s19, %s31
      %p33 = scmp.eq.s32.totalorder %s32, 0
      %s35 = sadd.s32 %s34, 1
      %s36 = scalar_select %p33, %s34, %s35
      %p39 = pneg %p33
      %p40 = scmp.eq.s32.totalorder %s12, 1
      %p41 = por %p39, %p40
      %p42 = scmp.ne.s32.totalorder %s34, %s37
      %p43 = scmp.eq.s32.totalorder %s12, 0
      %p44 = por %p42, %p43
      %p45 = scmp.ne.s32.totalorder %s34, %s37
      %p46 = scmp.eq.s32.totalorder %s17, 1
      %p47 = por %p45, %p46
      %p48 = scmp.ne.s32.totalorder %s37, %s38
      %p49 = scmp.eq.s32.totalorder %s17, 0
      %p50 = por %p48, %p49
      %p51 = scmp.ne.s32.totalorder %s37, %s38
      %p52 = scmp.eq.s32.totalorder %s18, 1
      %p53 = por %p51, %p52
      %p55 = scmp.ne.s32.totalorder %s38, %s54
      %p56 = scmp.eq.s32.totalorder %s18, 0
      %p57 = por %p55, %p56
      %s59 = sadd.s32 %s58, 1
      %p62 = scmp.eq.s32.totalorder %s12, 1
      %p63 = scmp.ne.s32.totalorder %s58, %s60
      %p64 = scmp.eq.s32.totalorder %s12, 0
      %p65 = por %p63, %p64
      %p66 = scmp.ne.s32.totalorder %s58, %s60
      %p67 = scmp.eq.s32.totalorder %s17, 1
      %p68 = por %p66, %p67
      %p69 = scmp.ne.s32.totalorder %s60, %s61
      %p70 = scmp.eq.s32.totalorder %s17, 0
      %p71 = por %p69, %p70
      %p72 = scmp.ne.s32.totalorder %s60, %s61
      %p73 = scmp.eq.s32.totalorder %s18, 1
      %p74 = por %p72, %p73
      %p76 = scmp.ne.s32.totalorder %s61, %s75
      %p77 = scmp.eq.s32.totalorder %s18, 0
      %p78 = por %p76, %p77
      %s80 = sadd.s32 %s79, 1
      %p83 = scmp.eq.s32.totalorder %s12, 1
      %p84 = scmp.ne.s32.totalorder %s79, %s81
      %p85 = scmp.eq.s32.totalorder %s12, 0
      %p86 = por %p84, %p85
      %p87 = scmp.ne.s32.totalorder %s79, %s81
      %p88 = scmp.eq.s32.totalorder %s17, 1
      %p89 = por %p87, %p88
      %p90 = scmp.ne.s32.totalorder %s81, %s82
      %p91 = scmp.eq.s32.totalorder %s17, 0
      %p92 = por %p90, %p91
      %p93 = scmp.ne.s32.totalorder %s81, %s82
      %p94 = scmp.eq.s32.totalorder %s18, 1
      %p95 = por %p93, %p94
      %p97 = scmp.ne.s32.totalorder %s82, %s96
      %p98 = scmp.eq.s32.totalorder %s18, 0
      %p99 = por %p97, %p98
      %s100 = ssub.s32 %s19, %s31
      %s101 = ssub.s32 %s20, %s27
      %s102 = sor.u32 %s100, %s101
      %p103 = scmp.eq.s32.totalorder %s102, 0
      %s105 = sadd.s32 %s104, 1
      %s106 = scalar_select %p103, %s104, %s105
      %p109 = pneg %p103
      %p110 = scmp.eq.s32.totalorder %s12, 1
      %p111 = por %p109, %p110
      %p112 = scmp.ne.s32.totalorder %s104, %s107
      %p113 = scmp.eq.s32.totalorder %s12, 0
      %p114 = por %p112, %p113
      %p115 = scmp.ne.s32.totalorder %s104, %s107
      %p116 = scmp.eq.s32.totalorder %s17, 1
      %p117 = por %p115, %p116
      %p118 = scmp.ne.s32.totalorder %s107, %s108
      %p119 = scmp.eq.s32.totalorder %s17, 0
      %p120 = por %p118, %p119
      %p121 = scmp.ne.s32.totalorder %s107, %s108
      %p122 = scmp.eq.s32.totalorder %s18, 1
      %p123 = por %p121, %p122
      %p125 = scmp.ne.s32.totalorder %s108, %s124
      %p126 = scmp.eq.s32.totalorder %s18, 0
      %p127 = por %p125, %p126
      %p128 = scmp.le.s32.totalorder 1, %s12
      %p129 = scmp.lt.s32.totalorder %s12, 3
      %p130 = pnand %p128, %p129
      %p131 = pneg %p130
      // Predicated region
      $region9: #{tpu_custom_call.1} parent=5 // pred_check
        _
      $region10: #{tpu_custom_call.1} parent=5 // pred_check_branch
        %133 = sbr.rel (%p130) target = $region12
      $region11: #{tpu_custom_call.1} parent=5 // pred_region
        %s134 = ssub.s32 %s12, 1
        // Predicated region
        $region13: #{tpu_custom_call.1} parent=11 // pred_check
          %p135 = pneg %p71
        $region14: #{tpu_custom_call.1} parent=11 // pred_check_branch
          %137 = sbr.rel (%p135) target = $region16
        $region15: #{tpu_custom_call.1} parent=11 // pred_region
          _
        $region16: #{tpu_custom_call.1} parent=11 // pred_fallthru
          _
        // Predicated region
        $region17: #{tpu_custom_call.1} parent=11 // pred_check
          %p138 = pneg %p92
        $region18: #{tpu_custom_call.1} parent=11 // pred_check_branch
          %140 = sbr.rel (%p138) target = $region20
        $region19: #{tpu_custom_call.1} parent=11 // pred_region
          _
        $region20: #{tpu_custom_call.1} parent=11 // pred_fallthru
          _
      $region12: #{tpu_custom_call.1} parent=5 // pred_fallthru
        _
      %p141 = scmp.lt.s32.totalorder %s12, 2
      // Predicated region
      $region21: #{tpu_custom_call.1} parent=5 // pred_check
        %p142 = pneg %p141
      $region22: #{tpu_custom_call.1} parent=5 // pred_check_branch
        %144 = sbr.rel (%p142) target = $region24
      $region23: #{tpu_custom_call.1} parent=5 // pred_region
        // Predicated region
        $region25: #{tpu_custom_call.1} parent=23 // pred_check
          %p145 = pneg %p44
        $region26: #{tpu_custom_call.1} parent=23 // pred_check_branch
          %147 = sbr.rel (%p145) target = $region28
        $region27: #{tpu_custom_call.1} parent=23 // pred_region
          %p148 = scmp.lt.s32.totalorder %s19, 1
          %s149 = scalar_select %p148, %s19, 1
          %s150 = smul.addr %s149, 45
          %s151 = smul.addr %s150, 4
          %s152 = scalar_lea.vmem %s0, %s151
        $region28: #{tpu_custom_call.1} parent=23 // pred_fallthru
          _
      $region24: #{tpu_custom_call.1} parent=5 // pred_fallthru
        _
      %p153 = scmp.le.s32.totalorder 1, %s12
      %p154 = scmp.lt.s32.totalorder %s12, 3
      %p155 = pnand %p153, %p154
      %p156 = pneg %p155
      // Predicated region
      $region29: #{tpu_custom_call.1} parent=5 // pred_check
        _
      $region30: #{tpu_custom_call.1} parent=5 // pred_check_branch
        %158 = sbr.rel (%p155) target = $region32
      $region31: #{tpu_custom_call.1} parent=5 // pred_region
        %s159 = ssub.s32 %s12, 1
        %p160 = scmp.lt.s32.totalorder %s21, 1
        %s161 = scalar_select %p160, %s21, 1
        %s162 = smul.addr %s161, 45
        %s163 = smul.addr %s162, 4
        %s164 = scalar_lea.vmem %s0, %s163
        %p165 = pneg %p50
        %p166 = pneg %p47
        %p167 = pneg %p71
        %p168 = pneg %p68
        %p169 = pneg %p92
        %p170 = pneg %p89
        %p171 = pneg %p120
        %p172 = pneg %p117
        %s173 = sand.u32 %s107, 1
        %s174 = scalar_lea.sflag [#allocation3], %s173
        %s175 = sand.u32 %s107, 1
        %s176 = smul.addr %s175, 36
        %s177 = scalar_lea.vmem [#allocation2], %s176
        %p178 = scmp.lt.s32.totalorder %s21, 1
        %s179 = scalar_select %p178, %s21, 1
        %s180 = smul.addr %s179, 45
        %s181 = smul.addr %s180, 4
        %s182 = scalar_lea.vmem %s0, %s181
        %s183 = smul.u32 9, %s22
        %v185 = vld [vmem:[%s182] sm:$0xf]
        %v186 = vld [vmem:[%s182 + $0x4] sm:$0xf]
        %v187 = vld [vmem:[%s182 + $0x8] sm:$0xf]
        %v188 = vld [vmem:[%s182 + $0xc] sm:$0xf]
        %v189 = vld [vmem:[%s182 + $0x10] sm:$0xf]
        %v190 = vld [vmem:[%s182 + $0x14] sm:$0xf]
        %v191 = vld [vmem:[%s182 + $0x18] sm:$0xf]
        %v192 = vld [vmem:[%s182 + $0x1c] sm:$0xf]
        %v193 = vld [vmem:[%s182 + $0x20] sm:$0xf]
        %v194 = vld [vmem:[%s1] sm:$0xf]
        %v195 = vld [vmem:[%s182 + $0x2c] sm:$0xe]
        %v196 = vld [vmem:[%s182 + $0x30] sm:$0xf]
        %v197 = vld [vmem:[%s182 + $0x34] sm:$0xf]
        %v198 = vld [vmem:[%s182 + $0x38] sm:$0xf]
        %v199 = vld [vmem:[%s182 + $0x3c] sm:$0xf]
        %v200 = vld [vmem:[%s182 + $0x40] sm:$0xf]
        %v201 = vld [vmem:[%s182 + $0x44] sm:$0xf]
        %v202 = vld [vmem:[%s182 + $0x48] sm:$0xf]
        %v203 = vld [vmem:[%s182 + $0x4c] sm:$0xf]
        %v204 = vld [vmem:[%s182 + $0x50] sm:$0x1]
        %s205 = scalar_lea.vmem %s1, 4
        %v206 = vld [vmem:[%s205] sm:$0xf]
        %v217 = vunpack.c.l.b16 %v195
        %v218 = vunpack.c.l.b16 %v196
        %v219 = vunpack.c.l.b16 %v197
        %v220 = vunpack.c.l.b16 %v198
        %v221 = vunpack.c.l.b16 %v199
        %v222 = vunpack.c.l.b16 %v200
        %v223 = vunpack.c.l.b16 %v201
        %v224 = vunpack.c.l.b16 %v202
        %v225 = vunpack.c.l.b16 %v203
        %v226 = vunpack.c.l.b16 %v204
        %v227 = vpack.c.b16 %v218, %v217
        %v228 = vpack.c.b16 %v220, %v219
        %v229 = vpack.c.b16 %v222, %v221
        %v230 = vpack.c.b16 %v224, %v223
        %v231 = vpack.c.b16 %v226, %v225
        %vm232 = vcmask 1046528
        %v233 = vrot.slane %v227, 1
        %v234 = vrot.slane %v228, 1
        %v235 = vsel %vm232, %v233, %v234
        %v236 = vrot.slane %v229, 1
        %v237 = vsel %vm232, %v234, %v236
        %v238 = vrot.slane %v230, 1
        %v239 = vsel %vm232, %v236, %v238
        %v240 = vrot.slane %v231, 1
        %v241 = vsel %vm232, %v238, %v240
        %vm242 = vcmask 64512
        %v244 = vsel %vm242, %v235, 0
        %v247 = vsel %vm242, %v237, 0
        %v250 = vsel %vm242, %v239, 0
        %v253 = vsel %vm242, %v241, 0
        %v256 = vsel %vm242, %v240, 0
        %vm258 = vcmask 1043456
        %v260 = vsel %vm258, %v206, 0
        %262 = vmatprep.subr.bf16.mxu0 0
        %263 = vmatpush1.bf16.msra.mxu0 %v260
        %264 = vmatprep.subr.bf16.mxu0 0
        %265 = vmatpush1.bf16.msra.mxu0 0
        %266 = vmatprep.subr.bf16.mxu0 0
        %267 = vmatpush1.bf16.msra.mxu0 0
        %268 = vmatprep.subr.bf16.mxu0 0
        %269 = vmatpush1.bf16.msra.mxu0 0
        %270 = vmatprep.subr.bf16.mxu0 0
        %271 = vmatpush1.bf16.msra.mxu0 0
        %272 = vmatprep.subr.bf16.mxu0 0
        %273 = vmatpush1.bf16.msra.mxu0 0
        %274 = vmatprep.subr.bf16.mxu0 0
        %275 = vmatpush1.bf16.msra.mxu0 0
        %276 = vmatprep.subr.bf16.mxu0 0
        %277 = vmatpush1.bf16.msra.mxu0 0
        %278 = vmatprep.subr.bf16.mxu0 0
        %279 = vmatpush1.bf16.msra.mxu0 0
        %280 = vmatprep.subr.bf16.mxu0 0
        %281 = vmatpush1.bf16.msra.mxu0 0
        %282 = vmatprep.subr.bf16.mxu0 0
        %283 = vmatpush1.bf16.msra.mxu0 0
        %284 = vmatprep.subr.bf16.mxu0 0
        %285 = vmatpush1.bf16.msra.mxu0 0
        %286 = vmatprep.subr.bf16.mxu0 0
        %287 = vmatpush1.bf16.msra.mxu0 0
        %288 = vmatprep.subr.bf16.mxu0 0
        %289 = vmatpush1.bf16.msra.mxu0 0
        %290 = vmatprep.subr.bf16.mxu0 0
        %291 = vmatpush1.bf16.msra.mxu0 0
        %292 = vmatprep.subr.bf16.mxu0 0
        %293 = vmatpush1.bf16.msra.mxu0 0
        %294 = vmatprep.mubr.bf16.mxu0 0
        %295 = vmatmul.mubr.bf16.gmra.mrb[0].mxu0 %v244
        %v296 = vpop.f32.mrb[0].mxu0
        %v297 = vadd.f32 0.0, %v296
        %v298 = vpop.f32.mrb[0].mxu0
        %v299 = vpop.f32.mrb[0].mxu0
        %v300 = vadd.f32 0.0, %v299
        %v301 = vpop.f32.mrb[0].mxu0
        %302 = vmatprep.mubr.bf16.mxu0 0
        %303 = vmatmul.mubr.bf16.gmra.mrb[0].mxu0 %v247
        %v304 = vpop.f32.mrb[0].mxu0
        %v305 = vadd.f32 0.0, %v304
        %v306 = vpop.f32.mrb[0].mxu0
        %v307 = vpop.f32.mrb[0].mxu0
        %v308 = vadd.f32 0.0, %v307
        %v309 = vpop.f32.mrb[0].mxu0
        %310 = vmatprep.mubr.bf16.mxu0 0
        %311 = vmatmul.mubr.bf16.gmra.mrb[0].mxu0 %v250
        %v312 = vpop.f32.mrb[0].mxu0
        %v313 = vadd.f32 0.0, %v312
        %v314 = vpop.f32.mrb[0].mxu0
        %v315 = vpop.f32.mrb[0].mxu0
        %v316 = vadd.f32 0.0, %v315
        %v317 = vpop.f32.mrb[0].mxu0
        %318 = vmatprep.mubr.bf16.mxu0 0
        %319 = vmatmul.mubr.bf16.gmra.mrb[0].mxu0 %v253
        %v320 = vpop.f32.mrb[0].mxu0
        %v321 = vadd.f32 0.0, %v320
        %v322 = vpop.f32.mrb[0].mxu0
        %v323 = vpop.f32.mrb[0].mxu0
        %v324 = vadd.f32 0.0, %v323
        %v325 = vpop.f32.mrb[0].mxu0
        %326 = vmatprep.mubr.bf16.mxu0 0
        %327 = vmatmul.mubr.bf16.gmra.mrb[0].mxu0 %v256
        %v328 = vpop.f32.mrb[0].mxu0
        %v329 = vadd.f32 0.0, %v328
        %v330 = vpop.f32.mrb[0].mxu0
        %v331 = vpop.f32.mrb[0].mxu0
        %v332 = vpop.f32.mrb[0].mxu0
        %333 = vdwg.mxu0
        %v343 = vunpack.c.l.b16 %v185
        %v344 = vunpack.c.l.b16 %v186
        %v345 = vunpack.c.l.b16 %v187
        %v346 = vunpack.c.l.b16 %v188
        %v347 = vunpack.c.l.b16 %v189
        %v348 = vunpack.c.l.b16 %v190
        %v349 = vunpack.c.l.b16 %v191
        %v350 = vunpack.c.l.b16 %v192
        %v351 = vunpack.c.l.b16 %v193
        %v352 = vpack.c.b16 %v344, %v343
        %v353 = vpack.c.b16 %v346, %v345
        %v354 = vpack.c.b16 %v348, %v347
        %v355 = vpack.c.b16 %v350, %v349
        %v356 = vpack.c.b16 %v351, %v351
        %v358 = vsel %vm242, %v352, 0
        %v361 = vsel %vm242, %v353, 0
        %v364 = vsel %vm242, %v354, 0
        %v367 = vsel %vm242, %v355, 0
        %v370 = vsel %vm242, %v356, 0
        %v373 = vsel %vm258, %v194, 0
        %375 = vmatprep.subr.bf16.mxu0 0
        %376 = vmatpush1.bf16.msra.mxu0 %v373
        %377 = vmatprep.subr.bf16.mxu0 0
        %378 = vmatpush1.bf16.msra.mxu0 0
        %379 = vmatprep.subr.bf16.mxu0 0
        %380 = vmatpush1.bf16.msra.mxu0 0
        %381 = vmatprep.subr.bf16.mxu0 0
        %382 = vmatpush1.bf16.msra.mxu0 0
        %383 = vmatprep.subr.bf16.mxu0 0
        %384 = vmatpush1.bf16.msra.mxu0 0
        %385 = vmatprep.subr.bf16.mxu0 0
        %386 = vmatpush1.bf16.msra.mxu0 0
        %387 = vmatprep.subr.bf16.mxu0 0
        %388 = vmatpush1.bf16.msra.mxu0 0
        %389 = vmatprep.subr.bf16.mxu0 0
        %390 = vmatpush1.bf16.msra.mxu0 0
        %391 = vmatprep.subr.bf16.mxu0 0
        %392 = vmatpush1.bf16.msra.mxu0 0
        %393 = vmatprep.subr.bf16.mxu0 0
        %394 = vmatpush1.bf16.msra.mxu0 0
        %395 = vmatprep.subr.bf16.mxu0 0
        %396 = vmatpush1.bf16.msra.mxu0 0
        %397 = vmatprep.subr.bf16.mxu0 0
        %398 = vmatpush1.bf16.msra.mxu0 0
        %399 = vmatprep.subr.bf16.mxu0 0
        %400 = vmatpush1.bf16.msra.mxu0 0
        %401 = vmatprep.subr.bf16.mxu0 0
        %402 = vmatpush1.bf16.msra.mxu0 0
        %403 = vmatprep.subr.bf16.mxu0 0
        %404 = vmatpush1.bf16.msra.mxu0 0
        %405 = vmatprep.subr.bf16.mxu0 0
        %406 = vmatpush1.bf16.msra.mxu0 0
        %407 = vmatprep.mubr.bf16.mxu0 0
        %408 = vmatmul.mubr.bf16.gmra.mrb[0].mxu0 %v358
        %v409 = vpop.f32.mrb[0].mxu0
        %v410 = vadd.f32 %v297, %v409
        %v411 = vpop.f32.mrb[0].mxu0
        %v412 = vpop.f32.mrb[0].mxu0
        %v413 = vadd.f32 %v300, %v412
        %v414 = vpop.f32.mrb[0].mxu0
        %415 = vmatprep.mubr.bf16.mxu0 0
        %416 = vmatmul.mubr.bf16.gmra.mrb[0].mxu0 %v361
        %v417 = vpop.f32.mrb[0].mxu0
        %v418 = vadd.f32 %v305, %v417
        %v419 = vpop.f32.mrb[0].mxu0
        %v420 = vpop.f32.mrb[0].mxu0
        %v421 = vadd.f32 %v308, %v420
        %v422 = vpop.f32.mrb[0].mxu0
        %423 = vmatprep.mubr.bf16.mxu0 0
        %424 = vmatmul.mubr.bf16.gmra.mrb[0].mxu0 %v364
        %v425 = vpop.f32.mrb[0].mxu0
        %v426 = vadd.f32 %v313, %v425
        %v427 = vpop.f32.mrb[0].mxu0
        %v428 = vpop.f32.mrb[0].mxu0
        %v429 = vadd.f32 %v316, %v428
        %v430 = vpop.f32.mrb[0].mxu0
        %431 = vmatprep.mubr.bf16.mxu0 0
        %432 = vmatmul.mubr.bf16.gmra.mrb[0].mxu0 %v367
        %v433 = vpop.f32.mrb[0].mxu0
        %v434 = vadd.f32 %v321, %v433
        %v435 = vpop.f32.mrb[0].mxu0
        %v436 = vpop.f32.mrb[0].mxu0
        %v437 = vadd.f32 %v324, %v436
        %v438 = vpop.f32.mrb[0].mxu0
        %439 = vmatprep.mubr.bf16.mxu0 0
        %440 = vmatmul.mubr.bf16.gmra.mrb[0].mxu0 %v370
        %v441 = vpop.f32.mrb[0].mxu0
        %v442 = vadd.f32 %v329, %v441
        %v443 = vpop.f32.mrb[0].mxu0
        %v444 = vpop.f32.mrb[0].mxu0
        %v445 = vpop.f32.mrb[0].mxu0
        %446 = vdwg.mxu0
        %v447 = vld [vmem:[%s182] sm:$0xf]
        %v448 = vld [vmem:[%s182 + $0x4] sm:$0xf]
        %v449 = vld [vmem:[%s182 + $0x8] sm:$0xf]
        %v450 = vld [vmem:[%s182 + $0xc] sm:$0xf]
        %v451 = vld [vmem:[%s182 + $0x10] sm:$0xf]
        %v452 = vld [vmem:[%s182 + $0x14] sm:$0xf]
        %v453 = vld [vmem:[%s182 + $0x18] sm:$0xf]
        %v454 = vld [vmem:[%s182 + $0x1c] sm:$0xf]
        %v455 = vld [vmem:[%s182 + $0x20] sm:$0xf]
        %v456 = vld [vmem:[%s182 + $0x24] sm:$0x1]
        %s457 = scalar_lea.vmem %s1, 8
        %v458 = vld [vmem:[%s457] sm:$0xf]
        %v469 = vunpack.c.l.b16 %v447
        %v470 = vunpack.c.l.b16 %v448
        %v471 = vunpack.c.l.b16 %v449
        %v472 = vunpack.c.l.b16 %v450
        %v473 = vunpack.c.l.b16 %v451
        %v474 = vunpack.c.l.b16 %v452
        %v475 = vunpack.c.l.b16 %v453
        %v476 = vunpack.c.l.b16 %v454
        %v477 = vunpack.c.l.b16 %v455
        %v478 = vunpack.c.l.b16 %v456
        %v479 = vpack.c.b16 %v470, %v469
        %v480 = vpack.c.b16 %v472, %v471
        %v481 = vpack.c.b16 %v474, %v473
        %v482 = vpack.c.b16 %v476, %v475
        %v483 = vpack.c.b16 %v478, %v477
        %vm484 = vsmask.f32 7424
        %v486 = vshrl.u32 %v479, 16
        %v488 = vshll.u32 %v479, 16
        %v490 = vrot.slane %v488, 1
        %v491 = vor.u32 %v486, %v490
        %v493 = vshll.u32 %v480, 16
        %v495 = vrot.slane %v493, 1
        %v496 = vsel %vm484, %v491, %v495
        %v497 = vshrl.u32 %v480, 16
        %v499 = vor.u32 %v497, %v495
        %v501 = vshll.u32 %v481, 16
        %v503 = vrot.slane %v501, 1
        %v504 = vsel %vm484, %v499, %v503
        %v505 = vshrl.u32 %v481, 16
        %v507 = vor.u32 %v505, %v503
        %v509 = vshll.u32 %v482, 16
        %v511 = vrot.slane %v509, 1
        %v512 = vsel %vm484, %v507, %v511
        %v513 = vshrl.u32 %v482, 16
        %v515 = vor.u32 %v513, %v511
        %v517 = vshll.u32 %v483, 16
        %v519 = vrot.slane %v517, 1
        %v520 = vsel %vm484, %v515, %v519
        %v521 = vshrl.u32 %v483, 16
        %v523 = vor.u32 %v521, %v519
        %v525 = vsel %vm242, %v496, 0
        %v528 = vsel %vm242, %v504, 0
        %v531 = vsel %vm242, %v512, 0
        %v534 = vsel %vm242, %v520, 0
        %v537 = vsel %vm242, %v523, 0
        %v540 = vsel %vm258, %v458, 0
        %542 = vmatprep.subr.bf16.mxu0 0
        %543 = vmatpush1.bf16.msra.mxu0 %v540
        %544 = vmatprep.subr.bf16.mxu0 0
        %545 = vmatpush1.bf16.msra.mxu0 0
        %546 = vmatprep.subr.bf16.mxu0 0
        %547 = vmatpush1.bf16.msra.mxu0 0
        %548 = vmatprep.subr.bf16.mxu0 0
        %549 = vmatpush1.bf16.msra.mxu0 0
        %550 = vmatprep.subr.bf16.mxu0 0
        %551 = vmatpush1.bf16.msra.mxu0 0
        %552 = vmatprep.subr.bf16.mxu0 0
        %553 = vmatpush1.bf16.msra.mxu0 0
        %554 = vmatprep.subr.bf16.mxu0 0
        %555 = vmatpush1.bf16.msra.mxu0 0
        %556 = vmatprep.subr.bf16.mxu0 0
        %557 = vmatpush1.bf16.msra.mxu0 0
        %558 = vmatprep.subr.bf16.mxu0 0
        %559 = vmatpush1.bf16.msra.mxu0 0
        %560 = vmatprep.subr.bf16.mxu0 0
        %561 = vmatpush1.bf16.msra.mxu0 0
        %562 = vmatprep.subr.bf16.mxu0 0
        %563 = vmatpush1.bf16.msra.mxu0 0
        %564 = vmatprep.subr.bf16.mxu0 0
        %565 = vmatpush1.bf16.msra.mxu0 0
        %566 = vmatprep.subr.bf16.mxu0 0
        %567 = vmatpush1.bf16.msra.mxu0 0
        %568 = vmatprep.subr.bf16.mxu0 0
        %569 = vmatpush1.bf16.msra.mxu0 0
        %570 = vmatprep.subr.bf16.mxu0 0
        %571 = vmatpush1.bf16.msra.mxu0 0
        %572 = vmatprep.subr.bf16.mxu0 0
        %573 = vmatpush1.bf16.msra.mxu0 0
        %574 = vmatprep.mubr.bf16.mxu0 0
        %575 = vmatmul.mubr.bf16.gmra.mrb[0].mxu0 %v525
        %v576 = vpop.f32.mrb[0].mxu0
        %v577 = vadd.f32 0.0, %v576
        %v578 = vpop.f32.mrb[0].mxu0
        %v579 = vpop.f32.mrb[0].mxu0
        %v580 = vadd.f32 0.0, %v579
        %v581 = vpop.f32.mrb[0].mxu0
        %582 = vmatprep.mubr.bf16.mxu0 0
        %583 = vmatmul.mubr.bf16.gmra.mrb[0].mxu0 %v528
        %v584 = vpop.f32.mrb[0].mxu0
        %v585 = vadd.f32 0.0, %v584
        %v586 = vpop.f32.mrb[0].mxu0
        %v587 = vpop.f32.mrb[0].mxu0
        %v588 = vadd.f32 0.0, %v587
        %v589 = vpop.f32.mrb[0].mxu0
        %590 = vmatprep.mubr.bf16.mxu0 0
        %591 = vmatmul.mubr.bf16.gmra.mrb[0].mxu0 %v531
        %v592 = vpop.f32.mrb[0].mxu0
        %v593 = vadd.f32 0.0, %v592
        %v594 = vpop.f32.mrb[0].mxu0
        %v595 = vpop.f32.mrb[0].mxu0
        %v596 = vadd.f32 0.0, %v595
        %v597 = vpop.f32.mrb[0].mxu0
        %598 = vmatprep.mubr.bf16.mxu0 0
        %599 = vmatmul.mubr.bf16.gmra.mrb[0].mxu0 %v534
        %v600 = vpop.f32.mrb[0].mxu0
        %v601 = vadd.f32 0.0, %v600
        %v602 = vpop.f32.mrb[0].mxu0
        %v603 = vpop.f32.mrb[0].mxu0
        %v604 = vadd.f32 0.0, %v603
        %v605 = vpop.f32.mrb[0].mxu0
        %606 = vmatprep.mubr.bf16.mxu0 0
        %607 = vmatmul.mubr.bf16.gmra.mrb[0].mxu0 %v537
        %v608 = vpop.f32.mrb[0].mxu0
        %v609 = vadd.f32 0.0, %v608
        %v610 = vpop.f32.mrb[0].mxu0
        %v611 = vpop.f32.mrb[0].mxu0
        %v612 = vpop.f32.mrb[0].mxu0
        %613 = vdwg.mxu0
        %v614 = vadd.f32 %v410, %v577
        %v615 = vadd.f32 %v413, %v580
        %v616 = vadd.f32 %v418, %v585
        %v617 = vadd.f32 %v421, %v588
        %v618 = vadd.f32 %v426, %v593
        %v619 = vadd.f32 %v429, %v596
        %v620 = vadd.f32 %v434, %v601
        %v621 = vadd.f32 %v437, %v604
        %v622 = vadd.f32 %v442, %v609
        %v623 = vld [vmem:[%s182 + $0x58] sm:$0xc]
        %v624 = vld [vmem:[%s182 + $0x5c] sm:$0xf]
        %v625 = vld [vmem:[%s182 + $0x60] sm:$0xf]
        %v626 = vld [vmem:[%s182 + $0x64] sm:$0xf]
        %v627 = vld [vmem:[%s182 + $0x68] sm:$0xf]
        %v628 = vld [vmem:[%s182 + $0x6c] sm:$0xf]
        %v629 = vld [vmem:[%s182 + $0x70] sm:$0xf]
        %v630 = vld [vmem:[%s182 + $0x74] sm:$0xf]
        %v631 = vld [vmem:[%s182 + $0x78] sm:$0xf]
        %v632 = vld [vmem:[%s182 + $0x7c] sm:$0x3]
        %s633 = scalar_lea.vmem %s1, 12
        %v634 = vld [vmem:[%s633] sm:$0xf]
        %v645 = vunpack.c.l.b16 %v623
        %v646 = vunpack.c.l.b16 %v624
        %v647 = vunpack.c.l.b16 %v625
        %v648 = vunpack.c.l.b16 %v626
        %v649 = vunpack.c.l.b16 %v627
        %v650 = vunpack.c.l.b16 %v628
        %v651 = vunpack.c.l.b16 %v629
        %v652 = vunpack.c.l.b16 %v630
        %v653 = vunpack.c.l.b16 %v631
        %v654 = vunpack.c.l.b16 %v632
        %v655 = vpack.c.b16 %v646, %v645
        %v656 = vpack.c.b16 %v648, %v647
        %v657 = vpack.c.b16 %v650, %v649
        %v658 = vpack.c.b16 %v652, %v651
        %v659 = vpack.c.b16 %v654, %v653
        %vm660 = vcmask 1045504
        %v661 = vrot.slane %v655, 2
        %v662 = vrot.slane %v656, 2
        %v663 = vsel %vm660, %v661, %v662
        %v664 = vrot.slane %v657, 2
        %v665 = vsel %vm660, %v662, %v664
        %v666 = vrot.slane %v658, 2
        %v667 = vsel %vm660, %v664, %v666
        %v668 = vrot.slane %v659, 2
        %v669 = vsel %vm660, %v666, %v668
        %v671 = vsel %vm242, %v663, 0
        %v674 = vsel %vm242, %v665, 0
        %v677 = vsel %vm242, %v667, 0
        %v680 = vsel %vm242, %v669, 0
        %v683 = vsel %vm242, %v668, 0
        %v686 = vsel %vm258, %v634, 0
        %688 = vmatprep.subr.bf16.mxu0 0
        %689 = vmatpush1.bf16.msra.mxu0 %v686
        %690 = vmatprep.subr.bf16.mxu0 0
        %691 = vmatpush1.bf16.msra.mxu0 0
        %692 = vmatprep.subr.bf16.mxu0 0
        %693 = vmatpush1.bf16.msra.mxu0 0
        %694 = vmatprep.subr.bf16.mxu0 0
        %695 = vmatpush1.bf16.msra.mxu0 0
        %696 = vmatprep.subr.bf16.mxu0 0
        %697 = vmatpush1.bf16.msra.mxu0 0
        %698 = vmatprep.subr.bf16.mxu0 0
        %699 = vmatpush1.bf16.msra.mxu0 0
        %700 = vmatprep.subr.bf16.mxu0 0
        %701 = vmatpush1.bf16.msra.mxu0 0
        %702 = vmatprep.subr.bf16.mxu0 0
        %703 = vmatpush1.bf16.msra.mxu0 0
        %704 = vmatprep.subr.bf16.mxu0 0
        %705 = vmatpush1.bf16.msra.mxu0 0
        %706 = vmatprep.subr.bf16.mxu0 0
        %707 = vmatpush1.bf16.msra.mxu0 0
        %708 = vmatprep.subr.bf16.mxu0 0
        %709 = vmatpush1.bf16.msra.mxu0 0
        %710 = vmatprep.subr.bf16.mxu0 0
        %711 = vmatpush1.bf16.msra.mxu0 0
        %712 = vmatprep.subr.bf16.mxu0 0
        %713 = vmatpush1.bf16.msra.mxu0 0
        %714 = vmatprep.subr.bf16.mxu0 0
        %715 = vmatpush1.bf16.msra.mxu0 0
        %716 = vmatprep.subr.bf16.mxu0 0
        %717 = vmatpush1.bf16.msra.mxu0 0
        %718 = vmatprep.subr.bf16.mxu0 0
        %719 = vmatpush1.bf16.msra.mxu0 0
        %720 = vmatprep.mubr.bf16.mxu0 0
        %721 = vmatmul.mubr.bf16.gmra.mrb[0].mxu0 %v671
        %v722 = vpop.f32.mrb[0].mxu0
        %v723 = vadd.f32 0.0, %v722
        %v724 = vpop.f32.mrb[0].mxu0
        %v725 = vpop.f32.mrb[0].mxu0
        %v726 = vadd.f32 0.0, %v725
        %v727 = vpop.f32.mrb[0].mxu0
        %728 = vmatprep.mubr.bf16.mxu0 0
        %729 = vmatmul.mubr.bf16.gmra.mrb[0].mxu0 %v674
        %v730 = vpop.f32.mrb[0].mxu0
        %v731 = vadd.f32 0.0, %v730
        %v732 = vpop.f32.mrb[0].mxu0
        %v733 = vpop.f32.mrb[0].mxu0
        %v734 = vadd.f32 0.0, %v733
        %v735 = vpop.f32.mrb[0].mxu0
        %736 = vmatprep.mubr.bf16.mxu0 0
        %737 = vmatmul.mubr.bf16.gmra.mrb[0].mxu0 %v677
        %v738 = vpop.f32.mrb[0].mxu0
        %v739 = vadd.f32 0.0, %v738
        %v740 = vpop.f32.mrb[0].mxu0
        %v741 = vpop.f32.mrb[0].mxu0
        %v742 = vadd.f32 0.0, %v741
        %v743 = vpop.f32.mrb[0].mxu0
        %744 = vmatprep.mubr.bf16.mxu0 0
        %745 = vmatmul.mubr.bf16.gmra.mrb[0].mxu0 %v680
        %v746 = vpop.f32.mrb[0].mxu0
        %v747 = vadd.f32 0.0, %v746
        %v748 = vpop.f32.mrb[0].mxu0
        %v749 = vpop.f32.mrb[0].mxu0
        %v750 = vadd.f32 0.0, %v749
        %v751 = vpop.f32.mrb[0].mxu0
        %752 = vmatprep.mubr.bf16.mxu0 0
        %753 = vmatmul.mubr.bf16.gmra.mrb[0].mxu0 %v683
        %v754 = vpop.f32.mrb[0].mxu0
        %v755 = vadd.f32 0.0, %v754
        %v756 = vpop.f32.mrb[0].mxu0
        %v757 = vpop.f32.mrb[0].mxu0
        %v758 = vpop.f32.mrb[0].mxu0
        %759 = vdwg.mxu0
        %v760 = vadd.f32 %v614, %v723
        %v761 = vadd.f32 %v615, %v726
        %v762 = vadd.f32 %v616, %v731
        %v763 = vadd.f32 %v617, %v734
        %v764 = vadd.f32 %v618, %v739
        %v765 = vadd.f32 %v619, %v742
        %v766 = vadd.f32 %v620, %v747
        %v767 = vadd.f32 %v621, %v750
        %v768 = vadd.f32 %v622, %v755
        %v769 = vld [vmem:[%s182 + $0x84] sm:$0x8]
        %v770 = vld [vmem:[%s182 + $0x88] sm:$0xf]
        %v771 = vld [vmem:[%s182 + $0x8c] sm:$0xf]
        %v772 = vld [vmem:[%s182 + $0x90] sm:$0xf]
        %v773 = vld [vmem:[%s182 + $0x94] sm:$0xf]
        %v774 = vld [vmem:[%s182 + $0x98] sm:$0xf]
        %v775 = vld [vmem:[%s182 + $0x9c] sm:$0xf]
        %v776 = vld [vmem:[%s182 + $0xa0] sm:$0xf]
        %v777 = vld [vmem:[%s182 + $0xa4] sm:$0xf]
        %v778 = vld [vmem:[%s182 + $0xa8] sm:$0x7]
        %s779 = scalar_lea.vmem %s1, 16
        %v780 = vld [vmem:[%s779] sm:$0xf]
        %v791 = vunpack.c.l.b16 %v769
        %v792 = vunpack.c.l.b16 %v770
        %v793 = vunpack.c.l.b16 %v771
        %v794 = vunpack.c.l.b16 %v772
        %v795 = vunpack.c.l.b16 %v773
        %v796 = vunpack.c.l.b16 %v774
        %v797 = vunpack.c.l.b16 %v775
        %v798 = vunpack.c.l.b16 %v776
        %v799 = vunpack.c.l.b16 %v777
        %v800 = vunpack.c.l.b16 %v778
        %v801 = vpack.c.b16 %v792, %v791
        %v802 = vpack.c.b16 %v794, %v793
        %v803 = vpack.c.b16 %v796, %v795
        %v804 = vpack.c.b16 %v798, %v797
        %v805 = vpack.c.b16 %v800, %v799
        %vm806 = vcmask 1044480
        %v807 = vrot.slane %v801, 3
        %v808 = vrot.slane %v802, 3
        %v809 = vsel %vm806, %v807, %v808
        %v810 = vrot.slane %v803, 3
        %v811 = vsel %vm806, %v808, %v810
        %v812 = vrot.slane %v804, 3
        %v813 = vsel %vm806, %v810, %v812
        %v814 = vrot.slane %v805, 3
        %v815 = vsel %vm806, %v812, %v814
        %v817 = vsel %vm242, %v809, 0
        %v820 = vsel %vm242, %v811, 0
        %v823 = vsel %vm242, %v813, 0
        %v826 = vsel %vm242, %v815, 0
        %v829 = vsel %vm242, %v814, 0
        %v832 = vsel %vm258, %v780, 0
        %834 = vmatprep.subr.bf16.mxu0 0
        %835 = vmatpush1.bf16.msra.mxu0 %v832
        %836 = vmatprep.subr.bf16.mxu0 0
        %837 = vmatpush1.bf16.msra.mxu0 0
        %838 = vmatprep.subr.bf16.mxu0 0
        %839 = vmatpush1.bf16.msra.mxu0 0
        %840 = vmatprep.subr.bf16.mxu0 0
        %841 = vmatpush1.bf16.msra.mxu0 0
        %842 = vmatprep.subr.bf16.mxu0 0
        %843 = vmatpush1.bf16.msra.mxu0 0
        %844 = vmatprep.subr.bf16.mxu0 0
        %845 = vmatpush1.bf16.msra.mxu0 0
        %846 = vmatprep.subr.bf16.mxu0 0
        %847 = vmatpush1.bf16.msra.mxu0 0
        %848 = vmatprep.subr.bf16.mxu0 0
        %849 = vmatpush1.bf16.msra.mxu0 0
        %850 = vmatprep.subr.bf16.mxu0 0
        %851 = vmatpush1.bf16.msra.mxu0 0
        %852 = vmatprep.subr.bf16.mxu0 0
        %853 = vmatpush1.bf16.msra.mxu0 0
        %854 = vmatprep.subr.bf16.mxu0 0
        %855 = vmatpush1.bf16.msra.mxu0 0
        %856 = vmatprep.subr.bf16.mxu0 0
        %857 = vmatpush1.bf16.msra.mxu0 0
        %858 = vmatprep.subr.bf16.mxu0 0
        %859 = vmatpush1.bf16.msra.mxu0 0
        %860 = vmatprep.subr.bf16.mxu0 0
        %861 = vmatpush1.bf16.msra.mxu0 0
        %862 = vmatprep.subr.bf16.mxu0 0
        %863 = vmatpush1.bf16.msra.mxu0 0
        %864 = vmatprep.subr.bf16.mxu0 0
        %865 = vmatpush1.bf16.msra.mxu0 0
        %866 = vmatprep.mubr.bf16.mxu0 0
        %867 = vmatmul.mubr.bf16.gmra.mrb[0].mxu0 %v817
        %v868 = vpop.f32.mrb[0].mxu0
        %v869 = vadd.f32 0.0, %v868
        %v870 = vpop.f32.mrb[0].mxu0
        %v871 = vpop.f32.mrb[0].mxu0
        %v872 = vadd.f32 0.0, %v871
        %v873 = vpop.f32.mrb[0].mxu0
        %874 = vmatprep.mubr.bf16.mxu0 0
        %875 = vmatmul.mubr.bf16.gmra.mrb[0].mxu0 %v820
        %v876 = vpop.f32.mrb[0].mxu0
        %v877 = vadd.f32 0.0, %v876
        %v878 = vpop.f32.mrb[0].mxu0
        %v879 = vpop.f32.mrb[0].mxu0
        %v880 = vadd.f32 0.0, %v879
        %v881 = vpop.f32.mrb[0].mxu0
        %882 = vmatprep.mubr.bf16.mxu0 0
        %883 = vmatmul.mubr.bf16.gmra.mrb[0].mxu0 %v823
        %v884 = vpop.f32.mrb[0].mxu0
        %v885 = vadd.f32 0.0, %v884
        %v886 = vpop.f32.mrb[0].mxu0
        %v887 = vpop.f32.mrb[0].mxu0
        %v888 = vadd.f32 0.0, %v887
        %v889 = vpop.f32.mrb[0].mxu0
        %890 = vmatprep.mubr.bf16.mxu0 0
        %891 = vmatmul.mubr.bf16.gmra.mrb[0].mxu0 %v826
        %v892 = vpop.f32.mrb[0].mxu0
        %v893 = vadd.f32 0.0, %v892
        %v894 = vpop.f32.mrb[0].mxu0
        %v895 = vpop.f32.mrb[0].mxu0
        %v896 = vadd.f32 0.0, %v895
        %v897 = vpop.f32.mrb[0].mxu0
        %898 = vmatprep.mubr.bf16.mxu0 0
        %899 = vmatmul.mubr.bf16.gmra.mrb[0].mxu0 %v829
        %v900 = vpop.f32.mrb[0].mxu0
        %v901 = vadd.f32 0.0, %v900
        %v902 = vpop.f32.mrb[0].mxu0
        %v903 = vpop.f32.mrb[0].mxu0
        %v904 = vpop.f32.mrb[0].mxu0
        %905 = vdwg.mxu0
        %v906 = vadd.f32 %v760, %v869
        %v907 = vadd.f32 %v761, %v872
        %v908 = vadd.f32 %v762, %v877
        %v909 = vadd.f32 %v763, %v880
        %v910 = vadd.f32 %v764, %v885
        %v911 = vadd.f32 %v765, %v888
        %v912 = vadd.f32 %v766, %v893
        %v913 = vadd.f32 %v767, %v896
        %v914 = vadd.f32 %v768, %v901
        %v915 = vld [vmem:[%s182 + $0x7c] sm:$0x7]
        %s916 = scalar_lea.vmem %s1, 20
        %v917 = vld [vmem:[%s916] sm:$0xf]
        %v919 = vunpack.c.l.b16 %v915
        %v920 = vpack.c.b16 %v919, %v653
        %vm921 = vsmask.f32 5376
        %v923 = vshrl.u32 %v655, 16
        %v925 = vrot.slane %v923, 2
        %v926 = vshll.u32 %v655, 16
        %v928 = vrot.slane %v926, 3
        %v929 = vor.u32 %v925, %v928
        %v931 = vshrl.u32 %v656, 16
        %v933 = vrot.slane %v931, 2
        %v934 = vshll.u32 %v656, 16
        %v936 = vrot.slane %v934, 3
        %v937 = vor.u32 %v933, %v936
        %v938 = vsel %vm921, %v929, %v937
        %v940 = vshrl.u32 %v657, 16
        %v942 = vrot.slane %v940, 2
        %v943 = vshll.u32 %v657, 16
        %v945 = vrot.slane %v943, 3
        %v946 = vor.u32 %v942, %v945
        %v947 = vsel %vm921, %v937, %v946
        %v949 = vshrl.u32 %v658, 16
        %v951 = vrot.slane %v949, 2
        %v952 = vshll.u32 %v658, 16
        %v954 = vrot.slane %v952, 3
        %v955 = vor.u32 %v951, %v954
        %v956 = vsel %vm921, %v946, %v955
        %v958 = vshrl.u32 %v920, 16
        %v960 = vrot.slane %v958, 2
        %v961 = vshll.u32 %v920, 16
        %v963 = vrot.slane %v961, 3
        %v964 = vor.u32 %v960, %v963
        %v965 = vsel %vm921, %v955, %v964
        %v967 = vsel %vm242, %v938, 0
        %v970 = vsel %vm242, %v947, 0
        %v973 = vsel %vm242, %v956, 0
        %v976 = vsel %vm242, %v965, 0
        %v979 = vsel %vm242, %v964, 0
        %v982 = vsel %vm258, %v917, 0
        %984 = vmatprep.subr.bf16.mxu0 0
        %985 = vmatpush1.bf16.msra.mxu0 %v982
        %986 = vmatprep.subr.bf16.mxu0 0
        %987 = vmatpush1.bf16.msra.mxu0 0
        %988 = vmatprep.subr.bf16.mxu0 0
        %989 = vmatpush1.bf16.msra.mxu0 0
        %990 = vmatprep.subr.bf16.mxu0 0
        %991 = vmatpush1.bf16.msra.mxu0 0
        %992 = vmatprep.subr.bf16.mxu0 0
        %993 = vmatpush1.bf16.msra.mxu0 0
        %994 = vmatprep.subr.bf16.mxu0 0
        %995 = vmatpush1.bf16.msra.mxu0 0
        %996 = vmatprep.subr.bf16.mxu0 0
        %997 = vmatpush1.bf16.msra.mxu0 0
        %998 = vmatprep.subr.bf16.mxu0 0
        %999 = vmatpush1.bf16.msra.mxu0 0
        %1000 = vmatprep.subr.bf16.mxu0 0
        %1001 = vmatpush1.bf16.msra.mxu0 0
        %1002 = vmatprep.subr.bf16.mxu0 0
        %1003 = vmatpush1.bf16.msra.mxu0 0
        %1004 = vmatprep.subr.bf16.mxu0 0
        %1005 = vmatpush1.bf16.msra.mxu0 0
        %1006 = vmatprep.subr.bf16.mxu0 0
        %1007 = vmatpush1.bf16.msra.mxu0 0
        %1008 = vmatprep.subr.bf16.mxu0 0
        %1009 = vmatpush1.bf16.msra.mxu0 0
        %1010 = vmatprep.subr.bf16.mxu0 0
        %1011 = vmatpush1.bf16.msra.mxu0 0
        %1012 = vmatprep.subr.bf16.mxu0 0
        %1013 = vmatpush1.bf16.msra.mxu0 0
        %1014 = vmatprep.subr.bf16.mxu0 0
        %1015 = vmatpush1.bf16.msra.mxu0 0
        %1016 = vmatprep.mubr.bf16.mxu0 0
        %1017 = vmatmul.mubr.bf16.gmra.mrb[0].mxu0 %v967
        %v1018 = vpop.f32.mrb[0].mxu0
        %v1019 = vadd.f32 0.0, %v1018
        %v1020 = vpop.f32.mrb[0].mxu0
        %v1021 = vpop.f32.mrb[0].mxu0
        %v1022 = vadd.f32 0.0, %v1021
        %v1023 = vpop.f32.mrb[0].mxu0
        %1024 = vmatprep.mubr.bf16.mxu0 0
        %1025 = vmatmul.mubr.bf16.gmra.mrb[0].mxu0 %v970
        %v1026 = vpop.f32.mrb[0].mxu0
        %v1027 = vadd.f32 0.0, %v1026
        %v1028 = vpop.f32.mrb[0].mxu0
        %v1029 = vpop.f32.mrb[0].mxu0
        %v1030 = vadd.f32 0.0, %v1029
        %v1031 = vpop.f32.mrb[0].mxu0
        %1032 = vmatprep.mubr.bf16.mxu0 0
        %1033 = vmatmul.mubr.bf16.gmra.mrb[0].mxu0 %v973
        %v1034 = vpop.f32.mrb[0].mxu0
        %v1035 = vadd.f32 0.0, %v1034
        %v1036 = vpop.f32.mrb[0].mxu0
        %v1037 = vpop.f32.mrb[0].mxu0
        %v1038 = vadd.f32 0.0, %v1037
        %v1039 = vpop.f32.mrb[0].mxu0
        %1040 = vmatprep.mubr.bf16.mxu0 0
        %1041 = vmatmul.mubr.bf16.gmra.mrb[0].mxu0 %v976
        %v1042 = vpop.f32.mrb[0].mxu0
        %v1043 = vadd.f32 0.0, %v1042
        %v1044 = vpop.f32.mrb[0].mxu0
        %v1045 = vpop.f32.mrb[0].mxu0
        %v1046 = vadd.f32 0.0, %v1045
        %v1047 = vpop.f32.mrb[0].mxu0
        %1048 = vmatprep.mubr.bf16.mxu0 0
        %1049 = vmatmul.mubr.bf16.gmra.mrb[0].mxu0 %v979
        %v1050 = vpop.f32.mrb[0].mxu0
        %v1051 = vadd.f32 0.0, %v1050
        %v1052 = vpop.f32.mrb[0].mxu0
        %v1053 = vpop.f32.mrb[0].mxu0
        %v1054 = vpop.f32.mrb[0].mxu0
        %1055 = vdwg.mxu0
        %v1056 = vadd.f32 %v906, %v1019
        %v1057 = vadd.f32 %v907, %v1022
        %v1058 = vadd.f32 %v908, %v1027
        %v1059 = vadd.f32 %v909, %v1030
        %v1060 = vadd.f32 %v910, %v1035
        %v1061 = vadd.f32 %v911, %v1038
        %v1062 = vadd.f32 %v912, %v1043
        %v1063 = vadd.f32 %v913, %v1046
        %v1064 = vadd.f32 %v914, %v1051
        %v1065 = vld [vmem:[%s182 + $0x4] sm:$0xf]
        %v1066 = vld [vmem:[%s182 + $0x8] sm:$0xf]
        %v1067 = vld [vmem:[%s182 + $0xc] sm:$0xf]
        %v1068 = vld [vmem:[%s182 + $0x10] sm:$0xf]
        %v1069 = vld [vmem:[%s182 + $0x14] sm:$0xf]
        %v1070 = vld [vmem:[%s182 + $0x18] sm:$0xf]
        %v1071 = vld [vmem:[%s182 + $0x1c] sm:$0xf]
        %v1072 = vld [vmem:[%s182 + $0x20] sm:$0xf]
        %v1073 = vld [vmem:[%s182 + $0x24] sm:$0xf]
        %v1074 = vld [vmem:[%s182 + $0x28] sm:$0x1]
        %s1075 = scalar_lea.vmem %s1, 24
        %v1076 = vld [vmem:[%s1075] sm:$0xf]
        %v1087 = vunpack.c.l.b16 %v1065
        %v1088 = vunpack.c.l.b16 %v1066
        %v1089 = vunpack.c.l.b16 %v1067
        %v1090 = vunpack.c.l.b16 %v1068
        %v1091 = vunpack.c.l.b16 %v1069
        %v1092 = vunpack.c.l.b16 %v1070
        %v1093 = vunpack.c.l.b16 %v1071
        %v1094 = vunpack.c.l.b16 %v1072
        %v1095 = vunpack.c.l.b16 %v1073
        %v1096 = vunpack.c.l.b16 %v1074
        %v1097 = vpack.c.b16 %v1088, %v1087
        %v1098 = vpack.c.b16 %v1090, %v1089
        %v1099 = vpack.c.b16 %v1092, %v1091
        %v1100 = vpack.c.b16 %v1094, %v1093
        %v1101 = vpack.c.b16 %v1096, %v1095
        %v1103 = vshrl.u32 %v1097, 16
        %v1105 = vshll.u32 %v1097, 16
        %v1107 = vrot.slane %v1105, 1
        %v1108 = vor.u32 %v1103, %v1107
        %v1110 = vshll.u32 %v1098, 16
        %v1112 = vrot.slane %v1110, 1
        %v1113 = vsel %vm484, %v1108, %v1112
        %v1114 = vshrl.u32 %v1098, 16
        %v1116 = vor.u32 %v1114, %v1112
        %v1118 = vshll.u32 %v1099, 16
        %v1120 = vrot.slane %v1118, 1
        %v1121 = vsel %vm484, %v1116, %v1120
        %v1122 = vshrl.u32 %v1099, 16
        %v1124 = vor.u32 %v1122, %v1120
        %v1126 = vshll.u32 %v1100, 16
        %v1128 = vrot.slane %v1126, 1
        %v1129 = vsel %vm484, %v1124, %v1128
        %v1130 = vshrl.u32 %v1100, 16
        %v1132 = vor.u32 %v1130, %v1128
        %v1134 = vshll.u32 %v1101, 16
        %v1136 = vrot.slane %v1134, 1
        %v1137 = vsel %vm484, %v1132, %v1136
        %v1138 = vshrl.u32 %v1101, 16
        %v1140 = vor.u32 %v1138, %v1136
        %v1142 = vsel %vm242, %v1113, 0
        %v1145 = vsel %vm242, %v1121, 0
        %v1148 = vsel %vm242, %v1129, 0
        %v1151 = vsel %vm242, %v1137, 0
        %v1154 = vsel %vm242, %v1140, 0
        %v1157 = vsel %vm258, %v1076, 0
        %1159 = vmatprep.subr.bf16.mxu0 0
        %1160 = vmatpush1.bf16.msra.mxu0 %v1157
        %1161 = vmatprep.subr.bf16.mxu0 0
        %1162 = vmatpush1.bf16.msra.mxu0 0
        %1163 = vmatprep.subr.bf16.mxu0 0
        %1164 = vmatpush1.bf16.msra.mxu0 0
        %1165 = vmatprep.subr.bf16.mxu0 0
        %1166 = vmatpush1.bf16.msra.mxu0 0
        %1167 = vmatprep.subr.bf16.mxu0 0
        %1168 = vmatpush1.bf16.msra.mxu0 0
        %1169 = vmatprep.subr.bf16.mxu0 0
        %1170 = vmatpush1.bf16.msra.mxu0 0
        %1171 = vmatprep.subr.bf16.mxu0 0
        %1172 = vmatpush1.bf16.msra.mxu0 0
        %1173 = vmatprep.subr.bf16.mxu0 0
        %1174 = vmatpush1.bf16.msra.mxu0 0
        %1175 = vmatprep.subr.bf16.mxu0 0
        %1176 = vmatpush1.bf16.msra.mxu0 0
        %1177 = vmatprep.subr.bf16.mxu0 0
        %1178 = vmatpush1.bf16.msra.mxu0 0
        %1179 = vmatprep.subr.bf16.mxu0 0
        %1180 = vmatpush1.bf16.msra.mxu0 0
        %1181 = vmatprep.subr.bf16.mxu0 0
        %1182 = vmatpush1.bf16.msra.mxu0 0
        %1183 = vmatprep.subr.bf16.mxu0 0
        %1184 = vmatpush1.bf16.msra.mxu0 0
        %1185 = vmatprep.subr.bf16.mxu0 0
        %1186 = vmatpush1.bf16.msra.mxu0 0
        %1187 = vmatprep.subr.bf16.mxu0 0
        %1188 = vmatpush1.bf16.msra.mxu0 0
        %1189 = vmatprep.subr.bf16.mxu0 0
        %1190 = vmatpush1.bf16.msra.mxu0 0
        %1191 = vmatprep.mubr.bf16.mxu0 0
        %1192 = vmatmul.mubr.bf16.gmra.mrb[0].mxu0 %v1142
        %v1193 = vpop.f32.mrb[0].mxu0
        %v1194 = vadd.f32 0.0, %v1193
        %v1195 = vpop.f32.mrb[0].mxu0
        %v1196 = vpop.f32.mrb[0].mxu0
        %v1197 = vadd.f32 0.0, %v1196
        %v1198 = vpop.f32.mrb[0].mxu0
        %1199 = vmatprep.mubr.bf16.mxu0 0
        %1200 = vmatmul.mubr.bf16.gmra.mrb[0].mxu0 %v1145
        %v1201 = vpop.f32.mrb[0].mxu0
        %v1202 = vadd.f32 0.0, %v1201
        %v1203 = vpop.f32.mrb[0].mxu0
        %v1204 = vpop.f32.mrb[0].mxu0
        %v1205 = vadd.f32 0.0, %v1204
        %v1206 = vpop.f32.mrb[0].mxu0
        %1207 = vmatprep.mubr.bf16.mxu0 0
        %1208 = vmatmul.mubr.bf16.gmra.mrb[0].mxu0 %v1148
        %v1209 = vpop.f32.mrb[0].mxu0
        %v1210 = vadd.f32 0.0, %v1209
        %v1211 = vpop.f32.mrb[0].mxu0
        %v1212 = vpop.f32.mrb[0].mxu0
        %v1213 = vadd.f32 0.0, %v1212
        %v1214 = vpop.f32.mrb[0].mxu0
        %1215 = vmatprep.mubr.bf16.mxu0 0
        %1216 = vmatmul.mubr.bf16.gmra.mrb[0].mxu0 %v1151
        %v1217 = vpop.f32.mrb[0].mxu0
        %v1218 = vadd.f32 0.0, %v1217
        %v1219 = vpop.f32.mrb[0].mxu0
        %v1220 = vpop.f32.mrb[0].mxu0
        %v1221 = vadd.f32 0.0, %v1220
        %v1222 = vpop.f32.mrb[0].mxu0
        %1223 = vmatprep.mubr.bf16.mxu0 0
        %1224 = vmatmul.mubr.bf16.gmra.mrb[0].mxu0 %v1154
        %v1225 = vpop.f32.mrb[0].mxu0
        %v1226 = vadd.f32 0.0, %v1225
        %v1227 = vpop.f32.mrb[0].mxu0
        %v1228 = vpop.f32.mrb[0].mxu0
        %v1229 = vpop.f32.mrb[0].mxu0
        %1230 = vdwg.mxu0
        %v1231 = vadd.f32 %v1056, %v1194
        %v1232 = vadd.f32 %v1057, %v1197
        %v1233 = vadd.f32 %v1058, %v1202
        %v1234 = vadd.f32 %v1059, %v1205
        %v1235 = vadd.f32 %v1060, %v1210
        %v1236 = vadd.f32 %v1061, %v1213
        %v1237 = vadd.f32 %v1062, %v1218
        %v1238 = vadd.f32 %v1063, %v1221
        %v1239 = vadd.f32 %v1064, %v1226
        %v1240 = vld [vmem:[%s182 + $0x30] sm:$0xe]
        %v1241 = vld [vmem:[%s182 + $0x34] sm:$0xf]
        %v1242 = vld [vmem:[%s182 + $0x38] sm:$0xf]
        %v1243 = vld [vmem:[%s182 + $0x3c] sm:$0xf]
        %v1244 = vld [vmem:[%s182 + $0x40] sm:$0xf]
        %v1245 = vld [vmem:[%s182 + $0x44] sm:$0xf]
        %v1246 = vld [vmem:[%s182 + $0x48] sm:$0xf]
        %v1247 = vld [vmem:[%s182 + $0x4c] sm:$0xf]
        %v1248 = vld [vmem:[%s182 + $0x50] sm:$0xf]
        %v1249 = vld [vmem:[%s182 + $0x54] sm:$0x3]
        %s1250 = scalar_lea.vmem %s1, 28
        %v1251 = vld [vmem:[%s1250] sm:$0xf]
        %v1262 = vunpack.c.l.b16 %v1240
        %v1263 = vunpack.c.l.b16 %v1241
        %v1264 = vunpack.c.l.b16 %v1242
        %v1265 = vunpack.c.l.b16 %v1243
        %v1266 = vunpack.c.l.b16 %v1244
        %v1267 = vunpack.c.l.b16 %v1245
        %v1268 = vunpack.c.l.b16 %v1246
        %v1269 = vunpack.c.l.b16 %v1247
        %v1270 = vunpack.c.l.b16 %v1248
        %v1271 = vunpack.c.l.b16 %v1249
        %v1272 = vpack.c.b16 %v1263, %v1262
        %v1273 = vpack.c.b16 %v1265, %v1264
        %v1274 = vpack.c.b16 %v1267, %v1266
        %v1275 = vpack.c.b16 %v1269, %v1268
        %v1276 = vpack.c.b16 %v1271, %v1270
        %vm1277 = vsmask.f32 6400
        %v1279 = vshrl.u32 %v1272, 16
        %v1281 = vrot.slane %v1279, 1
        %v1282 = vshll.u32 %v1272, 16
        %v1284 = vrot.slane %v1282, 2
        %v1285 = vor.u32 %v1281, %v1284
        %v1287 = vshrl.u32 %v1273, 16
        %v1289 = vrot.slane %v1287, 1
        %v1290 = vshll.u32 %v1273, 16
        %v1292 = vrot.slane %v1290, 2
        %v1293 = vor.u32 %v1289, %v1292
        %v1294 = vsel %vm1277, %v1285, %v1293
        %v1296 = vshrl.u32 %v1274, 16
        %v1298 = vrot.slane %v1296, 1
        %v1299 = vshll.u32 %v1274, 16
        %v1301 = vrot.slane %v1299, 2
        %v1302 = vor.u32 %v1298, %v1301
        %v1303 = vsel %vm1277, %v1293, %v1302
        %v1305 = vshrl.u32 %v1275, 16
        %v1307 = vrot.slane %v1305, 1
        %v1308 = vshll.u32 %v1275, 16
        %v1310 = vrot.slane %v1308, 2
        %v1311 = vor.u32 %v1307, %v1310
        %v1312 = vsel %vm1277, %v1302, %v1311
        %v1314 = vshrl.u32 %v1276, 16
        %v1316 = vrot.slane %v1314, 1
        %v1317 = vshll.u32 %v1276, 16
        %v1319 = vrot.slane %v1317, 2
        %v1320 = vor.u32 %v1316, %v1319
        %v1321 = vsel %vm1277, %v1311, %v1320
        %v1323 = vsel %vm242, %v1294, 0
        %v1326 = vsel %vm242, %v1303, 0
        %v1329 = vsel %vm242, %v1312, 0
        %v1332 = vsel %vm242, %v1321, 0
        %v1335 = vsel %vm242, %v1320, 0
        %v1338 = vsel %vm258, %v1251, 0
        %1340 = vmatprep.subr.bf16.mxu0 0
        %1341 = vmatpush1.bf16.msra.mxu0 %v1338
        %1342 = vmatprep.subr.bf16.mxu0 0
        %1343 = vmatpush1.bf16.msra.mxu0 0
        %1344 = vmatprep.subr.bf16.mxu0 0
        %1345 = vmatpush1.bf16.msra.mxu0 0
        %1346 = vmatprep.subr.bf16.mxu0 0
        %1347 = vmatpush1.bf16.msra.mxu0 0
        %1348 = vmatprep.subr.bf16.mxu0 0
        %1349 = vmatpush1.bf16.msra.mxu0 0
        %1350 = vmatprep.subr.bf16.mxu0 0
        %1351 = vmatpush1.bf16.msra.mxu0 0
        %1352 = vmatprep.subr.bf16.mxu0 0
        %1353 = vmatpush1.bf16.msra.mxu0 0
        %1354 = vmatprep.subr.bf16.mxu0 0
        %1355 = vmatpush1.bf16.msra.mxu0 0
        %1356 = vmatprep.subr.bf16.mxu0 0
        %1357 = vmatpush1.bf16.msra.mxu0 0
        %1358 = vmatprep.subr.bf16.mxu0 0
        %1359 = vmatpush1.bf16.msra.mxu0 0
        %1360 = vmatprep.subr.bf16.mxu0 0
        %1361 = vmatpush1.bf16.msra.mxu0 0
        %1362 = vmatprep.subr.bf16.mxu0 0
        %1363 = vmatpush1.bf16.msra.mxu0 0
        %1364 = vmatprep.subr.bf16.mxu0 0
        %1365 = vmatpush1.bf16.msra.mxu0 0
        %1366 = vmatprep.subr.bf16.mxu0 0
        %1367 = vmatpush1.bf16.msra.mxu0 0
        %1368 = vmatprep.subr.bf16.mxu0 0
        %1369 = vmatpush1.bf16.msra.mxu0 0
        %1370 = vmatprep.subr.bf16.mxu0 0
        %1371 = vmatpush1.bf16.msra.mxu0 0
        %1372 = vmatprep.mubr.bf16.mxu0 0
        %1373 = vmatmul.mubr.bf16.gmra.mrb[0].mxu0 %v1323
        %v1374 = vpop.f32.mrb[0].mxu0
        %v1375 = vadd.f32 0.0, %v1374
        %v1376 = vpop.f32.mrb[0].mxu0
        %v1377 = vpop.f32.mrb[0].mxu0
        %v1378 = vadd.f32 0.0, %v1377
        %v1379 = vpop.f32.mrb[0].mxu0
        %1380 = vmatprep.mubr.bf16.mxu0 0
        %1381 = vmatmul.mubr.bf16.gmra.mrb[0].mxu0 %v1326
        %v1382 = vpop.f32.mrb[0].mxu0
        %v1383 = vadd.f32 0.0, %v1382
        %v1384 = vpop.f32.mrb[0].mxu0
        %v1385 = vpop.f32.mrb[0].mxu0
        %v1386 = vadd.f32 0.0, %v1385
        %v1387 = vpop.f32.mrb[0].mxu0
        %1388 = vmatprep.mubr.bf16.mxu0 0
        %1389 = vmatmul.mubr.bf16.gmra.mrb[0].mxu0 %v1329
        %v1390 = vpop.f32.mrb[0].mxu0
        %v1391 = vadd.f32 0.0, %v1390
        %v1392 = vpop.f32.mrb[0].mxu0
        %v1393 = vpop.f32.mrb[0].mxu0
        %v1394 = vadd.f32 0.0, %v1393
        %v1395 = vpop.f32.mrb[0].mxu0
        %1396 = vmatprep.mubr.bf16.mxu0 0
        %1397 = vmatmul.mubr.bf16.gmra.mrb[0].mxu0 %v1332
        %v1398 = vpop.f32.mrb[0].mxu0
        %v1399 = vadd.f32 0.0, %v1398
        %v1400 = vpop.f32.mrb[0].mxu0
        %v1401 = vpop.f32.mrb[0].mxu0
        %v1402 = vadd.f32 0.0, %v1401
        %v1403 = vpop.f32.mrb[0].mxu0
        %1404 = vmatprep.mubr.bf16.mxu0 0
        %1405 = vmatmul.mubr.bf16.gmra.mrb[0].mxu0 %v1335
        %v1406 = vpop.f32.mrb[0].mxu0
        %v1407 = vadd.f32 0.0, %v1406
        %v1408 = vpop.f32.mrb[0].mxu0
        %v1409 = vpop.f32.mrb[0].mxu0
        %v1410 = vpop.f32.mrb[0].mxu0
        %1411 = vdwg.mxu0
        %v1412 = vadd.f32 %v1231, %v1375
        %v1413 = vadd.f32 %v1232, %v1378
        %v1414 = vadd.f32 %v1233, %v1383
        %v1415 = vadd.f32 %v1234, %v1386
        %v1416 = vadd.f32 %v1235, %v1391
        %v1417 = vadd.f32 %v1236, %v1394
        %v1418 = vadd.f32 %v1237, %v1399
        %v1419 = vadd.f32 %v1238, %v1402
        %v1420 = vadd.f32 %v1239, %v1407
        %v1421 = vld [vmem:[%s182 + $0x4] sm:$0xe]
        %s1422 = scalar_lea.vmem %s1, 32
        %v1423 = vld [vmem:[%s1422] sm:$0xf]
        %v1425 = vunpack.c.l.b16 %v1421
        %v1426 = vpack.c.b16 %v1088, %v1425
        %v1427 = vrot.slane %v1426, 1
        %v1428 = vrot.slane %v1098, 1
        %v1429 = vsel %vm232, %v1427, %v1428
        %v1430 = vrot.slane %v1099, 1
        %v1431 = vsel %vm232, %v1428, %v1430
        %v1432 = vrot.slane %v1100, 1
        %v1433 = vsel %vm232, %v1430, %v1432
        %v1434 = vrot.slane %v1101, 1
        %v1435 = vsel %vm232, %v1432, %v1434
        %v1437 = vsel %vm242, %v1429, 0
        %v1440 = vsel %vm242, %v1431, 0
        %v1443 = vsel %vm242, %v1433, 0
        %v1446 = vsel %vm242, %v1435, 0
        %v1449 = vsel %vm242, %v1434, 0
        %v1452 = vsel %vm258, %v1423, 0
        %1454 = vmatprep.subr.bf16.mxu0 0
        %1455 = vmatpush1.bf16.msra.mxu0 %v1452
        %1456 = vmatprep.subr.bf16.mxu0 0
        %1457 = vmatpush1.bf16.msra.mxu0 0
        %1458 = vmatprep.subr.bf16.mxu0 0
        %1459 = vmatpush1.bf16.msra.mxu0 0
        %1460 = vmatprep.subr.bf16.mxu0 0
        %1461 = vmatpush1.bf16.msra.mxu0 0
        %1462 = vmatprep.subr.bf16.mxu0 0
        %1463 = vmatpush1.bf16.msra.mxu0 0
        %1464 = vmatprep.subr.bf16.mxu0 0
        %1465 = vmatpush1.bf16.msra.mxu0 0
        %1466 = vmatprep.subr.bf16.mxu0 0
        %1467 = vmatpush1.bf16.msra.mxu0 0
        %1468 = vmatprep.subr.bf16.mxu0 0
        %1469 = vmatpush1.bf16.msra.mxu0 0
        %1470 = vmatprep.subr.bf16.mxu0 0
        %1471 = vmatpush1.bf16.msra.mxu0 0
        %1472 = vmatprep.subr.bf16.mxu0 0
        %1473 = vmatpush1.bf16.msra.mxu0 0
        %1474 = vmatprep.subr.bf16.mxu0 0
        %1475 = vmatpush1.bf16.msra.mxu0 0
        %1476 = vmatprep.subr.bf16.mxu0 0
        %1477 = vmatpush1.bf16.msra.mxu0 0
        %1478 = vmatprep.subr.bf16.mxu0 0
        %1479 = vmatpush1.bf16.msra.mxu0 0
        %1480 = vmatprep.subr.bf16.mxu0 0
        %1481 = vmatpush1.bf16.msra.mxu0 0
        %1482 = vmatprep.subr.bf16.mxu0 0
        %1483 = vmatpush1.bf16.msra.mxu0 0
        %1484 = vmatprep.subr.bf16.mxu0 0
        %1485 = vmatpush1.bf16.msra.mxu0 0
        %1486 = vmatprep.mubr.bf16.mxu0 0
        %1487 = vmatmul.mubr.bf16.gmra.mrb[0].mxu0 %v1437
        %v1488 = vpop.f32.mrb[0].mxu0
        %v1489 = vadd.f32 0.0, %v1488
        %v1490 = vpop.f32.mrb[0].mxu0
        %v1491 = vpop.f32.mrb[0].mxu0
        %v1492 = vadd.f32 0.0, %v1491
        %v1493 = vpop.f32.mrb[0].mxu0
        %1494 = vmatprep.mubr.bf16.mxu0 0
        %1495 = vmatmul.mubr.bf16.gmra.mrb[0].mxu0 %v1440
        %v1496 = vpop.f32.mrb[0].mxu0
        %v1497 = vadd.f32 0.0, %v1496
        %v1498 = vpop.f32.mrb[0].mxu0
        %v1499 = vpop.f32.mrb[0].mxu0
        %v1500 = vadd.f32 0.0, %v1499
        %v1501 = vpop.f32.mrb[0].mxu0
        %1502 = vmatprep.mubr.bf16.mxu0 0
        %1503 = vmatmul.mubr.bf16.gmra.mrb[0].mxu0 %v1443
        %v1504 = vpop.f32.mrb[0].mxu0
        %v1505 = vadd.f32 0.0, %v1504
        %v1506 = vpop.f32.mrb[0].mxu0
        %v1507 = vpop.f32.mrb[0].mxu0
        %v1508 = vadd.f32 0.0, %v1507
        %v1509 = vpop.f32.mrb[0].mxu0
        %1510 = vmatprep.mubr.bf16.mxu0 0
        %1511 = vmatmul.mubr.bf16.gmra.mrb[0].mxu0 %v1446
        %v1512 = vpop.f32.mrb[0].mxu0
        %v1513 = vadd.f32 0.0, %v1512
        %v1514 = vpop.f32.mrb[0].mxu0
        %v1515 = vpop.f32.mrb[0].mxu0
        %v1516 = vadd.f32 0.0, %v1515
        %v1517 = vpop.f32.mrb[0].mxu0
        %1518 = vmatprep.mubr.bf16.mxu0 0
        %1519 = vmatmul.mubr.bf16.gmra.mrb[0].mxu0 %v1449
        %v1520 = vpop.f32.mrb[0].mxu0
        %v1521 = vadd.f32 0.0, %v1520
        %v1522 = vpop.f32.mrb[0].mxu0
        %v1523 = vpop.f32.mrb[0].mxu0
        %v1524 = vpop.f32.mrb[0].mxu0
        %1525 = vdwg.mxu0
        %v1526 = vadd.f32 %v1412, %v1489
        %v1527 = vadd.f32 %v1413, %v1492
        %v1528 = vadd.f32 %v1414, %v1497
        %v1529 = vadd.f32 %v1415, %v1500
        %v1530 = vadd.f32 %v1416, %v1505
        %v1531 = vadd.f32 %v1417, %v1508
        %v1532 = vadd.f32 %v1418, %v1513
        %v1533 = vadd.f32 %v1419, %v1516
        %v1534 = vadd.f32 %v1420, %v1521
        %v1535 = vld [vmem:[%s2] sm:$0x1]
        %v1537 = vlaneseq
        %v1538 = vshrl.u32 %v1537, 7
        %v1539 = vsub.s32 0, %v1538
        %v1540 = vrot.slane %v1535, %v1539
        %v1542 = vadd.f32 %v1526, %v1540
        %v1543 = vadd.f32 %v1527, %v1540
        %v1544 = vadd.f32 %v1528, %v1540
        %v1545 = vadd.f32 %v1529, %v1540
        %v1546 = vadd.f32 %v1530, %v1540
        %v1547 = vadd.f32 %v1531, %v1540
        %v1548 = vadd.f32 %v1532, %v1540
        %v1549 = vadd.f32 %v1533, %v1540
        %v1550 = vadd.f32 %v1534, %v1540
        %v1551 = vmax.f32 %v1542, 0.0
        %v1552 = vmax.f32 %v1543, 0.0
        %v1553 = vmax.f32 %v1544, 0.0
        %v1554 = vmax.f32 %v1545, 0.0
        %v1555 = vmax.f32 %v1546, 0.0
        %v1556 = vmax.f32 %v1547, 0.0
        %v1557 = vmax.f32 %v1548, 0.0
        %v1558 = vmax.f32 %v1549, 0.0
        %v1559 = vmax.f32 %v1550, 0.0
        %v1560 = vpack.c.bf16 %v1552, %v1551
        %v1561 = vpack.c.bf16 %v1554, %v1553
        %v1562 = vpack.c.bf16 %v1556, %v1555
        %v1563 = vpack.c.bf16 %v1558, %v1557
        %v1564 = vpack.c.bf16 %v1559, %v1559
        %v1570 = vunpack.c.l.b16 %v1560
        %v1571 = vunpack.c.h.b16 %v1560
        %v1572 = vunpack.c.l.b16 %v1561
        %v1573 = vunpack.c.h.b16 %v1561
        %v1574 = vunpack.c.l.b16 %v1562
        %v1575 = vunpack.c.h.b16 %v1562
        %v1576 = vunpack.c.l.b16 %v1563
        %v1577 = vunpack.c.h.b16 %v1563
        %v1578 = vunpack.c.l.b16 %v1564
        %v1579 = vpack.c.b16 %v1570, %v1570
        %v1580 = vpack.c.b16 %v1571, %v1571
        %v1581 = vpack.c.b16 %v1572, %v1572
        %v1582 = vpack.c.b16 %v1573, %v1573
        %v1583 = vpack.c.b16 %v1574, %v1574
        %v1584 = vpack.c.b16 %v1575, %v1575
        %v1585 = vpack.c.b16 %v1576, %v1576
        %v1586 = vpack.c.b16 %v1577, %v1577
        %v1587 = vpack.c.b16 %v1578, %v1578
        %1597 = vst [vmem:[%s177] sm:$0xf] %v1579
        %1598 = vst [vmem:[%s177 + $0x4] sm:$0xf] %v1580
        %1599 = vst [vmem:[%s177 + $0x8] sm:$0xf] %v1581
        %1600 = vst [vmem:[%s177 + $0xc] sm:$0xf] %v1582
        %1601 = vst [vmem:[%s177 + $0x10] sm:$0xf] %v1583
        %1602 = vst [vmem:[%s177 + $0x14] sm:$0xf] %v1584
        %1603 = vst [vmem:[%s177 + $0x18] sm:$0xf] %v1585
        %1604 = vst [vmem:[%s177 + $0x1c] sm:$0xf] %v1586
        %1605 = vst [vmem:[%s177 + $0x20] sm:$0xf] %v1587
        %s1606 = sand.u32 %s107, 1
        %s1607 = scalar_lea.sflag [#allocation3], %s1606
        %s1608 = sand.u32 %s107, 1
        %s1609 = smul.addr %s1608, 36
        %s1610 = scalar_lea.vmem [#allocation2], %s1609
        // Predicated region
        $region33: #{tpu_custom_call.1} parent=31 // pred_check
          %p1611 = pneg %p117
        $region34: #{tpu_custom_call.1} parent=31 // pred_check_branch
          %1613 = sbr.rel (%p1611) target = $region36
        $region35: #{tpu_custom_call.1} parent=31 // pred_region
          %s1614 = smul.u32 9, %s22
          %s1616 = ssub.s32 576, 576
          %1617 = vsyncadd %s1607, %s1616
          %s1618 = smul.addr %s21, 9
          %s1619 = sadd.s32 %s1614, %s1618
          %s1620 = smul.addr %s1619, 64
          %s1621 = scalar_lea.hbm %s3, %s1620
          %s1622 = sshll.u32 %s1610, 4
          %s1623 = int_to_ptr.vmem [resolvable:$true] %s1622
          %1628 = dma.vmem_to_hbm [thread:$0]  %s1623, 576, %s1621, %s1607, 64, 64, 4
        $region36: #{tpu_custom_call.1} parent=31 // pred_fallthru
          _
      $region32: #{tpu_custom_call.1} parent=5 // pred_fallthru
        _
      %p1629 = scmp.le.s32.totalorder 2, %s12
      // Predicated region
      $region37: #{tpu_custom_call.1} parent=5 // pred_check
        %p1630 = pneg %p1629
      $region38: #{tpu_custom_call.1} parent=5 // pred_check_branch
        %1632 = sbr.rel (%p1630) target = $region40
      $region39: #{tpu_custom_call.1} parent=5 // pred_region
        %s1633 = ssub.s32 %s12, 2
        // Predicated region
        $region41: #{tpu_custom_call.1} parent=39 // pred_check
          %p1634 = pneg %p123
        $region42: #{tpu_custom_call.1} parent=39 // pred_check_branch
          %1636 = sbr.rel (%p1634) target = $region44
        $region43: #{tpu_custom_call.1} parent=39 // pred_region
          %s1637 = sand.u32 %s108, 1
          %s1638 = scalar_lea.sflag [#allocation3], %s1637
          %s1639 = sand.u32 %s108, 1
          %s1640 = smul.addr %s1639, 36
          %s1641 = scalar_lea.vmem [#allocation2], %s1640
          %1642 = dma.done %s1638, 576
        $region44: #{tpu_custom_call.1} parent=39 // pred_fallthru
          _
      $region40: #{tpu_custom_call.1} parent=5 // pred_fallthru
        _
    $region6: #{tpu_custom_call.1} parent=1 // loop_footer
      %s16 = sadd.s32 1, %s12
    $region7: #{tpu_custom_call.1} parent=1 // loop_footer_branch
      %11 = sbr.rel target = $region3
    $region8: #{tpu_custom_call.1} parent=1 // loop_exit
      _
    %1643 = vsyncpa [#allocation3], 1
    %s1644 = scalar_lea.sflag [#allocation3], 1
    %1645 = vsyncpa %s1644, 1

// kernel: tpu_custom_call.1
$region0: #{tpu_custom_call.1}
  #allocation0 [shape = 'u32[]', space=smem, size = 0x4, offset = 0x4, fixed_abs, tag = 'smem constant byte address 0x4 - core index']
  #allocation1 [shape = 'u32[144,128]{1,0:T(1,128)}', space=vmem, size = 0x12000, scoped, tag = 'internal scratch']
  %s0 = inlined_call_operand.vmem [shape: bf16[2,360,8], index: 0, kind: input, shape index: {}]
  %s1 = inlined_call_operand.vmem [shape: bf16[9,8,128], index: 1, kind: input, shape index: {}]
  %s2 = inlined_call_operand.vmem [shape: f32[1,128], index: 2, kind: input, shape index: {}]
  %s3 = inlined_call_operand.hbm [shape: bf16[2,72,128], index: 3, kind: output, shape index: {}]
  %s4 = sld [smem:[#allocation0]]
  $region45: #{tpu_custom_call.1} parent=0
    _
  %s6 = ssub.s32 1, %s4
  %s7 = scalar_select 0, %s6, %s4
  $region1: #{tpu_custom_call.1} parent=0
    #allocation2 [shape = 'u8[36864]{0}', space=vmem, size = 0x9000, scoped, tag = 'output window, operand 0']
    #allocation3 [shape = 's32[2]{0}', space=sflag, size = 0x8, scoped, tag = 'scoped memory for tpu_custom_call.1']
    %8 = vsyncpa [#allocation3], 0
    %s9 = scalar_lea.sflag [#allocation3], 1
    %10 = vsyncpa %s9, 0
    loop: start=0, step=1, limit=4
    $region2: #{tpu_custom_call.1} parent=1 // loop_pre_header
      _
    $region3: #{tpu_custom_call.1} parent=1 // loop_header
      %s12 = sphi 0, %s16
      %p13 = scmp.ge.s32.totalorder %s12, 4
      %s19 = sphi 0, %s31
      %s20 = sphi 0, %s27
      %s21 = sphi 0, %s19
      %s22 = sphi 0, %s20
      %s23 = sphi 0, %s21
      %s24 = sphi 0, %s22
      %s34 = sphi 0, %s36
      %s37 = sphi 0, %s34
      %s38 = sphi 0, %s37
      %s54 = sphi 0, %s38
      %s58 = sphi 0, %s58
      %s60 = sphi 0, %s58
      %s61 = sphi 0, %s60
      %s75 = sphi 0, %s61
      %s79 = sphi 0, %s79
      %s81 = sphi 0, %s79
      %s82 = sphi 0, %s81
      %s96 = sphi 0, %s82
      %s104 = sphi 0, %s106
      %s107 = sphi 0, %s104
      %s108 = sphi 0, %s107
      %s124 = sphi 0, %s108
    $region4: #{tpu_custom_call.1} parent=1 // loop_header_branch
      %15 = sbr.rel (%p13) target = $region8
    $region5: #{tpu_custom_call.1} parent=1 // loop_body
      %s17 = ssub.s32 %s12, 1
      %s18 = ssub.s32 %s12, 2
      %s25 = sadd.s32 1, %s20
      %p26 = scmp.ge.s32.totalorder %s25, 1
      %s27 = scalar_select %p26, 0, %s25
      %s28 = sadd.s32 1, %s19
      %s29 = scalar_select %p26, %s28, %s19
      %p30 = scmp.ge.s32.totalorder %s29, 2
      %s31 = scalar_select %p30, 0, %s29
      %s32 = ssub.s32 %s19, %s31
      %p33 = scmp.eq.s32.totalorder %s32, 0
      %s35 = sadd.s32 %s34, 1
      %s36 = scalar_select %p33, %s34, %s35
      %p39 = pneg %p33
      %p40 = scmp.eq.s32.totalorder %s12, 1
      %p41 = por %p39, %p40
      %p42 = scmp.ne.s32.totalorder %s34, %s37
      %p43 = scmp.eq.s32.totalorder %s12, 0
      %p44 = por %p42, %p43
      %p45 = scmp.ne.s32.totalorder %s34, %s37
      %p46 = scmp.eq.s32.totalorder %s17, 1
      %p47 = por %p45, %p46
      %p48 = scmp.ne.s32.totalorder %s37, %s38
      %p49 = scmp.eq.s32.totalorder %s17, 0
      %p50 = por %p48, %p49
      %p51 = scmp.ne.s32.totalorder %s37, %s38
      %p52 = scmp.eq.s32.totalorder %s18, 1
      %p53 = por %p51, %p52
      %p55 = scmp.ne.s32.totalorder %s38, %s54
      %p56 = scmp.eq.s32.totalorder %s18, 0
      %p57 = por %p55, %p56
      %s59 = sadd.s32 %s58, 1
      %p62 = scmp.eq.s32.totalorder %s12, 1
      %p63 = scmp.ne.s32.totalorder %s58, %s60
      %p64 = scmp.eq.s32.totalorder %s12, 0
      %p65 = por %p63, %p64
      %p66 = scmp.ne.s32.totalorder %s58, %s60
      %p67 = scmp.eq.s32.totalorder %s17, 1
      %p68 = por %p66, %p67
      %p69 = scmp.ne.s32.totalorder %s60, %s61
      %p70 = scmp.eq.s32.totalorder %s17, 0
      %p71 = por %p69, %p70
      %p72 = scmp.ne.s32.totalorder %s60, %s61
      %p73 = scmp.eq.s32.totalorder %s18, 1
      %p74 = por %p72, %p73
      %p76 = scmp.ne.s32.totalorder %s61, %s75
      %p77 = scmp.eq.s32.totalorder %s18, 0
      %p78 = por %p76, %p77
      %s80 = sadd.s32 %s79, 1
      %p83 = scmp.eq.s32.totalorder %s12, 1
      %p84 = scmp.ne.s32.totalorder %s79, %s81
      %p85 = scmp.eq.s32.totalorder %s12, 0
      %p86 = por %p84, %p85
      %p87 = scmp.ne.s32.totalorder %s79, %s81
      %p88 = scmp.eq.s32.totalorder %s17, 1
      %p89 = por %p87, %p88
      %p90 = scmp.ne.s32.totalorder %s81, %s82
      %p91 = scmp.eq.s32.totalorder %s17, 0
      %p92 = por %p90, %p91
      %p93 = scmp.ne.s32.totalorder %s81, %s82
      %p94 = scmp.eq.s32.totalorder %s18, 1
      %p95 = por %p93, %p94
      %p97 = scmp.ne.s32.totalorder %s82, %s96
      %p98 = scmp.eq.s32.totalorder %s18, 0
      %p99 = por %p97, %p98
      %s100 = ssub.s32 %s19, %s31
      %s101 = ssub.s32 %s20, %s27
      %s102 = sor.u32 %s100, %s101
      %p103 = scmp.eq.s32.totalorder %s102, 0
      %s105 = sadd.s32 %s104, 1
      %s106 = scalar_select %p103, %s104, %s105
      %p109 = pneg %p103
      %p110 = scmp.eq.s32.totalorder %s12, 1
      %p111 = por %p109, %p110
      %p112 = scmp.ne.s32.totalorder %s104, %s107
      %p113 = scmp.eq.s32.totalorder %s12, 0
      %p114 = por %p112, %p113
      %p115 = scmp.ne.s32.totalorder %s104, %s107
      %p116 = scmp.eq.s32.totalorder %s17, 1
      %p117 = por %p115, %p116
      %p118 = scmp.ne.s32.totalorder %s107, %s108
      %p119 = scmp.eq.s32.totalorder %s17, 0
      %p120 = por %p118, %p119
      %p121 = scmp.ne.s32.totalorder %s107, %s108
      %p122 = scmp.eq.s32.totalorder %s18, 1
      %p123 = por %p121, %p122
      %p125 = scmp.ne.s32.totalorder %s108, %s124
      %p126 = scmp.eq.s32.totalorder %s18, 0
      %p127 = por %p125, %p126
      %p128 = scmp.le.s32.totalorder 1, %s12
      %p129 = scmp.lt.s32.totalorder %s12, 3
      %p130 = pnand %p128, %p129
      %p131 = pneg %p130
      // Predicated region
      $region9: #{tpu_custom_call.1} parent=5 // pred_check
        _
      $region10: #{tpu_custom_call.1} parent=5 // pred_check_branch
        %133 = sbr.rel (%p130) target = $region12
      $region11: #{tpu_custom_call.1} parent=5 // pred_region
        %s134 = ssub.s32 %s12, 1
        // Predicated region
        $region13: #{tpu_custom_call.1} parent=11 // pred_check
          %p135 = pneg %p71
        $region14: #{tpu_custom_call.1} parent=11 // pred_check_branch
          %137 = sbr.rel (%p135) target = $region16
        $region15: #{tpu_custom_call.1} parent=11 // pred_region
          _
        $region16: #{tpu_custom_call.1} parent=11 // pred_fallthru
          _
        // Predicated region
        $region17: #{tpu_custom_call.1} parent=11 // pred_check
          %p138 = pneg %p92
        $region18: #{tpu_custom_call.1} parent=11 // pred_check_branch
          %140 = sbr.rel (%p138) target = $region20
        $region19: #{tpu_custom_call.1} parent=11 // pred_region
          _
        $region20: #{tpu_custom_call.1} parent=11 // pred_fallthru
          _
      $region12: #{tpu_custom_call.1} parent=5 // pred_fallthru
        _
      %p141 = scmp.lt.s32.totalorder %s12, 2
      // Predicated region
      $region21: #{tpu_custom_call.1} parent=5 // pred_check
        %p142 = pneg %p141
      $region22: #{tpu_custom_call.1} parent=5 // pred_check_branch
        %144 = sbr.rel (%p142) target = $region24
      $region23: #{tpu_custom_call.1} parent=5 // pred_region
        // Predicated region
        $region25: #{tpu_custom_call.1} parent=23 // pred_check
          %p145 = pneg %p44
        $region26: #{tpu_custom_call.1} parent=23 // pred_check_branch
          %147 = sbr.rel (%p145) target = $region28
        $region27: #{tpu_custom_call.1} parent=23 // pred_region
          %p148 = scmp.lt.s32.totalorder %s19, 1
          %s149 = scalar_select %p148, %s19, 1
          %s150 = smul.addr %s149, 45
          %s151 = smul.addr %s150, 4
          %s152 = scalar_lea.vmem %s0, %s151
        $region28: #{tpu_custom_call.1} parent=23 // pred_fallthru
          _
      $region24: #{tpu_custom_call.1} parent=5 // pred_fallthru
        _
      %p153 = scmp.le.s32.totalorder 1, %s12
      %p154 = scmp.lt.s32.totalorder %s12, 3
      %p155 = pnand %p153, %p154
      %p156 = pneg %p155
      // Predicated region
      $region29: #{tpu_custom_call.1} parent=5 // pred_check
        _
      $region30: #{tpu_custom_call.1} parent=5 // pred_check_branch
        %158 = sbr.rel (%p155) target = $region32
      $region31: #{tpu_custom_call.1} parent=5 // pred_region
        %s159 = ssub.s32 %s12, 1
        %p160 = scmp.lt.s32.totalorder %s21, 1
        %s161 = scalar_select %p160, %s21, 1
        %s162 = smul.addr %s161, 45
        %s163 = smul.addr %s162, 4
        %s164 = scalar_lea.vmem %s0, %s163
        %p165 = pneg %p50
        %p166 = pneg %p47
        %p167 = pneg %p71
        %p168 = pneg %p68
        %p169 = pneg %p92
        %p170 = pneg %p89
        %p171 = pneg %p120
        %p172 = pneg %p117
        %s173 = sand.u32 %s107, 1
        %s174 = scalar_lea.sflag [#allocation3], %s173
        %s175 = sand.u32 %s107, 1
        %s176 = smul.addr %s175, 36
        %s177 = scalar_lea.vmem [#allocation2], %s176
        %p178 = scmp.lt.s32.totalorder %s21, 1
        %s179 = scalar_select %p178, %s21, 1
        %s180 = smul.addr %s179, 45
        %s181 = smul.addr %s180, 4
        %s182 = scalar_lea.vmem %s0, %s181
        %s183 = smul.u32 9, %s22
        %v185 = vld [vmem:[%s182] sm:$0xf]
        %v186 = vld [vmem:[%s182 + $0x4] sm:$0xf]
        %v187 = vld [vmem:[%s182 + $0x8] sm:$0xf]
        %v188 = vld [vmem:[%s182 + $0xc] sm:$0xf]
        %v189 = vld [vmem:[%s182 + $0x10] sm:$0xf]
        %v190 = vld [vmem:[%s182 + $0x14] sm:$0xf]
        %v191 = vld [vmem:[%s182 + $0x18] sm:$0xf]
        %v192 = vld [vmem:[%s182 + $0x1c] sm:$0xf]
        %v193 = vld [vmem:[%s182 + $0x20] sm:$0xf]
        %v194 = vld [vmem:[%s1] sm:$0xf]
        %v195 = vld [vmem:[%s182 + $0x2c] sm:$0xe]
        %v196 = vld [vmem:[%s182 + $0x30] sm:$0xf]
        %v197 = vld [vmem:[%s182 + $0x34] sm:$0xf]
        %v198 = vld [vmem:[%s182 + $0x38] sm:$0xf]
        %v199 = vld [vmem:[%s182 + $0x3c] sm:$0xf]
        %v200 = vld [vmem:[%s182 + $0x40] sm:$0xf]
        %v201 = vld [vmem:[%s182 + $0x44] sm:$0xf]
        %v202 = vld [vmem:[%s182 + $0x48] sm:$0xf]
        %v203 = vld [vmem:[%s182 + $0x4c] sm:$0xf]
        %v204 = vld [vmem:[%s182 + $0x50] sm:$0x1]
        %s205 = scalar_lea.vmem %s1, 4
        %v206 = vld [vmem:[%s205] sm:$0xf]
        %v217 = vunpack.c.l.b16 %v195
        %v218 = vunpack.c.l.b16 %v196
        %v219 = vunpack.c.l.b16 %v197
        %v220 = vunpack.c.l.b16 %v198
        %v221 = vunpack.c.l.b16 %v199
        %v222 = vunpack.c.l.b16 %v200
        %v223 = vunpack.c.l.b16 %v201
        %v224 = vunpack.c.l.b16 %v202
        %v225 = vunpack.c.l.b16 %v203
        %v226 = vunpack.c.l.b16 %v204
        %v227 = vpack.c.b16 %v218, %v217
        %v228 = vpack.c.b16 %v220, %v219
        %v229 = vpack.c.b16 %v222, %v221
        %v230 = vpack.c.b16 %v224, %v223
        %v231 = vpack.c.b16 %v226, %v225
        %vm232 = vcmask 1046528
        %v233 = vrot.slane %v227, 1
        %v234 = vrot.slane %v228, 1
        %v235 = vsel %vm232, %v233, %v234
        %v236 = vrot.slane %v229, 1
        %v237 = vsel %vm232, %v234, %v236
        %v238 = vrot.slane %v230, 1
        %v239 = vsel %vm232, %v236, %v238
        %v240 = vrot.slane %v231, 1
        %v241 = vsel %vm232, %v238, %v240
        %vm242 = vcmask 64512
        %v244 = vsel %vm242, %v235, 0
        %v247 = vsel %vm242, %v237, 0
        %v250 = vsel %vm242, %v239, 0
        %v253 = vsel %vm242, %v241, 0
        %v256 = vsel %vm242, %v240, 0
        %vm258 = vcmask 1043456
        %v260 = vsel %vm258, %v206, 0
        %262 = vmatprep.subr.bf16.mxu0 0
        %263 = vmatpush1.bf16.msra.mxu0 %v260
        %264 = vmatprep.subr.bf16.mxu0 0
        %265 = vmatpush1.bf16.msra.mxu0 0
        %266 = vmatprep.subr.bf16.mxu0 0
        %267 = vmatpush1.bf16.msra.mxu0 0
        %268 = vmatprep.subr.bf16.mxu0 0
        %269 = vmatpush1.bf16.msra.mxu0 0
        %270 = vmatprep.subr.bf16.mxu0 0
        %271 = vmatpush1.bf16.msra.mxu0 0
        %272 = vmatprep.subr.bf16.mxu0 0
        %273 = vmatpush1.bf16.msra.mxu0 0
        %274 = vmatprep.subr.bf16.mxu0 0
        %275 = vmatpush1.bf16.msra.mxu0 0
        %276 = vmatprep.subr.bf16.mxu0 0
        %277 = vmatpush1.bf16.msra.mxu0 0
        %278 = vmatprep.subr.bf16.mxu0 0
        %279 = vmatpush1.bf16.msra.mxu0 0
        %280 = vmatprep.subr.bf16.mxu0 0
        %281 = vmatpush1.bf16.msra.mxu0 0
        %282 = vmatprep.subr.bf16.mxu0 0
        %283 = vmatpush1.bf16.msra.mxu0 0
        %284 = vmatprep.subr.bf16.mxu0 0
        %285 = vmatpush1.bf16.msra.mxu0 0
        %286 = vmatprep.subr.bf16.mxu0 0
        %287 = vmatpush1.bf16.msra.mxu0 0
        %288 = vmatprep.subr.bf16.mxu0 0
        %289 = vmatpush1.bf16.msra.mxu0 0
        %290 = vmatprep.subr.bf16.mxu0 0
        %291 = vmatpush1.bf16.msra.mxu0 0
        %292 = vmatprep.subr.bf16.mxu0 0
        %293 = vmatpush1.bf16.msra.mxu0 0
        %294 = vmatprep.mubr.bf16.mxu0 0
        %295 = vmatmul.mubr.bf16.gmra.mrb[0].mxu0 %v244
        %v296 = vpop.f32.mrb[0].mxu0
        %v297 = vadd.f32 0.0, %v296
        %v298 = vpop.f32.mrb[0].mxu0
        %v299 = vpop.f32.mrb[0].mxu0
        %v300 = vadd.f32 0.0, %v299
        %v301 = vpop.f32.mrb[0].mxu0
        %302 = vmatprep.mubr.bf16.mxu0 0
        %303 = vmatmul.mubr.bf16.gmra.mrb[0].mxu0 %v247
        %v304 = vpop.f32.mrb[0].mxu0
        %v305 = vadd.f32 0.0, %v304
        %v306 = vpop.f32.mrb[0].mxu0
        %v307 = vpop.f32.mrb[0].mxu0
        %v308 = vadd.f32 0.0, %v307
        %v309 = vpop.f32.mrb[0].mxu0
        %310 = vmatprep.mubr.bf16.mxu0 0
        %311 = vmatmul.mubr.bf16.gmra.mrb[0].mxu0 %v250
        %v312 = vpop.f32.mrb[0].mxu0
        %v313 = vadd.f32 0.0, %v312
        %v314 = vpop.f32.mrb[0].mxu0
        %v315 = vpop.f32.mrb[0].mxu0
        %v316 = vadd.f32 0.0, %v315
        %v317 = vpop.f32.mrb[0].mxu0
        %318 = vmatprep.mubr.bf16.mxu0 0
        %319 = vmatmul.mubr.bf16.gmra.mrb[0].mxu0 %v253
        %v320 = vpop.f32.mrb[0].mxu0
        %v321 = vadd.f32 0.0, %v320
        %v322 = vpop.f32.mrb[0].mxu0
        %v323 = vpop.f32.mrb[0].mxu0
        %v324 = vadd.f32 0.0, %v323
        %v325 = vpop.f32.mrb[0].mxu0
        %326 = vmatprep.mubr.bf16.mxu0 0
        %327 = vmatmul.mubr.bf16.gmra.mrb[0].mxu0 %v256
        %v328 = vpop.f32.mrb[0].mxu0
        %v329 = vadd.f32 0.0, %v328
        %v330 = vpop.f32.mrb[0].mxu0
        %v331 = vpop.f32.mrb[0].mxu0
        %v332 = vpop.f32.mrb[0].mxu0
        %333 = vdwg.mxu0
        %v343 = vunpack.c.l.b16 %v185
        %v344 = vunpack.c.l.b16 %v186
        %v345 = vunpack.c.l.b16 %v187
        %v346 = vunpack.c.l.b16 %v188
        %v347 = vunpack.c.l.b16 %v189
        %v348 = vunpack.c.l.b16 %v190
        %v349 = vunpack.c.l.b16 %v191
        %v350 = vunpack.c.l.b16 %v192
        %v351 = vunpack.c.l.b16 %v193
        %v352 = vpack.c.b16 %v344, %v343
        %v353 = vpack.c.b16 %v346, %v345
        %v354 = vpack.c.b16 %v348, %v347
        %v355 = vpack.c.b16 %v350, %v349
        %v356 = vpack.c.b16 %v351, %v351
        %v358 = vsel %vm242, %v352, 0
        %v361 = vsel %vm242, %v353, 0
        %v364 = vsel %vm242, %v354, 0
        %v367 = vsel %vm242, %v355, 0
        %v370 = vsel %vm242, %v356, 0
        %v373 = vsel %vm258, %v194, 0
        %375 = vmatprep.subr.bf16.mxu0 0
        %376 = vmatpush1.bf16.msra.mxu0 %v373
        %377 = vmatprep.subr.bf16.mxu0 0
        %378 = vmatpush1.bf16.msra.mxu0 0
        %379 = vmatprep.subr.bf16.mxu0 0
        %380 = vmatpush1.bf16.msra.mxu0 0
        %381 = vmatprep.subr.bf16.mxu0 0
        %382 = vmatpush1.bf16.msra.mxu0 0
        %383 = vmatprep.subr.bf16.mxu0 0
        %384 = vmatpush1.bf16.msra.mxu0 0
        %385 = vmatprep.subr.bf16.mxu0 0
        %386 = vmatpush1.bf16.msra.mxu0 0
        %387 = vmatprep.subr.bf16.mxu0 0
        %388 = vmatpush1.bf16.msra.mxu0 0
        %389 = vmatprep.subr.bf16.mxu0 0
        %390 = vmatpush1.bf16.msra.mxu0 0
        %391 = vmatprep.subr.bf16.mxu0 0
        %392 = vmatpush1.bf16.msra.mxu0 0
        %393 = vmatprep.subr.bf16.mxu0 0
        %394 = vmatpush1.bf16.msra.mxu0 0
        %395 = vmatprep.subr.bf16.mxu0 0
        %396 = vmatpush1.bf16.msra.mxu0 0
        %397 = vmatprep.subr.bf16.mxu0 0
        %398 = vmatpush1.bf16.msra.mxu0 0
        %399 = vmatprep.subr.bf16.mxu0 0
        %400 = vmatpush1.bf16.msra.mxu0 0
        %401 = vmatprep.subr.bf16.mxu0 0
        %402 = vmatpush1.bf16.msra.mxu0 0
        %403 = vmatprep.subr.bf16.mxu0 0
        %404 = vmatpush1.bf16.msra.mxu0 0
        %405 = vmatprep.subr.bf16.mxu0 0
        %406 = vmatpush1.bf16.msra.mxu0 0
        %407 = vmatprep.mubr.bf16.mxu0 0
        %408 = vmatmul.mubr.bf16.gmra.mrb[0].mxu0 %v358
        %v409 = vpop.f32.mrb[0].mxu0
        %v410 = vadd.f32 %v297, %v409
        %v411 = vpop.f32.mrb[0].mxu0
        %v412 = vpop.f32.mrb[0].mxu0
        %v413 = vadd.f32 %v300, %v412
        %v414 = vpop.f32.mrb[0].mxu0
        %415 = vmatprep.mubr.bf16.mxu0 0
        %416 = vmatmul.mubr.bf16.gmra.mrb[0].mxu0 %v361
        %v417 = vpop.f32.mrb[0].mxu0
        %v418 = vadd.f32 %v305, %v417
        %v419 = vpop.f32.mrb[0].mxu0
        %v420 = vpop.f32.mrb[0].mxu0
        %v421 = vadd.f32 %v308, %v420
        %v422 = vpop.f32.mrb[0].mxu0
        %423 = vmatprep.mubr.bf16.mxu0 0
        %424 = vmatmul.mubr.bf16.gmra.mrb[0].mxu0 %v364
        %v425 = vpop.f32.mrb[0].mxu0
        %v426 = vadd.f32 %v313, %v425
        %v427 = vpop.f32.mrb[0].mxu0
        %v428 = vpop.f32.mrb[0].mxu0
        %v429 = vadd.f32 %v316, %v428
        %v430 = vpop.f32.mrb[0].mxu0
        %431 = vmatprep.mubr.bf16.mxu0 0
        %432 = vmatmul.mubr.bf16.gmra.mrb[0].mxu0 %v367
        %v433 = vpop.f32.mrb[0].mxu0
        %v434 = vadd.f32 %v321, %v433
        %v435 = vpop.f32.mrb[0].mxu0
        %v436 = vpop.f32.mrb[0].mxu0
        %v437 = vadd.f32 %v324, %v436
        %v438 = vpop.f32.mrb[0].mxu0
        %439 = vmatprep.mubr.bf16.mxu0 0
        %440 = vmatmul.mubr.bf16.gmra.mrb[0].mxu0 %v370
        %v441 = vpop.f32.mrb[0].mxu0
        %v442 = vadd.f32 %v329, %v441
        %v443 = vpop.f32.mrb[0].mxu0
        %v444 = vpop.f32.mrb[0].mxu0
        %v445 = vpop.f32.mrb[0].mxu0
        %446 = vdwg.mxu0
        %v447 = vld [vmem:[%s182] sm:$0xf]
        %v448 = vld [vmem:[%s182 + $0x4] sm:$0xf]
        %v449 = vld [vmem:[%s182 + $0x8] sm:$0xf]
        %v450 = vld [vmem:[%s182 + $0xc] sm:$0xf]
        %v451 = vld [vmem:[%s182 + $0x10] sm:$0xf]
        %v452 = vld [vmem:[%s182 + $0x14] sm:$0xf]
        %v453 = vld [vmem:[%s182 + $0x18] sm:$0xf]
        %v454 = vld [vmem:[%s182 + $0x1c] sm:$0xf]
        %v455 = vld [vmem:[%s182 + $0x20] sm:$0xf]
        %v456 = vld [vmem:[%s182 + $0x24] sm:$0x1]
        %s457 = scalar_lea.vmem %s1, 8
        %v458 = vld [vmem:[%s457] sm:$0xf]
        %v469 = vunpack.c.l.b16 %v447
        %v470 = vunpack.c.l.b16 %v448
        %v471 = vunpack.c.l.b16 %v449
        %v472 = vunpack.c.l.b16 %v450
        %v473 = vunpack.c.l.b16 %v451
        %v474 = vunpack.c.l.b16 %v452
        %v475 = vunpack.c.l.b16 %v453
        %v476 = vunpack.c.l.b16 %v454
        %v477 = vunpack.c.l.b16 %v455
        %v478 = vunpack.c.l.b16 %v456
        %v479 = vpack.c.b16 %v470, %v469
        %v480 = vpack.c.b16 %v472, %v471
        %v481 = vpack.c.b16 %v474, %v473
        %v482 = vpack.c.b16 %v476, %v475
        %v483 = vpack.c.b16 %v478, %v477
        %vm484 = vsmask.f32 7424
        %v486 = vshrl.u32 %v479, 16
        %v488 = vshll.u32 %v479, 16
        %v490 = vrot.slane %v488, 1
        %v491 = vor.u32 %v486, %v490
        %v493 = vshll.u32 %v480, 16
        %v495 = vrot.slane %v493, 1
        %v496 = vsel %vm484, %v491, %v495
        %v497 = vshrl.u32 %v480, 16
        %v499 = vor.u32 %v497, %v495
        %v501 = vshll.u32 %v481, 16
        %v503 = vrot.slane %v501, 1
        %v504 = vsel %vm484, %v499, %v503
        %v505 = vshrl.u32 %v481, 16
        %v507 = vor.u32 %v505, %v503
        %v509 = vshll.u32 %v482, 16
        %v511 = vrot.slane %v509, 1
        %v512 = vsel %vm484, %v507, %v511
        %v513 = vshrl.u32 %v482, 16
        %v515 = vor.u32 %v513, %v511
        %v517 = vshll.u32 %v483, 16
        %v519 = vrot.slane %v517, 1
        %v520 = vsel %vm484, %v515, %v519
        %v521 = vshrl.u32 %v483, 16
        %v523 = vor.u32 %v521, %v519
        %v525 = vsel %vm242, %v496, 0
        %v528 = vsel %vm242, %v504, 0
        %v531 = vsel %vm242, %v512, 0
        %v534 = vsel %vm242, %v520, 0
        %v537 = vsel %vm242, %v523, 0
        %v540 = vsel %vm258, %v458, 0
        %542 = vmatprep.subr.bf16.mxu0 0
        %543 = vmatpush1.bf16.msra.mxu0 %v540
        %544 = vmatprep.subr.bf16.mxu0 0
        %545 = vmatpush1.bf16.msra.mxu0 0
        %546 = vmatprep.subr.bf16.mxu0 0
        %547 = vmatpush1.bf16.msra.mxu0 0
        %548 = vmatprep.subr.bf16.mxu0 0
        %549 = vmatpush1.bf16.msra.mxu0 0
        %550 = vmatprep.subr.bf16.mxu0 0
        %551 = vmatpush1.bf16.msra.mxu0 0
        %552 = vmatprep.subr.bf16.mxu0 0
        %553 = vmatpush1.bf16.msra.mxu0 0
        %554 = vmatprep.subr.bf16.mxu0 0
        %555 = vmatpush1.bf16.msra.mxu0 0
        %556 = vmatprep.subr.bf16.mxu0 0
        %557 = vmatpush1.bf16.msra.mxu0 0
        %558 = vmatprep.subr.bf16.mxu0 0
        %559 = vmatpush1.bf16.msra.mxu0 0
        %560 = vmatprep.subr.bf16.mxu0 0
        %561 = vmatpush1.bf16.msra.mxu0 0
        %562 = vmatprep.subr.bf16.mxu0 0
        %563 = vmatpush1.bf16.msra.mxu0 0
        %564 = vmatprep.subr.bf16.mxu0 0
        %565 = vmatpush1.bf16.msra.mxu0 0
        %566 = vmatprep.subr.bf16.mxu0 0
        %567 = vmatpush1.bf16.msra.mxu0 0
        %568 = vmatprep.subr.bf16.mxu0 0
        %569 = vmatpush1.bf16.msra.mxu0 0
        %570 = vmatprep.subr.bf16.mxu0 0
        %571 = vmatpush1.bf16.msra.mxu0 0
        %572 = vmatprep.subr.bf16.mxu0 0
        %573 = vmatpush1.bf16.msra.mxu0 0
        %574 = vmatprep.mubr.bf16.mxu0 0
        %575 = vmatmul.mubr.bf16.gmra.mrb[0].mxu0 %v525
        %v576 = vpop.f32.mrb[0].mxu0
        %v577 = vadd.f32 0.0, %v576
        %v578 = vpop.f32.mrb[0].mxu0
        %v579 = vpop.f32.mrb[0].mxu0
        %v580 = vadd.f32 0.0, %v579
        %v581 = vpop.f32.mrb[0].mxu0
        %582 = vmatprep.mubr.bf16.mxu0 0
        %583 = vmatmul.mubr.bf16.gmra.mrb[0].mxu0 %v528
        %v584 = vpop.f32.mrb[0].mxu0
        %v585 = vadd.f32 0.0, %v584
        %v586 = vpop.f32.mrb[0].mxu0
        %v587 = vpop.f32.mrb[0].mxu0
        %v588 = vadd.f32 0.0, %v587
        %v589 = vpop.f32.mrb[0].mxu0
        %590 = vmatprep.mubr.bf16.mxu0 0
        %591 = vmatmul.mubr.bf16.gmra.mrb[0].mxu0 %v531
        %v592 = vpop.f32.mrb[0].mxu0
        %v593 = vadd.f32 0.0, %v592
        %v594 = vpop.f32.mrb[0].mxu0
        %v595 = vpop.f32.mrb[0].mxu0
        %v596 = vadd.f32 0.0, %v595
        %v597 = vpop.f32.mrb[0].mxu0
        %598 = vmatprep.mubr.bf16.mxu0 0
        %599 = vmatmul.mubr.bf16.gmra.mrb[0].mxu0 %v534
        %v600 = vpop.f32.mrb[0].mxu0
        %v601 = vadd.f32 0.0, %v600
        %v602 = vpop.f32.mrb[0].mxu0
        %v603 = vpop.f32.mrb[0].mxu0
        %v604 = vadd.f32 0.0, %v603
        %v605 = vpop.f32.mrb[0].mxu0
        %606 = vmatprep.mubr.bf16.mxu0 0
        %607 = vmatmul.mubr.bf16.gmra.mrb[0].mxu0 %v537
        %v608 = vpop.f32.mrb[0].mxu0
        %v609 = vadd.f32 0.0, %v608
        %v610 = vpop.f32.mrb[0].mxu0
        %v611 = vpop.f32.mrb[0].mxu0
        %v612 = vpop.f32.mrb[0].mxu0
        %613 = vdwg.mxu0
        %v614 = vadd.f32 %v410, %v577
        %v615 = vadd.f32 %v413, %v580
        %v616 = vadd.f32 %v418, %v585
        %v617 = vadd.f32 %v421, %v588
        %v618 = vadd.f32 %v426, %v593
        %v619 = vadd.f32 %v429, %v596
        %v620 = vadd.f32 %v434, %v601
        %v621 = vadd.f32 %v437, %v604
        %v622 = vadd.f32 %v442, %v609
        %v623 = vld [vmem:[%s182 + $0x58] sm:$0xc]
        %v624 = vld [vmem:[%s182 + $0x5c] sm:$0xf]
        %v625 = vld [vmem:[%s182 + $0x60] sm:$0xf]
        %v626 = vld [vmem:[%s182 + $0x64] sm:$0xf]
        %v627 = vld [vmem:[%s182 + $0x68] sm:$0xf]
        %v628 = vld [vmem:[%s182 + $0x6c] sm:$0xf]
        %v629 = vld [vmem:[%s182 + $0x70] sm:$0xf]
        %v630 = vld [vmem:[%s182 + $0x74] sm:$0xf]
        %v631 = vld [vmem:[%s182 + $0x78] sm:$0xf]
        %v632 = vld [vmem:[%s182 + $0x7c] sm:$0x3]
        %s633 = scalar_lea.vmem %s1, 12
        %v634 = vld [vmem:[%s633] sm:$0xf]
        %v645 = vunpack.c.l.b16 %v623
        %v646 = vunpack.c.l.b16 %v624
        %v647 = vunpack.c.l.b16 %v625
        %v648 = vunpack.c.l.b16 %v626
        %v649 = vunpack.c.l.b16 %v627
        %v650 = vunpack.c.l.b16 %v628
        %v651 = vunpack.c.l.b16 %v629
        %v652 = vunpack.c.l.b16 %v630
        %v653 = vunpack.c.l.b16 %v631
        %v654 = vunpack.c.l.b16 %v632
        %v655 = vpack.c.b16 %v646, %v645
        %v656 = vpack.c.b16 %v648, %v647
        %v657 = vpack.c.b16 %v650, %v649
        %v658 = vpack.c.b16 %v652, %v651
        %v659 = vpack.c.b16 %v654, %v653
        %vm660 = vcmask 1045504
        %v661 = vrot.slane %v655, 2
        %v662 = vrot.slane %v656, 2
        %v663 = vsel %vm660, %v661, %v662
        %v664 = vrot.slane %v657, 2
        %v665 = vsel %vm660, %v662, %v664
        %v666 = vrot.slane %v658, 2
        %v667 = vsel %vm660, %v664, %v666
        %v668 = vrot.slane %v659, 2
        %v669 = vsel %vm660, %v666, %v668
        %v671 = vsel %vm242, %v663, 0
        %v674 = vsel %vm242, %v665, 0
        %v677 = vsel %vm242, %v667, 0
        %v680 = vsel %vm242, %v669, 0
        %v683 = vsel %vm242, %v668, 0
        %v686 = vsel %vm258, %v634, 0
        %688 = vmatprep.subr.bf16.mxu0 0
        %689 = vmatpush1.bf16.msra.mxu0 %v686
        %690 = vmatprep.subr.bf16.mxu0 0
        %691 = vmatpush1.bf16.msra.mxu0 0
        %692 = vmatprep.subr.bf16.mxu0 0
        %693 = vmatpush1.bf16.msra.mxu0 0
        %694 = vmatprep.subr.bf16.mxu0 0
        %695 = vmatpush1.bf16.msra.mxu0 0
        %696 = vmatprep.subr.bf16.mxu0 0
        %697 = vmatpush1.bf16.msra.mxu0 0
        %698 = vmatprep.subr.bf16.mxu0 0
        %699 = vmatpush1.bf16.msra.mxu0 0
        %700 = vmatprep.subr.bf16.mxu0 0
        %701 = vmatpush1.bf16.msra.mxu0 0
        %702 = vmatprep.subr.bf16.mxu0 0
        %703 = vmatpush1.bf16.msra.mxu0 0
        %704 = vmatprep.subr.bf16.mxu0 0
        %705 = vmatpush1.bf16.msra.mxu0 0
        %706 = vmatprep.subr.bf16.mxu0 0
        %707 = vmatpush1.bf16.msra.mxu0 0
        %708 = vmatprep.subr.bf16.mxu0 0
        %709 = vmatpush1.bf16.msra.mxu0 0
        %710 = vmatprep.subr.bf16.mxu0 0
        %711 = vmatpush1.bf16.msra.mxu0 0
        %712 = vmatprep.subr.bf16.mxu0 0
        %713 = vmatpush1.bf16.msra.mxu0 0
        %714 = vmatprep.subr.bf16.mxu0 0
        %715 = vmatpush1.bf16.msra.mxu0 0
        %716 = vmatprep.subr.bf16.mxu0 0
        %717 = vmatpush1.bf16.msra.mxu0 0
        %718 = vmatprep.subr.bf16.mxu0 0
        %719 = vmatpush1.bf16.msra.mxu0 0
        %720 = vmatprep.mubr.bf16.mxu0 0
        %721 = vmatmul.mubr.bf16.gmra.mrb[0].mxu0 %v671
        %v722 = vpop.f32.mrb[0].mxu0
        %v723 = vadd.f32 0.0, %v722
        %v724 = vpop.f32.mrb[0].mxu0
        %v725 = vpop.f32.mrb[0].mxu0
        %v726 = vadd.f32 0.0, %v725
        %v727 = vpop.f32.mrb[0].mxu0
        %728 = vmatprep.mubr.bf16.mxu0 0
        %729 = vmatmul.mubr.bf16.gmra.mrb[0].mxu0 %v674
        %v730 = vpop.f32.mrb[0].mxu0
        %v731 = vadd.f32 0.0, %v730
        %v732 = vpop.f32.mrb[0].mxu0
        %v733 = vpop.f32.mrb[0].mxu0
        %v734 = vadd.f32 0.0, %v733
        %v735 = vpop.f32.mrb[0].mxu0
        %736 = vmatprep.mubr.bf16.mxu0 0
        %737 = vmatmul.mubr.bf16.gmra.mrb[0].mxu0 %v677
        %v738 = vpop.f32.mrb[0].mxu0
        %v739 = vadd.f32 0.0, %v738
        %v740 = vpop.f32.mrb[0].mxu0
        %v741 = vpop.f32.mrb[0].mxu0
        %v742 = vadd.f32 0.0, %v741
        %v743 = vpop.f32.mrb[0].mxu0
        %744 = vmatprep.mubr.bf16.mxu0 0
        %745 = vmatmul.mubr.bf16.gmra.mrb[0].mxu0 %v680
        %v746 = vpop.f32.mrb[0].mxu0
        %v747 = vadd.f32 0.0, %v746
        %v748 = vpop.f32.mrb[0].mxu0
        %v749 = vpop.f32.mrb[0].mxu0
        %v750 = vadd.f32 0.0, %v749
        %v751 = vpop.f32.mrb[0].mxu0
        %752 = vmatprep.mubr.bf16.mxu0 0
        %753 = vmatmul.mubr.bf16.gmra.mrb[0].mxu0 %v683
        %v754 = vpop.f32.mrb[0].mxu0
        %v755 = vadd.f32 0.0, %v754
        %v756 = vpop.f32.mrb[0].mxu0
        %v757 = vpop.f32.mrb[0].mxu0
        %v758 = vpop.f32.mrb[0].mxu0
        %759 = vdwg.mxu0
        %v760 = vadd.f32 %v614, %v723
        %v761 = vadd.f32 %v615, %v726
        %v762 = vadd.f32 %v616, %v731
        %v763 = vadd.f32 %v617, %v734
        %v764 = vadd.f32 %v618, %v739
        %v765 = vadd.f32 %v619, %v742
        %v766 = vadd.f32 %v620, %v747
        %v767 = vadd.f32 %v621, %v750
        %v768 = vadd.f32 %v622, %v755
        %v769 = vld [vmem:[%s182 + $0x84] sm:$0x8]
        %v770 = vld [vmem:[%s182 + $0x88] sm:$0xf]
        %v771 = vld [vmem:[%s182 + $0x8c] sm:$0xf]
        %v772 = vld [vmem:[%s182 + $0x90] sm:$0xf]
        %v773 = vld [vmem:[%s182 + $0x94] sm:$0xf]
        %v774 = vld [vmem:[%s182 + $0x98] sm:$0xf]
        %v775 = vld [vmem:[%s182 + $0x9c] sm:$0xf]
        %v776 = vld [vmem:[%s182 + $0xa0] sm:$0xf]
        %v777 = vld [vmem:[%s182 + $0xa4] sm:$0xf]
        %v778 = vld [vmem:[%s182 + $0xa8] sm:$0x7]
        %s779 = scalar_lea.vmem %s1, 16
        %v780 = vld [vmem:[%s779] sm:$0xf]
        %v791 = vunpack.c.l.b16 %v769
        %v792 = vunpack.c.l.b16 %v770
        %v793 = vunpack.c.l.b16 %v771
        %v794 = vunpack.c.l.b16 %v772
        %v795 = vunpack.c.l.b16 %v773
        %v796 = vunpack.c.l.b16 %v774
        %v797 = vunpack.c.l.b16 %v775
        %v798 = vunpack.c.l.b16 %v776
        %v799 = vunpack.c.l.b16 %v777
        %v800 = vunpack.c.l.b16 %v778
        %v801 = vpack.c.b16 %v792, %v791
        %v802 = vpack.c.b16 %v794, %v793
        %v803 = vpack.c.b16 %v796, %v795
        %v804 = vpack.c.b16 %v798, %v797
        %v805 = vpack.c.b16 %v800, %v799
        %vm806 = vcmask 1044480
        %v807 = vrot.slane %v801, 3
        %v808 = vrot.slane %v802, 3
        %v809 = vsel %vm806, %v807, %v808
        %v810 = vrot.slane %v803, 3
        %v811 = vsel %vm806, %v808, %v810
        %v812 = vrot.slane %v804, 3
        %v813 = vsel %vm806, %v810, %v812
        %v814 = vrot.slane %v805, 3
        %v815 = vsel %vm806, %v812, %v814
        %v817 = vsel %vm242, %v809, 0
        %v820 = vsel %vm242, %v811, 0
        %v823 = vsel %vm242, %v813, 0
        %v826 = vsel %vm242, %v815, 0
        %v829 = vsel %vm242, %v814, 0
        %v832 = vsel %vm258, %v780, 0
        %834 = vmatprep.subr.bf16.mxu0 0
        %835 = vmatpush1.bf16.msra.mxu0 %v832
        %836 = vmatprep.subr.bf16.mxu0 0
        %837 = vmatpush1.bf16.msra.mxu0 0
        %838 = vmatprep.subr.bf16.mxu0 0
        %839 = vmatpush1.bf16.msra.mxu0 0
        %840 = vmatprep.subr.bf16.mxu0 0
        %841 = vmatpush1.bf16.msra.mxu0 0
        %842 = vmatprep.subr.bf16.mxu0 0
        %843 = vmatpush1.bf16.msra.mxu0 0
        %844 = vmatprep.subr.bf16.mxu0 0
        %845 = vmatpush1.bf16.msra.mxu0 0
        %846 = vmatprep.subr.bf16.mxu0 0
        %847 = vmatpush1.bf16.msra.mxu0 0
        %848 = vmatprep.subr.bf16.mxu0 0
        %849 = vmatpush1.bf16.msra.mxu0 0
        %850 = vmatprep.subr.bf16.mxu0 0
        %851 = vmatpush1.bf16.msra.mxu0 0
        %852 = vmatprep.subr.bf16.mxu0 0
        %853 = vmatpush1.bf16.msra.mxu0 0
        %854 = vmatprep.subr.bf16.mxu0 0
        %855 = vmatpush1.bf16.msra.mxu0 0
        %856 = vmatprep.subr.bf16.mxu0 0
        %857 = vmatpush1.bf16.msra.mxu0 0
        %858 = vmatprep.subr.bf16.mxu0 0
        %859 = vmatpush1.bf16.msra.mxu0 0
        %860 = vmatprep.subr.bf16.mxu0 0
        %861 = vmatpush1.bf16.msra.mxu0 0
        %862 = vmatprep.subr.bf16.mxu0 0
        %863 = vmatpush1.bf16.msra.mxu0 0
        %864 = vmatprep.subr.bf16.mxu0 0
        %865 = vmatpush1.bf16.msra.mxu0 0
        %866 = vmatprep.mubr.bf16.mxu0 0
        %867 = vmatmul.mubr.bf16.gmra.mrb[0].mxu0 %v817
        %v868 = vpop.f32.mrb[0].mxu0
        %v869 = vadd.f32 0.0, %v868
        %v870 = vpop.f32.mrb[0].mxu0
        %v871 = vpop.f32.mrb[0].mxu0
        %v872 = vadd.f32 0.0, %v871
        %v873 = vpop.f32.mrb[0].mxu0
        %874 = vmatprep.mubr.bf16.mxu0 0
        %875 = vmatmul.mubr.bf16.gmra.mrb[0].mxu0 %v820
        %v876 = vpop.f32.mrb[0].mxu0
        %v877 = vadd.f32 0.0, %v876
        %v878 = vpop.f32.mrb[0].mxu0
        %v879 = vpop.f32.mrb[0].mxu0
        %v880 = vadd.f32 0.0, %v879
        %v881 = vpop.f32.mrb[0].mxu0
        %882 = vmatprep.mubr.bf16.mxu0 0
        %883 = vmatmul.mubr.bf16.gmra.mrb[0].mxu0 %v823
        %v884 = vpop.f32.mrb[0].mxu0
        %v885 = vadd.f32 0.0, %v884
        %v886 = vpop.f32.mrb[0].mxu0
        %v887 = vpop.f32.mrb[0].mxu0
        %v888 = vadd.f32 0.0, %v887
        %v889 = vpop.f32.mrb[0].mxu0
        %890 = vmatprep.mubr.bf16.mxu0 0
        %891 = vmatmul.mubr.bf16.gmra.mrb[0].mxu0 %v826
        %v892 = vpop.f32.mrb[0].mxu0
        %v893 = vadd.f32 0.0, %v892
        %v894 = vpop.f32.mrb[0].mxu0
        %v895 = vpop.f32.mrb[0].mxu0
        %v896 = vadd.f32 0.0, %v895
        %v897 = vpop.f32.mrb[0].mxu0
        %898 = vmatprep.mubr.bf16.mxu0 0
        %899 = vmatmul.mubr.bf16.gmra.mrb[0].mxu0 %v829
        %v900 = vpop.f32.mrb[0].mxu0
        %v901 = vadd.f32 0.0, %v900
        %v902 = vpop.f32.mrb[0].mxu0
        %v903 = vpop.f32.mrb[0].mxu0
        %v904 = vpop.f32.mrb[0].mxu0
        %905 = vdwg.mxu0
        %v906 = vadd.f32 %v760, %v869
        %v907 = vadd.f32 %v761, %v872
        %v908 = vadd.f32 %v762, %v877
        %v909 = vadd.f32 %v763, %v880
        %v910 = vadd.f32 %v764, %v885
        %v911 = vadd.f32 %v765, %v888
        %v912 = vadd.f32 %v766, %v893
        %v913 = vadd.f32 %v767, %v896
        %v914 = vadd.f32 %v768, %v901
        %v915 = vld [vmem:[%s182 + $0x7c] sm:$0x7]
        %s916 = scalar_lea.vmem %s1, 20
        %v917 = vld [vmem:[%s916] sm:$0xf]
        %v919 = vunpack.c.l.b16 %v915
        %v920 = vpack.c.b16 %v919, %v653
        %vm921 = vsmask.f32 5376
        %v923 = vshrl.u32 %v655, 16
        %v925 = vrot.slane %v923, 2
        %v926 = vshll.u32 %v655, 16
        %v928 = vrot.slane %v926, 3
        %v929 = vor.u32 %v925, %v928
        %v931 = vshrl.u32 %v656, 16
        %v933 = vrot.slane %v931, 2
        %v934 = vshll.u32 %v656, 16
        %v936 = vrot.slane %v934, 3
        %v937 = vor.u32 %v933, %v936
        %v938 = vsel %vm921, %v929, %v937
        %v940 = vshrl.u32 %v657, 16
        %v942 = vrot.slane %v940, 2
        %v943 = vshll.u32 %v657, 16
        %v945 = vrot.slane %v943, 3
        %v946 = vor.u32 %v942, %v945
        %v947 = vsel %vm921, %v937, %v946
        %v949 = vshrl.u32 %v658, 16
        %v951 = vrot.slane %v949, 2
        %v952 = vshll.u32 %v658, 16
        %v954 = vrot.slane %v952, 3
        %v955 = vor.u32 %v951, %v954
        %v956 = vsel %vm921, %v946, %v955
        %v958 = vshrl.u32 %v920, 16
        %v960 = vrot.slane %v958, 2
        %v961 = vshll.u32 %v920, 16
        %v963 = vrot.slane %v961, 3
        %v964 = vor.u32 %v960, %v963
        %v965 = vsel %vm921, %v955, %v964
        %v967 = vsel %vm242, %v938, 0
        %v970 = vsel %vm242, %v947, 0
        %v973 = vsel %vm242, %v956, 0
        %v976 = vsel %vm242, %v965, 0
        %v979 = vsel %vm242, %v964, 0
        %v982 = vsel %vm258, %v917, 0
        %984 = vmatprep.subr.bf16.mxu0 0
        %985 = vmatpush1.bf16.msra.mxu0 %v982
        %986 = vmatprep.subr.bf16.mxu0 0
        %987 = vmatpush1.bf16.msra.mxu0 0
        %988 = vmatprep.subr.bf16.mxu0 0
        %989 = vmatpush1.bf16.msra.mxu0 0
        %990 = vmatprep.subr.bf16.mxu0 0
        %991 = vmatpush1.bf16.msra.mxu0 0
        %992 = vmatprep.subr.bf16.mxu0 0
        %993 = vmatpush1.bf16.msra.mxu0 0
        %994 = vmatprep.subr.bf16.mxu0 0
        %995 = vmatpush1.bf16.msra.mxu0 0
        %996 = vmatprep.subr.bf16.mxu0 0
        %997 = vmatpush1.bf16.msra.mxu0 0
        %998 = vmatprep.subr.bf16.mxu0 0
        %999 = vmatpush1.bf16.msra.mxu0 0
        %1000 = vmatprep.subr.bf16.mxu0 0
        %1001 = vmatpush1.bf16.msra.mxu0 0
        %1002 = vmatprep.subr.bf16.mxu0 0
        %1003 = vmatpush1.bf16.msra.mxu0 0
        %1004 = vmatprep.subr.bf16.mxu0 0
        %1005 = vmatpush1.bf16.msra.mxu0 0
        %1006 = vmatprep.subr.bf16.mxu0 0
        %1007 = vmatpush1.bf16.msra.mxu0 0
        %1008 = vmatprep.subr.bf16.mxu0 0
        %1009 = vmatpush1.bf16.msra.mxu0 0
        %1010 = vmatprep.subr.bf16.mxu0 0
        %1011 = vmatpush1.bf16.msra.mxu0 0
        %1012 = vmatprep.subr.bf16.mxu0 0
        %1013 = vmatpush1.bf16.msra.mxu0 0
        %1014 = vmatprep.subr.bf16.mxu0 0
        %1015 = vmatpush1.bf16.msra.mxu0 0
        %1016 = vmatprep.mubr.bf16.mxu0 0
        %1017 = vmatmul.mubr.bf16.gmra.mrb[0].mxu0 %v967
        %v1018 = vpop.f32.mrb[0].mxu0
        %v1019 = vadd.f32 0.0, %v1018
        %v1020 = vpop.f32.mrb[0].mxu0
        %v1021 = vpop.f32.mrb[0].mxu0
        %v1022 = vadd.f32 0.0, %v1021
        %v1023 = vpop.f32.mrb[0].mxu0
        %1024 = vmatprep.mubr.bf16.mxu0 0
        %1025 = vmatmul.mubr.bf16.gmra.mrb[0].mxu0 %v970
        %v1026 = vpop.f32.mrb[0].mxu0
        %v1027 = vadd.f32 0.0, %v1026
        %v1028 = vpop.f32.mrb[0].mxu0
        %v1029 = vpop.f32.mrb[0].mxu0
        %v1030 = vadd.f32 0.0, %v1029
        %v1031 = vpop.f32.mrb[0].mxu0
        %1032 = vmatprep.mubr.bf16.mxu0 0
        %1033 = vmatmul.mubr.bf16.gmra.mrb[0].mxu0 %v973
        %v1034 = vpop.f32.mrb[0].mxu0
        %v1035 = vadd.f32 0.0, %v1034
        %v1036 = vpop.f32.mrb[0].mxu0
        %v1037 = vpop.f32.mrb[0].mxu0
        %v1038 = vadd.f32 0.0, %v1037
        %v1039 = vpop.f32.mrb[0].mxu0
        %1040 = vmatprep.mubr.bf16.mxu0 0
        %1041 = vmatmul.mubr.bf16.gmra.mrb[0].mxu0 %v976
        %v1042 = vpop.f32.mrb[0].mxu0
        %v1043 = vadd.f32 0.0, %v1042
        %v1044 = vpop.f32.mrb[0].mxu0
        %v1045 = vpop.f32.mrb[0].mxu0
        %v1046 = vadd.f32 0.0, %v1045
        %v1047 = vpop.f32.mrb[0].mxu0
        %1048 = vmatprep.mubr.bf16.mxu0 0
        %1049 = vmatmul.mubr.bf16.gmra.mrb[0].mxu0 %v979
        %v1050 = vpop.f32.mrb[0].mxu0
        %v1051 = vadd.f32 0.0, %v1050
        %v1052 = vpop.f32.mrb[0].mxu0
        %v1053 = vpop.f32.mrb[0].mxu0
        %v1054 = vpop.f32.mrb[0].mxu0
        %1055 = vdwg.mxu0
        %v1056 = vadd.f32 %v906, %v1019
        %v1057 = vadd.f32 %v907, %v1022
        %v1058 = vadd.f32 %v908, %v1027
        %v1059 = vadd.f32 %v909, %v1030
        %v1060 = vadd.f32 %v910, %v1035
        %v1061 = vadd.f32 %v911, %v1038
        %v1062 = vadd.f32 %v912, %v1043
        %v1063 = vadd.f32 %v913, %v1046
        %v1064 = vadd.f32 %v914, %v1051
        %v1065 = vld [vmem:[%s182 + $0x4] sm:$0xf]
        %v1066 = vld [vmem:[%s182 + $0x8] sm:$0xf]
        %v1067 = vld [vmem:[%s182 + $0xc] sm:$0xf]
        %v1068 = vld [vmem:[%s182 + $0x10] sm:$0xf]
        %v1069 = vld [vmem:[%s182 + $0x14] sm:$0xf]
        %v1070 = vld [vmem:[%s182 + $0x18] sm:$0xf]
        %v1071 = vld [vmem:[%s182 + $0x1c] sm:$0xf]
        %v1072 = vld [vmem:[%s182 + $0x20] sm:$0xf]
        %v1073 = vld [vmem:[%s182 + $0x24] sm:$0xf]
        %v1074 = vld [vmem:[%s182 + $0x28] sm:$0x1]
        %s1075 = scalar_lea.vmem %s1, 24
        %v1076 = vld [vmem:[%s1075] sm:$0xf]
        %v1087 = vunpack.c.l.b16 %v1065
        %v1088 = vunpack.c.l.b16 %v1066
        %v1089 = vunpack.c.l.b16 %v1067
        %v1090 = vunpack.c.l.b16 %v1068
        %v1091 = vunpack.c.l.b16 %v1069
        %v1092 = vunpack.c.l.b16 %v1070
        %v1093 = vunpack.c.l.b16 %v1071
        %v1094 = vunpack.c.l.b16 %v1072
        %v1095 = vunpack.c.l.b16 %v1073
        %v1096 = vunpack.c.l.b16 %v1074
        %v1097 = vpack.c.b16 %v1088, %v1087
        %v1098 = vpack.c.b16 %v1090, %v1089
        %v1099 = vpack.c.b16 %v1092, %v1091
        %v1100 = vpack.c.b16 %v1094, %v1093
        %v1101 = vpack.c.b16 %v1096, %v1095
        %v1103 = vshrl.u32 %v1097, 16
        %v1105 = vshll.u32 %v1097, 16
        %v1107 = vrot.slane %v1105, 1
        %v1108 = vor.u32 %v1103, %v1107
        %v1110 = vshll.u32 %v1098, 16
        %v1112 = vrot.slane %v1110, 1
        %v1113 = vsel %vm484, %v1108, %v1112
        %v1114 = vshrl.u32 %v1098, 16
        %v1116 = vor.u32 %v1114, %v1112
        %v1118 = vshll.u32 %v1099, 16
        %v1120 = vrot.slane %v1118, 1
        %v1121 = vsel %vm484, %v1116, %v1120
        %v1122 = vshrl.u32 %v1099, 16
        %v1124 = vor.u32 %v1122, %v1120
        %v1126 = vshll.u32 %v1100, 16
        %v1128 = vrot.slane %v1126, 1
        %v1129 = vsel %vm484, %v1124, %v1128
        %v1130 = vshrl.u32 %v1100, 16
        %v1132 = vor.u32 %v1130, %v1128
        %v1134 = vshll.u32 %v1101, 16
        %v1136 = vrot.slane %v1134, 1
        %v1137 = vsel %vm484, %v1132, %v1136
        %v1138 = vshrl.u32 %v1101, 16
        %v1140 = vor.u32 %v1138, %v1136
        %v1142 = vsel %vm242, %v1113, 0
        %v1145 = vsel %vm242, %v1121, 0
        %v1148 = vsel %vm242, %v1129, 0
        %v1151 = vsel %vm242, %v1137, 0
        %v1154 = vsel %vm242, %v1140, 0
        %v1157 = vsel %vm258, %v1076, 0
        %1159 = vmatprep.subr.bf16.mxu0 0
        %1160 = vmatpush1.bf16.msra.mxu0 %v1157
        %1161 = vmatprep.subr.bf16.mxu0 0
        %1162 = vmatpush1.bf16.msra.mxu0 0
        %1163 = vmatprep.subr.bf16.mxu0 0
        %1164 = vmatpush1.bf16.msra.mxu0 0
        %1165 = vmatprep.subr.bf16.mxu0 0
        %1166 = vmatpush1.bf16.msra.mxu0 0
        %1167 = vmatprep.subr.bf16.mxu0 0
        %1168 = vmatpush1.bf16.msra.mxu0 0
        %1169 = vmatprep.subr.bf16.mxu0 0
        %1170 = vmatpush1.bf16.msra.mxu0 0
        %1171 = vmatprep.subr.bf16.mxu0 0
        %1172 = vmatpush1.bf16.msra.mxu0 0
        %1173 = vmatprep.subr.bf16.mxu0 0
        %1174 = vmatpush1.bf16.msra.mxu0 0
        %1175 = vmatprep.subr.bf16.mxu0 0
        %1176 = vmatpush1.bf16.msra.mxu0 0
        %1177 = vmatprep.subr.bf16.mxu0 0
        %1178 = vmatpush1.bf16.msra.mxu0 0
        %1179 = vmatprep.subr.bf16.mxu0 0
        %1180 = vmatpush1.bf16.msra.mxu0 0
        %1181 = vmatprep.subr.bf16.mxu0 0
        %1182 = vmatpush1.bf16.msra.mxu0 0
        %1183 = vmatprep.subr.bf16.mxu0 0
        %1184 = vmatpush1.bf16.msra.mxu0 0
        %1185 = vmatprep.subr.bf16.mxu0 0
        %1186 = vmatpush1.bf16.msra.mxu0 0
        %1187 = vmatprep.subr.bf16.mxu0 0
        %1188 = vmatpush1.bf16.msra.mxu0 0
        %1189 = vmatprep.subr.bf16.mxu0 0
        %1190 = vmatpush1.bf16.msra.mxu0 0
        %1191 = vmatprep.mubr.bf16.mxu0 0
        %1192 = vmatmul.mubr.bf16.gmra.mrb[0].mxu0 %v1142
        %v1193 = vpop.f32.mrb[0].mxu0
        %v1194 = vadd.f32 0.0, %v1193
        %v1195 = vpop.f32.mrb[0].mxu0
        %v1196 = vpop.f32.mrb[0].mxu0
        %v1197 = vadd.f32 0.0, %v1196
        %v1198 = vpop.f32.mrb[0].mxu0
        %1199 = vmatprep.mubr.bf16.mxu0 0
        %1200 = vmatmul.mubr.bf16.gmra.mrb[0].mxu0 %v1145
        %v1201 = vpop.f32.mrb[0].mxu0
        %v1202 = vadd.f32 0.0, %v1201
        %v1203 = vpop.f32.mrb[0].mxu0
        %v1204 = vpop.f32.mrb[0].mxu0
        %v1205 = vadd.f32 0.0, %v1204
        %v1206 = vpop.f32.mrb[0].mxu0
        %1207 = vmatprep.mubr.bf16.mxu0 0
        %1208 = vmatmul.mubr.bf16.gmra.mrb[0].mxu0 %v1148
        %v1209 = vpop.f32.mrb[0].mxu0
        %v1210 = vadd.f32 0.0, %v1209
        %v1211 = vpop.f32.mrb[0].mxu0
        %v1212 = vpop.f32.mrb[0].mxu0
        %v1213 = vadd.f32 0.0, %v1212
        %v1214 = vpop.f32.mrb[0].mxu0
        %1215 = vmatprep.mubr.bf16.mxu0 0
        %1216 = vmatmul.mubr.bf16.gmra.mrb[0].mxu0 %v1151
        %v1217 = vpop.f32.mrb[0].mxu0
        %v1218 = vadd.f32 0.0, %v1217
        %v1219 = vpop.f32.mrb[0].mxu0
        %v1220 = vpop.f32.mrb[0].mxu0
        %v1221 = vadd.f32 0.0, %v1220
        %v1222 = vpop.f32.mrb[0].mxu0
        %1223 = vmatprep.mubr.bf16.mxu0 0
        %1224 = vmatmul.mubr.bf16.gmra.mrb[0].mxu0 %v1154
        %v1225 = vpop.f32.mrb[0].mxu0
        %v1226 = vadd.f32 0.0, %v1225
        %v1227 = vpop.f32.mrb[0].mxu0
        %v1228 = vpop.f32.mrb[0].mxu0
        %v1229 = vpop.f32.mrb[0].mxu0
        %1230 = vdwg.mxu0
        %v1231 = vadd.f32 %v1056, %v1194
        %v1232 = vadd.f32 %v1057, %v1197
        %v1233 = vadd.f32 %v1058, %v1202
        %v1234 = vadd.f32 %v1059, %v1205
        %v1235 = vadd.f32 %v1060, %v1210
        %v1236 = vadd.f32 %v1061, %v1213
        %v1237 = vadd.f32 %v1062, %v1218
        %v1238 = vadd.f32 %v1063, %v1221
        %v1239 = vadd.f32 %v1064, %v1226
        %v1240 = vld [vmem:[%s182 + $0x30] sm:$0xe]
        %v1241 = vld [vmem:[%s182 + $0x34] sm:$0xf]
        %v1242 = vld [vmem:[%s182 + $0x38] sm:$0xf]
        %v1243 = vld [vmem:[%s182 + $0x3c] sm:$0xf]
        %v1244 = vld [vmem:[%s182 + $0x40] sm:$0xf]
        %v1245 = vld [vmem:[%s182 + $0x44] sm:$0xf]
        %v1246 = vld [vmem:[%s182 + $0x48] sm:$0xf]
        %v1247 = vld [vmem:[%s182 + $0x4c] sm:$0xf]
        %v1248 = vld [vmem:[%s182 + $0x50] sm:$0xf]
        %v1249 = vld [vmem:[%s182 + $0x54] sm:$0x3]
        %s1250 = scalar_lea.vmem %s1, 28
        %v1251 = vld [vmem:[%s1250] sm:$0xf]
        %v1262 = vunpack.c.l.b16 %v1240
        %v1263 = vunpack.c.l.b16 %v1241
        %v1264 = vunpack.c.l.b16 %v1242
        %v1265 = vunpack.c.l.b16 %v1243
        %v1266 = vunpack.c.l.b16 %v1244
        %v1267 = vunpack.c.l.b16 %v1245
        %v1268 = vunpack.c.l.b16 %v1246
        %v1269 = vunpack.c.l.b16 %v1247
        %v1270 = vunpack.c.l.b16 %v1248
        %v1271 = vunpack.c.l.b16 %v1249
        %v1272 = vpack.c.b16 %v1263, %v1262
        %v1273 = vpack.c.b16 %v1265, %v1264
        %v1274 = vpack.c.b16 %v1267, %v1266
        %v1275 = vpack.c.b16 %v1269, %v1268
        %v1276 = vpack.c.b16 %v1271, %v1270
        %vm1277 = vsmask.f32 6400
        %v1279 = vshrl.u32 %v1272, 16
        %v1281 = vrot.slane %v1279, 1
        %v1282 = vshll.u32 %v1272, 16
        %v1284 = vrot.slane %v1282, 2
        %v1285 = vor.u32 %v1281, %v1284
        %v1287 = vshrl.u32 %v1273, 16
        %v1289 = vrot.slane %v1287, 1
        %v1290 = vshll.u32 %v1273, 16
        %v1292 = vrot.slane %v1290, 2
        %v1293 = vor.u32 %v1289, %v1292
        %v1294 = vsel %vm1277, %v1285, %v1293
        %v1296 = vshrl.u32 %v1274, 16
        %v1298 = vrot.slane %v1296, 1
        %v1299 = vshll.u32 %v1274, 16
        %v1301 = vrot.slane %v1299, 2
        %v1302 = vor.u32 %v1298, %v1301
        %v1303 = vsel %vm1277, %v1293, %v1302
        %v1305 = vshrl.u32 %v1275, 16
        %v1307 = vrot.slane %v1305, 1
        %v1308 = vshll.u32 %v1275, 16
        %v1310 = vrot.slane %v1308, 2
        %v1311 = vor.u32 %v1307, %v1310
        %v1312 = vsel %vm1277, %v1302, %v1311
        %v1314 = vshrl.u32 %v1276, 16
        %v1316 = vrot.slane %v1314, 1
        %v1317 = vshll.u32 %v1276, 16
        %v1319 = vrot.slane %v1317, 2
        %v1320 = vor.u32 %v1316, %v1319
        %v1321 = vsel %vm1277, %v1311, %v1320
        %v1323 = vsel %vm242, %v1294, 0
        %v1326 = vsel %vm242, %v1303, 0
        %v1329 = vsel %vm242, %v1312, 0
        %v1332 = vsel %vm242, %v1321, 0
        %v1335 = vsel %vm242, %v1320, 0
        %v1338 = vsel %vm258, %v1251, 0
        %1340 = vmatprep.subr.bf16.mxu0 0
        %1341 = vmatpush1.bf16.msra.mxu0 %v1338
        %1342 = vmatprep.subr.bf16.mxu0 0
        %1343 = vmatpush1.bf16.msra.mxu0 0
        %1344 = vmatprep.subr.bf16.mxu0 0
        %1345 = vmatpush1.bf16.msra.mxu0 0
        %1346 = vmatprep.subr.bf16.mxu0 0
        %1347 = vmatpush1.bf16.msra.mxu0 0
        %1348 = vmatprep.subr.bf16.mxu0 0
        %1349 = vmatpush1.bf16.msra.mxu0 0
        %1350 = vmatprep.subr.bf16.mxu0 0
        %1351 = vmatpush1.bf16.msra.mxu0 0
        %1352 = vmatprep.subr.bf16.mxu0 0
        %1353 = vmatpush1.bf16.msra.mxu0 0
        %1354 = vmatprep.subr.bf16.mxu0 0
        %1355 = vmatpush1.bf16.msra.mxu0 0
        %1356 = vmatprep.subr.bf16.mxu0 0
        %1357 = vmatpush1.bf16.msra.mxu0 0
        %1358 = vmatprep.subr.bf16.mxu0 0
        %1359 = vmatpush1.bf16.msra.mxu0 0
        %1360 = vmatprep.subr.bf16.mxu0 0
        %1361 = vmatpush1.bf16.msra.mxu0 0
        %1362 = vmatprep.subr.bf16.mxu0 0
        %1363 = vmatpush1.bf16.msra.mxu0 0
        %1364 = vmatprep.subr.bf16.mxu0 0
        %1365 = vmatpush1.bf16.msra.mxu0 0
        %1366 = vmatprep.subr.bf16.mxu0 0
        %1367 = vmatpush1.bf16.msra.mxu0 0
        %1368 = vmatprep.subr.bf16.mxu0 0
        %1369 = vmatpush1.bf16.msra.mxu0 0
        %1370 = vmatprep.subr.bf16.mxu0 0
        %1371 = vmatpush1.bf16.msra.mxu0 0
        %1372 = vmatprep.mubr.bf16.mxu0 0
        %1373 = vmatmul.mubr.bf16.gmra.mrb[0].mxu0 %v1323
        %v1374 = vpop.f32.mrb[0].mxu0
        %v1375 = vadd.f32 0.0, %v1374
        %v1376 = vpop.f32.mrb[0].mxu0
        %v1377 = vpop.f32.mrb[0].mxu0
        %v1378 = vadd.f32 0.0, %v1377
        %v1379 = vpop.f32.mrb[0].mxu0
        %1380 = vmatprep.mubr.bf16.mxu0 0
        %1381 = vmatmul.mubr.bf16.gmra.mrb[0].mxu0 %v1326
        %v1382 = vpop.f32.mrb[0].mxu0
        %v1383 = vadd.f32 0.0, %v1382
        %v1384 = vpop.f32.mrb[0].mxu0
        %v1385 = vpop.f32.mrb[0].mxu0
        %v1386 = vadd.f32 0.0, %v1385
        %v1387 = vpop.f32.mrb[0].mxu0
        %1388 = vmatprep.mubr.bf16.mxu0 0
        %1389 = vmatmul.mubr.bf16.gmra.mrb[0].mxu0 %v1329
        %v1390 = vpop.f32.mrb[0].mxu0
        %v1391 = vadd.f32 0.0, %v1390
        %v1392 = vpop.f32.mrb[0].mxu0
        %v1393 = vpop.f32.mrb[0].mxu0
        %v1394 = vadd.f32 0.0, %v1393
        %v1395 = vpop.f32.mrb[0].mxu0
        %1396 = vmatprep.mubr.bf16.mxu0 0
        %1397 = vmatmul.mubr.bf16.gmra.mrb[0].mxu0 %v1332
        %v1398 = vpop.f32.mrb[0].mxu0
        %v1399 = vadd.f32 0.0, %v1398
        %v1400 = vpop.f32.mrb[0].mxu0
        %v1401 = vpop.f32.mrb[0].mxu0
        %v1402 = vadd.f32 0.0, %v1401
        %v1403 = vpop.f32.mrb[0].mxu0
        %1404 = vmatprep.mubr.bf16.mxu0 0
        %1405 = vmatmul.mubr.bf16.gmra.mrb[0].mxu0 %v1335
        %v1406 = vpop.f32.mrb[0].mxu0
        %v1407 = vadd.f32 0.0, %v1406
        %v1408 = vpop.f32.mrb[0].mxu0
        %v1409 = vpop.f32.mrb[0].mxu0
        %v1410 = vpop.f32.mrb[0].mxu0
        %1411 = vdwg.mxu0
        %v1412 = vadd.f32 %v1231, %v1375
        %v1413 = vadd.f32 %v1232, %v1378
        %v1414 = vadd.f32 %v1233, %v1383
        %v1415 = vadd.f32 %v1234, %v1386
        %v1416 = vadd.f32 %v1235, %v1391
        %v1417 = vadd.f32 %v1236, %v1394
        %v1418 = vadd.f32 %v1237, %v1399
        %v1419 = vadd.f32 %v1238, %v1402
        %v1420 = vadd.f32 %v1239, %v1407
        %v1421 = vld [vmem:[%s182 + $0x4] sm:$0xe]
        %s1422 = scalar_lea.vmem %s1, 32
        %v1423 = vld [vmem:[%s1422] sm:$0xf]
        %v1425 = vunpack.c.l.b16 %v1421
        %v1426 = vpack.c.b16 %v1088, %v1425
        %v1427 = vrot.slane %v1426, 1
        %v1428 = vrot.slane %v1098, 1
        %v1429 = vsel %vm232, %v1427, %v1428
        %v1430 = vrot.slane %v1099, 1
        %v1431 = vsel %vm232, %v1428, %v1430
        %v1432 = vrot.slane %v1100, 1
        %v1433 = vsel %vm232, %v1430, %v1432
        %v1434 = vrot.slane %v1101, 1
        %v1435 = vsel %vm232, %v1432, %v1434
        %v1437 = vsel %vm242, %v1429, 0
        %v1440 = vsel %vm242, %v1431, 0
        %v1443 = vsel %vm242, %v1433, 0
        %v1446 = vsel %vm242, %v1435, 0
        %v1449 = vsel %vm242, %v1434, 0
        %v1452 = vsel %vm258, %v1423, 0
        %1454 = vmatprep.subr.bf16.mxu0 0
        %1455 = vmatpush1.bf16.msra.mxu0 %v1452
        %1456 = vmatprep.subr.bf16.mxu0 0
        %1457 = vmatpush1.bf16.msra.mxu0 0
        %1458 = vmatprep.subr.bf16.mxu0 0
        %1459 = vmatpush1.bf16.msra.mxu0 0
        %1460 = vmatprep.subr.bf16.mxu0 0
        %1461 = vmatpush1.bf16.msra.mxu0 0
        %1462 = vmatprep.subr.bf16.mxu0 0
        %1463 = vmatpush1.bf16.msra.mxu0 0
        %1464 = vmatprep.subr.bf16.mxu0 0
        %1465 = vmatpush1.bf16.msra.mxu0 0
        %1466 = vmatprep.subr.bf16.mxu0 0
        %1467 = vmatpush1.bf16.msra.mxu0 0
        %1468 = vmatprep.subr.bf16.mxu0 0
        %1469 = vmatpush1.bf16.msra.mxu0 0
        %1470 = vmatprep.subr.bf16.mxu0 0
        %1471 = vmatpush1.bf16.msra.mxu0 0
        %1472 = vmatprep.subr.bf16.mxu0 0
        %1473 = vmatpush1.bf16.msra.mxu0 0
        %1474 = vmatprep.subr.bf16.mxu0 0
        %1475 = vmatpush1.bf16.msra.mxu0 0
        %1476 = vmatprep.subr.bf16.mxu0 0
        %1477 = vmatpush1.bf16.msra.mxu0 0
        %1478 = vmatprep.subr.bf16.mxu0 0
        %1479 = vmatpush1.bf16.msra.mxu0 0
        %1480 = vmatprep.subr.bf16.mxu0 0
        %1481 = vmatpush1.bf16.msra.mxu0 0
        %1482 = vmatprep.subr.bf16.mxu0 0
        %1483 = vmatpush1.bf16.msra.mxu0 0
        %1484 = vmatprep.subr.bf16.mxu0 0
        %1485 = vmatpush1.bf16.msra.mxu0 0
        %1486 = vmatprep.mubr.bf16.mxu0 0
        %1487 = vmatmul.mubr.bf16.gmra.mrb[0].mxu0 %v1437
        %v1488 = vpop.f32.mrb[0].mxu0
        %v1489 = vadd.f32 0.0, %v1488
        %v1490 = vpop.f32.mrb[0].mxu0
        %v1491 = vpop.f32.mrb[0].mxu0
        %v1492 = vadd.f32 0.0, %v1491
        %v1493 = vpop.f32.mrb[0].mxu0
        %1494 = vmatprep.mubr.bf16.mxu0 0
        %1495 = vmatmul.mubr.bf16.gmra.mrb[0].mxu0 %v1440
        %v1496 = vpop.f32.mrb[0].mxu0
        %v1497 = vadd.f32 0.0, %v1496
        %v1498 = vpop.f32.mrb[0].mxu0
        %v1499 = vpop.f32.mrb[0].mxu0
        %v1500 = vadd.f32 0.0, %v1499
        %v1501 = vpop.f32.mrb[0].mxu0
        %1502 = vmatprep.mubr.bf16.mxu0 0
        %1503 = vmatmul.mubr.bf16.gmra.mrb[0].mxu0 %v1443
        %v1504 = vpop.f32.mrb[0].mxu0
        %v1505 = vadd.f32 0.0, %v1504
        %v1506 = vpop.f32.mrb[0].mxu0
        %v1507 = vpop.f32.mrb[0].mxu0
        %v1508 = vadd.f32 0.0, %v1507
        %v1509 = vpop.f32.mrb[0].mxu0
        %1510 = vmatprep.mubr.bf16.mxu0 0
        %1511 = vmatmul.mubr.bf16.gmra.mrb[0].mxu0 %v1446
        %v1512 = vpop.f32.mrb[0].mxu0
        %v1513 = vadd.f32 0.0, %v1512
        %v1514 = vpop.f32.mrb[0].mxu0
        %v1515 = vpop.f32.mrb[0].mxu0
        %v1516 = vadd.f32 0.0, %v1515
        %v1517 = vpop.f32.mrb[0].mxu0
        %1518 = vmatprep.mubr.bf16.mxu0 0
        %1519 = vmatmul.mubr.bf16.gmra.mrb[0].mxu0 %v1449
        %v1520 = vpop.f32.mrb[0].mxu0
        %v1521 = vadd.f32 0.0, %v1520
        %v1522 = vpop.f32.mrb[0].mxu0
        %v1523 = vpop.f32.mrb[0].mxu0
        %v1524 = vpop.f32.mrb[0].mxu0
        %1525 = vdwg.mxu0
        %v1526 = vadd.f32 %v1412, %v1489
        %v1527 = vadd.f32 %v1413, %v1492
        %v1528 = vadd.f32 %v1414, %v1497
        %v1529 = vadd.f32 %v1415, %v1500
        %v1530 = vadd.f32 %v1416, %v1505
        %v1531 = vadd.f32 %v1417, %v1508
        %v1532 = vadd.f32 %v1418, %v1513
        %v1533 = vadd.f32 %v1419, %v1516
        %v1534 = vadd.f32 %v1420, %v1521
        %v1535 = vld [vmem:[%s2] sm:$0x1]
        %v1537 = vlaneseq
        %v1538 = vshrl.u32 %v1537, 7
        %v1539 = vsub.s32 0, %v1538
        %v1540 = vrot.slane %v1535, %v1539
        %v1542 = vadd.f32 %v1526, %v1540
        %v1543 = vadd.f32 %v1527, %v1540
        %v1544 = vadd.f32 %v1528, %v1540
        %v1545 = vadd.f32 %v1529, %v1540
        %v1546 = vadd.f32 %v1530, %v1540
        %v1547 = vadd.f32 %v1531, %v1540
        %v1548 = vadd.f32 %v1532, %v1540
        %v1549 = vadd.f32 %v1533, %v1540
        %v1550 = vadd.f32 %v1534, %v1540
        %v1551 = vmax.f32 %v1542, 0.0
        %v1552 = vmax.f32 %v1543, 0.0
        %v1553 = vmax.f32 %v1544, 0.0
        %v1554 = vmax.f32 %v1545, 0.0
        %v1555 = vmax.f32 %v1546, 0.0
        %v1556 = vmax.f32 %v1547, 0.0
        %v1557 = vmax.f32 %v1548, 0.0
        %v1558 = vmax.f32 %v1549, 0.0
        %v1559 = vmax.f32 %v1550, 0.0
        %v1560 = vpack.c.bf16 %v1552, %v1551
        %v1561 = vpack.c.bf16 %v1554, %v1553
        %v1562 = vpack.c.bf16 %v1556, %v1555
        %v1563 = vpack.c.bf16 %v1558, %v1557
        %v1564 = vpack.c.bf16 %v1559, %v1559
        %v1570 = vunpack.c.l.b16 %v1560
        %v1571 = vunpack.c.h.b16 %v1560
        %v1572 = vunpack.c.l.b16 %v1561
        %v1573 = vunpack.c.h.b16 %v1561
        %v1574 = vunpack.c.l.b16 %v1562
        %v1575 = vunpack.c.h.b16 %v1562
        %v1576 = vunpack.c.l.b16 %v1563
        %v1577 = vunpack.c.h.b16 %v1563
        %v1578 = vunpack.c.l.b16 %v1564
        %v1579 = vpack.c.b16 %v1570, %v1570
        %v1580 = vpack.c.b16 %v1571, %v1571
        %v1581 = vpack.c.b16 %v1572, %v1572
        %v1582 = vpack.c.b16 %v1573, %v1573
        %v1583 = vpack.c.b16 %v1574, %v1574
        %v1584 = vpack.c.b16 %v1575, %v1575
        %v1585 = vpack.c.b16 %v1576, %v1576
        %v1586 = vpack.c.b16 %v1577, %v1577
        %v1587 = vpack.c.b16 %v1578, %v1578
        %1597 = vst [vmem:[%s177] sm:$0xf] %v1579
        %1598 = vst [vmem:[%s177 + $0x4] sm:$0xf] %v1580
        %1599 = vst [vmem:[%s177 + $0x8] sm:$0xf] %v1581
        %1600 = vst [vmem:[%s177 + $0xc] sm:$0xf] %v1582
        %1601 = vst [vmem:[%s177 + $0x10] sm:$0xf] %v1583
        %1602 = vst [vmem:[%s177 + $0x14] sm:$0xf] %v1584
        %1603 = vst [vmem:[%s177 + $0x18] sm:$0xf] %v1585
        %1604 = vst [vmem:[%s177 + $0x1c] sm:$0xf] %v1586
        %1605 = vst [vmem:[%s177 + $0x20] sm:$0xf] %v1587
        %s1606 = sand.u32 %s107, 1
        %s1607 = scalar_lea.sflag [#allocation3], %s1606
        %s1608 = sand.u32 %s107, 1
        %s1609 = smul.addr %s1608, 36
        %s1610 = scalar_lea.vmem [#allocation2], %s1609
        // Predicated region
        $region33: #{tpu_custom_call.1} parent=31 // pred_check
          %p1611 = pneg %p117
        $region34: #{tpu_custom_call.1} parent=31 // pred_check_branch
          %1613 = sbr.rel (%p1611) target = $region36
        $region35: #{tpu_custom_call.1} parent=31 // pred_region
          %s1614 = smul.u32 9, %s22
          %s1616 = ssub.s32 576, 576
          %1617 = vsyncadd %s1607, %s1616
          %s1618 = smul.addr %s21, 9
          %s1619 = sadd.s32 %s1614, %s1618
          %s1620 = smul.addr %s1619, 64
          %s1621 = scalar_lea.hbm %s3, %s1620
          %s1622 = sshll.u32 %s1610, 4
          %s1623 = int_to_ptr.vmem [resolvable:$true] %s1622
          %1628 = dma.vmem_to_hbm [thread:$0]  %s1623, 576, %s1621, %s1607, 64, 64, 4
        $region36: #{tpu_custom_call.1} parent=31 // pred_fallthru
          _
      $region32: #{tpu_custom_call.1} parent=5 // pred_fallthru
        _
      %p1629 = scmp.le.s32.totalorder 2, %s12
      // Predicated region
      $region37: #{tpu_custom_call.1} parent=5 // pred_check
        %p1630 = pneg %p1629
      $region38: #{tpu_custom_call.1} parent=5 // pred_check_branch
        %1632 = sbr.rel (%p1630) target = $region40
      $region39: #{tpu_custom_call.1} parent=5 // pred_region
        %s1633 = ssub.s32 %s12, 2
        // Predicated region
        $region41: #{tpu_custom_call.1} parent=39 // pred_check
          %p1634 = pneg %p123
        $region42: #{tpu_custom_call.1} parent=39 // pred_check_branch
          %1636 = sbr.rel (%p1634) target = $region44
        $region43: #{tpu_custom_call.1} parent=39 // pred_region
          %s1637 = sand.u32 %s108, 1
          %s1638 = scalar_lea.sflag [#allocation3], %s1637
          %s1639 = sand.u32 %s108, 1
          %s1640 = smul.addr %s1639, 36
          %s1641 = scalar_lea.vmem [#allocation2], %s1640
          %1642 = dma.done %s1638, 576
        $region44: #{tpu_custom_call.1} parent=39 // pred_fallthru
          _
      $region40: #{tpu_custom_call.1} parent=5 // pred_fallthru
        _
    $region6: #{tpu_custom_call.1} parent=1 // loop_footer
      %s16 = sadd.s32 1, %s12
    $region7: #{tpu_custom_call.1} parent=1 // loop_footer_branch
      %11 = sbr.rel target = $region3
    $region8: #{tpu_custom_call.1} parent=1 // loop_exit
      _
    %1643 = vsyncpa [#allocation3], 1
    %s1644 = scalar_lea.sflag [#allocation3], 1
    %1645 = vsyncpa %s1644, 1

</llo_original>
